<compile_context>
chip_gen: v6e
topology: v6e:2x2x1
jax: 0.10.0
libtpu: 0.0.40
codegen_flags: <defaults>
</compile_context>

<pallas_src>
import functools

import jax
import jax.numpy as jnp
from jax import lax
from jax.experimental import pallas as pl
from jax.experimental.pallas import tpu as pltpu

EPS = 1e-5
C_PAD = 128        # lane-padded width of the VMEM-resident feature buffer


def _const_spec(shape):
    """Full-array block, identical for every grid step (stays VMEM-resident)."""
    shape = tuple(int(s) for s in shape)
    return pl.BlockSpec(shape, lambda *_: (0,) * len(shape))


# --------------------------- the single fused kernel -------------------------

def _make_fused_kernel(hp, wp, c0, offsets, growth, bott, num_classes):
    """hp, wp: spatial dims after the stem max pool (one image per grid step)."""
    assert wp == 8, "w must map to exactly one f32 sublane tile"
    hw = hp * wp
    n_layers = len(offsets)

    def shift_w(a, d):
        # out[:, j, :] = a[:, j - d, :], zero-filled at the boundary (d = +-1).
        wdim = a.shape[1]
        r = pltpu.roll(a, shift=d % wdim, axis=1)
        jj = lax.broadcasted_iota(jnp.int32, a.shape, 1)
        if d > 0:
            return jnp.where(jj < d, 0.0, r)
        return jnp.where(jj >= wdim + d, 0.0, r)

    def kernel(patch_ref, w0_ref, b0_ref,
               a1_ref, b1_ref, w1_ref, a2_ref, b2_ref, w2_ref,
               af_ref, bf_ref, wc_ref, bc_ref,
               o_ref, feat_ref, zz_ref):
        f32 = jnp.float32
        bf16 = jnp.bfloat16

        # ---- stem: conv0 (7x7/s2/p3, norm0 scale folded) + relu0 -------------
        y = jnp.dot(patch_ref[0], w0_ref[...], preferred_element_type=f32)
        y = jnp.maximum(y + b0_ref[...], 0.0)                  # (4*hw, c0)
        # rows were pre-ordered (row parity q, col parity p, ri, cj)
        y4 = y.reshape(2, 2, hp, wp, c0)

        # ---- pool0: 3x3/s2/p1 max pool, entirely in registers ----------------
        # column maxima per row parity, then one row shift; zero-fill is a
        # valid -inf stand-in because the values are post-ReLU (>= 0).
        cm0 = jnp.maximum(jnp.maximum(y4[0, 0], y4[0, 1]), shift_w(y4[0, 1], 1))
        cm1 = jnp.maximum(jnp.maximum(y4[1, 0], y4[1, 1]), shift_w(y4[1, 1], 1))
        cm1_up = jnp.concatenate(
            [jnp.zeros((1, wp, c0), f32), cm1[:hp - 1]], axis=0)
        pooled = jnp.maximum(jnp.maximum(cm0, cm1), cm1_up)    # (hp, wp, c0)

        # ---- growing concat feature buffer: never leaves VMEM ----------------
        feat_ref[...] = jnp.zeros_like(feat_ref)
        feat_ref[:, 0:c0] = pooled.reshape(hw, c0)
        zz_ref[...] = jnp.zeros_like(zz_ref)     # rows 0 / hp+1 stay zero (pad)

        # ---- dense blocks (all layers of both blocks) ------------------------
        for L in range(n_layers):
            # norm1 + relu1 + conv1(1x1): ONE K=C_PAD matmul over the padded
            # concat (unused lanes are zero, padded weight rows are zero).
            x1 = jnp.maximum(feat_ref[...] * a1_ref[L] + b1_ref[L], 0.0)
            acc1 = jnp.dot(x1.astype(bf16), w1_ref[L],
                           preferred_element_type=f32)          # (hw, bott)
            # norm2 + relu2
            act2 = jnp.maximum(acc1 * a2_ref[L] + b2_ref[L], 0.0)
            a3 = act2.reshape(hp, wp, bott)
            # conv2 (3x3, pad 1): kw taps become lane blocks of a row-padded
            # scratch, so kh taps are free outer-dim slices -> 3 matmuls K=3*bott.
            zz_ref[1:hp + 1, :, 0 * bott:1 * bott] = shift_w(a3, 1)    # kw = 0
            zz_ref[1:hp + 1, :, 1 * bott:2 * bott] = a3                # kw = 1
            zz_ref[1:hp + 1, :, 2 * bott:3 * bott] = shift_w(a3, -1)   # kw = 2
            acc2 = jnp.zeros((hw, growth), f32)
            for kh in range(3):
                tap = zz_ref[kh:kh + hp].reshape(hw, 3 * bott)
                acc2 = acc2 + jnp.dot(tap.astype(bf16), w2_ref[L, kh],
                                      preferred_element_type=f32)
            feat_ref[:, offsets[L]:offsets[L] + growth] = acc2

        # ---- head: final norm + relu + global avg pool + classifier ----------
        xf = jnp.maximum(feat_ref[...] * af_ref[...] + bf_ref[...], 0.0)
        scores = jnp.dot(xf.astype(bf16), wc_ref[...],
                         preferred_element_type=f32)            # (hw, classes)
        o_ref[0] = jnp.mean(scores, axis=0, keepdims=True) + bc_ref[...]

    return kernel


# ------------------------- JAX-side input preparation ------------------------

def conv0_patches(x_nhwc):
    """im2col for conv0 (7x7/s2/p3), rows ordered (row par, col par, ri, cj)."""
    n, h, w, c = x_nhwc.shape
    k, s, pd = 7, 2, 3
    ho = (h + 2 * pd - k) // s + 1
    wo = (w + 2 * pd - k) // s + 1
    assert ho % 2 == 0 and wo % 2 == 0
    xp = jnp.pad(x_nhwc, ((0, 0), (pd, pd), (pd, pd), (0, 0)))
    cols = [lax.slice(xp, (0, kh, kw, 0),
                      (n, kh + s * (ho - 1) + 1, kw + s * (wo - 1) + 1, c),
                      (1, s, s, 1))
            for kh in range(k) for kw in range(k)]
    pm = jnp.concatenate(cols, axis=-1)                      # (N, ho, wo, 147)
    pm = pm.reshape(n, ho // 2, 2, wo // 2, 2, k * k * c)    # oi=2ri+q, oj=2cj+p
    pm = jnp.transpose(pm, (0, 2, 4, 1, 3, 5))               # (N, q, p, ri, cj, K)
    return pm.reshape(n, ho * wo, k * k * c).astype(jnp.bfloat16)


# --------------------------------- parameters --------------------------------

def init_params(key, block_config=(2, 2), num_init_features=16, growth_rate=8,
                bn_size=2, num_classes=10):
    n_keys = 2 + 2 * sum(block_config)
    keys = jax.random.split(key, n_keys)
    kidx = [0]

    def nxt():
        k = keys[kidx[0]]
        kidx[0] += 1
        return k

    def kaiming(k, shape):  # PyTorch conv weight shape (Cout, Cin, kh, kw)
        fan_in = shape[1] * shape[2] * shape[3]
        return jax.random.normal(k, shape, jnp.float32) * jnp.sqrt(2.0 / fan_in)

    bott = bn_size * growth_rate
    bn_a = 1.0 / (1.0 + EPS) ** 0.5          # gamma=1, beta=0, mean=0, var=1

    # stem: conv0 with norm0's scale folded into the (147, c0) weight
    w0 = kaiming(nxt(), (num_init_features, 3, 7, 7))
    w0m = jnp.transpose(w0, (2, 3, 1, 0)).reshape(7 * 7 * 3, num_init_features)
    W0 = (w0m * bn_a).astype(jnp.bfloat16)
    b0 = jnp.zeros((1, num_init_features), jnp.float32)

    # dense layers: channel count of every concat (no transition layers)
    layer_cins = []
    num_features = num_init_features
    for nl in block_config:
        for j in range(nl):
            layer_cins.append(num_features + j * growth_rate)
        num_features += nl * growth_rate
    L = len(layer_cins)
    assert num_features <= C_PAD and 3 * bott <= C_PAD

    A1 = jnp.zeros((L, 1, C_PAD), jnp.float32)
    B1 = jnp.zeros((L, 1, C_PAD), jnp.float32)
    W1 = jnp.zeros((L, C_PAD, bott), jnp.float32)
    A2 = jnp.full((L, 1, bott), bn_a, jnp.float32)
    B2 = jnp.zeros((L, 1, bott), jnp.float32)
    W2 = jnp.zeros((L, 3, 3 * bott, growth_rate), jnp.float32)
    for l, cin in enumerate(layer_cins):
        A1 = A1.at[l, 0, :cin].set(bn_a)
        w1 = kaiming(nxt(), (bott, cin, 1, 1))
        W1 = W1.at[l, :cin, :].set(jnp.transpose(w1[:, :, 0, 0], (1, 0)))
        w2 = kaiming(nxt(), (growth_rate, bott, 3, 3))
        W2 = W2.at[l].set(
            jnp.transpose(w2, (2, 3, 1, 0)).reshape(3, 3 * bott, growth_rate))

    # head: final norm + classifier (rows zero-padded to C_PAD)
    Af = jnp.zeros((1, C_PAD), jnp.float32).at[0, :num_features].set(bn_a)
    Bf = jnp.zeros((1, C_PAD), jnp.float32)
    lim = 1.0 / float(num_features) ** 0.5
    wc = jax.random.uniform(nxt(), (num_classes, num_features), jnp.float32,
                            -lim, lim)
    Wc = jnp.zeros((C_PAD, num_classes), jnp.float32)
    Wc = Wc.at[:num_features, :].set(jnp.transpose(wc, (1, 0)))
    bc = jnp.zeros((1, num_classes), jnp.float32)

    return {
        "W0": W0, "b0": b0,
        "A1": A1, "B1": B1, "W1": W1.astype(jnp.bfloat16),
        "A2": A2, "B2": B2, "W2": W2.astype(jnp.bfloat16),
        "Af": Af, "Bf": Bf, "Wc": Wc.astype(jnp.bfloat16), "bc": bc,
        "meta": {"c0": num_init_features, "growth": growth_rate, "bott": bott,
                 "offsets": layer_cins, "num_classes": num_classes},
    }


# ----------------------------------- forward ---------------------------------

def densenet_forward(params, x_nchw):
    meta = params["meta"]
    x = jnp.transpose(x_nchw, (0, 2, 3, 1)).astype(jnp.float32)  # NCHW -> NHWC
    n, h, w, _ = x.shape
    assert h % 4 == 0 and w % 4 == 0 and w // 4 == 8
    hp, wp = h // 4, w // 4

    patches = conv0_patches(x)                # (N, (h//2)*(w//2), 147) bf16
    kernel = _make_fused_kernel(hp, wp, meta["c0"], meta["offsets"],
                                meta["growth"], meta["bott"],
                                meta["num_classes"])
    names = ("W0", "b0", "A1", "B1", "W1", "A2", "B2", "W2",
             "Af", "Bf", "Wc", "bc")
    weights = [params[k] for k in names]
    nc = meta["num_classes"]

    out = pl.pallas_call(
        kernel,
        out_shape=jax.ShapeDtypeStruct((n, 1, nc), jnp.float32),
        grid=(n,),
        in_specs=[pl.BlockSpec((1,) + tuple(patches.shape[1:]),
                               lambda i: (i, 0, 0))]
                 + [_const_spec(wt.shape) for wt in weights],
        out_specs=pl.BlockSpec((1, 1, nc), lambda i: (i, 0, 0)),
        scratch_shapes=[
            pltpu.VMEM((hp * wp, C_PAD), jnp.float32),        # concat buffer
            pltpu.VMEM((hp + 2, wp, 3 * meta["bott"]), jnp.float32),  # conv2 taps
        ],
        compiler_params=pltpu.CompilerParams(
            dimension_semantics=("parallel",)),
    )(patches, *weights)
    return out[:, 0, :]


if __name__ == "__main__":
    key = jax.random.PRNGKey(0)
    pkey, xkey = jax.random.split(key)

    NUM_CLASSES = 10
    params = init_params(pkey, block_config=(2, 2), num_init_features=16,
                         growth_rate=8, bn_size=2, num_classes=NUM_CLASSES)

    # Input follows PyTorch NCHW convention: (batch=2, channels=3, 32, 32).
    x = jax.random.normal(xkey, (2, 3, 32, 32), jnp.float32)

    fwd = jax.jit(functools.partial(densenet_forward, params))
    out = jax.block_until_ready(fwd(x))

    assert out.shape == (2, NUM_CLASSES), out.shape
    assert bool(jnp.all(jnp.isfinite(out)))
    print("KERNEL_OK")
</pallas_src>

<mosaic_0001>
module attributes {stable_mosaic.version = 11 : i64} {
  func.func @kernel(%arg0: i32, %arg1: memref<1x256x147xbf16, #tpu.memory_space<vmem>>, %arg2: memref<147x16xbf16, #tpu.memory_space<vmem>>, %arg3: memref<1x16xf32, #tpu.memory_space<vmem>>, %arg4: memref<4x1x128xf32, #tpu.memory_space<vmem>>, %arg5: memref<4x1x128xf32, #tpu.memory_space<vmem>>, %arg6: memref<4x128x16xbf16, #tpu.memory_space<vmem>>, %arg7: memref<4x1x16xf32, #tpu.memory_space<vmem>>, %arg8: memref<4x1x16xf32, #tpu.memory_space<vmem>>, %arg9: memref<4x3x48x8xbf16, #tpu.memory_space<vmem>>, %arg10: memref<1x128xf32, #tpu.memory_space<vmem>>, %arg11: memref<1x128xf32, #tpu.memory_space<vmem>>, %arg12: memref<128x10xbf16, #tpu.memory_space<vmem>>, %arg13: memref<1x10xf32, #tpu.memory_space<vmem>>, %arg14: memref<1x1x10xf32, #tpu.memory_space<vmem>>, %arg15: memref<64x128xf32, #tpu.memory_space<vmem>>, %arg16: memref<10x8x48xf32, #tpu.memory_space<vmem>>) attributes {dimension_semantics = [#tpu.dimension_semantics<parallel>], iteration_bounds = array<i64: 2>, scalar_prefetch = 0 : i64, scratch_operands = 2 : i64, tpu.core_type = #tpu.core_type<tc>, window_params = [{transform_indices = @transform_0, window_bounds = array<i64: 1, 256, 147>}, {pipeline_mode = #tpu.pipeline_mode<synchronous>, transform_indices = @transform_1, window_bounds = array<i64: 147, 16>}, {pipeline_mode = #tpu.pipeline_mode<synchronous>, transform_indices = @transform_2, window_bounds = array<i64: 1, 16>}, {pipeline_mode = #tpu.pipeline_mode<synchronous>, transform_indices = @transform_3, window_bounds = array<i64: 4, 1, 128>}, {pipeline_mode = #tpu.pipeline_mode<synchronous>, transform_indices = @transform_4, window_bounds = array<i64: 4, 1, 128>}, {pipeline_mode = #tpu.pipeline_mode<synchronous>, transform_indices = @transform_5, window_bounds = array<i64: 4, 128, 16>}, {pipeline_mode = #tpu.pipeline_mode<synchronous>, transform_indices = @transform_6, window_bounds = array<i64: 4, 1, 16>}, {pipeline_mode = #tpu.pipeline_mode<synchronous>, transform_indices = @transform_7, window_bounds = array<i64: 4, 1, 16>}, {pipeline_mode = #tpu.pipeline_mode<synchronous>, transform_indices = @transform_8, window_bounds = array<i64: 4, 3, 48, 8>}, {pipeline_mode = #tpu.pipeline_mode<synchronous>, transform_indices = @transform_9, window_bounds = array<i64: 1, 128>}, {pipeline_mode = #tpu.pipeline_mode<synchronous>, transform_indices = @transform_10, window_bounds = array<i64: 1, 128>}, {pipeline_mode = #tpu.pipeline_mode<synchronous>, transform_indices = @transform_11, window_bounds = array<i64: 128, 10>}, {pipeline_mode = #tpu.pipeline_mode<synchronous>, transform_indices = @transform_12, window_bounds = array<i64: 1, 10>}, {transform_indices = @transform_13, window_bounds = array<i64: 1, 1, 10>}]} {
    %c0 = arith.constant 0 : index
    %c0_0 = arith.constant 0 : index
    %c0_1 = arith.constant 0 : index
    %0 = vector.load %arg1[%c0, %c0_0, %c0_1] : memref<1x256x147xbf16, #tpu.memory_space<vmem>>, vector<1x256x147xbf16>
    %1 = vector.shape_cast %0 : vector<1x256x147xbf16> to vector<256x147xbf16>
    %c0_2 = arith.constant 0 : index
    %c0_3 = arith.constant 0 : index
    %2 = vector.load %arg2[%c0_2, %c0_3] : memref<147x16xbf16, #tpu.memory_space<vmem>>, vector<147x16xbf16>
    %cst = arith.constant dense<0.000000e+00> : vector<256x16xf32>
    %3 = tpu.matmul %1, %2, %cst {dimension_numbers = #tpu.dot_dimension_numbers<[1], [0], [0], [1], [0, 0, 1, 1], [], []>} : vector<256x147xbf16>, vector<147x16xbf16>, vector<256x16xf32> -> vector<256x16xf32>
    %c0_4 = arith.constant 0 : index
    %c0_5 = arith.constant 0 : index
    %4 = vector.load %arg3[%c0_4, %c0_5] : memref<1x16xf32, #tpu.memory_space<vmem>>, vector<1x16xf32>
    %5 = vector.broadcast %4 : vector<1x16xf32> to vector<256x16xf32>
    %6 = arith.addf %3, %5 : vector<256x16xf32>
    %cst_6 = arith.constant 0.000000e+00 : f32
    %7 = vector.broadcast %cst_6 : f32 to vector<256x16xf32>
    %8 = arith.maximumf %6, %7 : vector<256x16xf32>
    %9 = vector.shape_cast %8 : vector<256x16xf32> to vector<2x2x8x8x16xf32>
    %10 = vector.extract_strided_slice %9 {offsets = [0, 0, 0, 0, 0], sizes = [1, 1, 8, 8, 16], strides = [1, 1, 1, 1, 1]} : vector<2x2x8x8x16xf32> to vector<1x1x8x8x16xf32>
    %11 = vector.shape_cast %10 : vector<1x1x8x8x16xf32> to vector<8x8x16xf32>
    %12 = vector.extract_strided_slice %9 {offsets = [0, 1, 0, 0, 0], sizes = [1, 1, 8, 8, 16], strides = [1, 1, 1, 1, 1]} : vector<2x2x8x8x16xf32> to vector<1x1x8x8x16xf32>
    %13 = vector.shape_cast %12 : vector<1x1x8x8x16xf32> to vector<8x8x16xf32>
    %14 = arith.maximumf %11, %13 : vector<8x8x16xf32>
    %15 = vector.extract_strided_slice %9 {offsets = [0, 1, 0, 0, 0], sizes = [1, 1, 8, 8, 16], strides = [1, 1, 1, 1, 1]} : vector<2x2x8x8x16xf32> to vector<1x1x8x8x16xf32>
    %16 = vector.shape_cast %15 : vector<1x1x8x8x16xf32> to vector<8x8x16xf32>
    %c1_i32 = arith.constant 1 : i32
    %17 = tpu.dynamic_rotate %16 by %c1_i32 dim 1 : vector<8x8x16xf32>, i32 -> vector<8x8x16xf32>
    %18 = tpu.iota {dimensions = array<i32: 1>} : vector<8x8x16xi32>
    %c1_i32_7 = arith.constant 1 : i32
    %19 = vector.broadcast %c1_i32_7 : i32 to vector<8x8x16xi32>
    %20 = arith.cmpi slt, %18, %19 : vector<8x8x16xi32>
    %cst_8 = arith.constant 0.000000e+00 : f32
    %21 = vector.broadcast %cst_8 : f32 to vector<8x8x16xf32>
    %22 = arith.select %20, %21, %17 : vector<8x8x16xi1>, vector<8x8x16xf32>
    %23 = arith.maximumf %14, %22 : vector<8x8x16xf32>
    %24 = vector.extract_strided_slice %9 {offsets = [1, 0, 0, 0, 0], sizes = [1, 1, 8, 8, 16], strides = [1, 1, 1, 1, 1]} : vector<2x2x8x8x16xf32> to vector<1x1x8x8x16xf32>
    %25 = vector.shape_cast %24 : vector<1x1x8x8x16xf32> to vector<8x8x16xf32>
    %26 = vector.extract_strided_slice %9 {offsets = [1, 1, 0, 0, 0], sizes = [1, 1, 8, 8, 16], strides = [1, 1, 1, 1, 1]} : vector<2x2x8x8x16xf32> to vector<1x1x8x8x16xf32>
    %27 = vector.shape_cast %26 : vector<1x1x8x8x16xf32> to vector<8x8x16xf32>
    %28 = arith.maximumf %25, %27 : vector<8x8x16xf32>
    %29 = vector.extract_strided_slice %9 {offsets = [1, 1, 0, 0, 0], sizes = [1, 1, 8, 8, 16], strides = [1, 1, 1, 1, 1]} : vector<2x2x8x8x16xf32> to vector<1x1x8x8x16xf32>
    %30 = vector.shape_cast %29 : vector<1x1x8x8x16xf32> to vector<8x8x16xf32>
    %c1_i32_9 = arith.constant 1 : i32
    %31 = tpu.dynamic_rotate %30 by %c1_i32_9 dim 1 : vector<8x8x16xf32>, i32 -> vector<8x8x16xf32>
    %32 = tpu.iota {dimensions = array<i32: 1>} : vector<8x8x16xi32>
    %c1_i32_10 = arith.constant 1 : i32
    %33 = vector.broadcast %c1_i32_10 : i32 to vector<8x8x16xi32>
    %34 = arith.cmpi slt, %32, %33 : vector<8x8x16xi32>
    %cst_11 = arith.constant 0.000000e+00 : f32
    %35 = vector.broadcast %cst_11 : f32 to vector<8x8x16xf32>
    %36 = arith.select %34, %35, %31 : vector<8x8x16xi1>, vector<8x8x16xf32>
    %37 = arith.maximumf %28, %36 : vector<8x8x16xf32>
    %cst_12 = arith.constant 0.000000e+00 : f32
    %38 = vector.broadcast %cst_12 : f32 to vector<1x8x16xf32>
    %39 = vector.extract_strided_slice %37 {offsets = [0, 0, 0], sizes = [7, 8, 16], strides = [1, 1, 1]} : vector<8x8x16xf32> to vector<7x8x16xf32>
    %40 = tpu.concatenate %38, %39 in 0 : vector<1x8x16xf32>, vector<7x8x16xf32> -> vector<8x8x16xf32>
    %41 = arith.maximumf %23, %37 : vector<8x8x16xf32>
    %42 = arith.maximumf %41, %40 : vector<8x8x16xf32>
    %cst_13 = arith.constant 0.000000e+00 : f32
    %43 = vector.broadcast %cst_13 : f32 to vector<64x128xf32>
    %c0_14 = arith.constant 0 : index
    %c0_15 = arith.constant 0 : index
    %44 = vector.load %arg15[%c0_14, %c0_15] : memref<64x128xf32, #tpu.memory_space<vmem>>, vector<64x128xf32>
    tpu.vector_store %arg15[%c0_14, %c0_15], %43 {strides = array<i32>} : memref<64x128xf32, #tpu.memory_space<vmem>>, vector<64x128xf32>,
    %45 = vector.shape_cast %42 : vector<8x8x16xf32> to vector<64x16xf32>
    %c0_16 = arith.constant 0 : index
    %c0_17 = arith.constant 0 : index
    %46 = vector.load %arg15[%c0_16, %c0_17] : memref<64x128xf32, #tpu.memory_space<vmem>>, vector<64x16xf32>
    tpu.vector_store %arg15[%c0_16, %c0_17], %45 {strides = array<i32>} : memref<64x128xf32, #tpu.memory_space<vmem>>, vector<64x16xf32>,
    %cst_18 = arith.constant 0.000000e+00 : f32
    %47 = vector.broadcast %cst_18 : f32 to vector<10x8x48xf32>
    %c0_19 = arith.constant 0 : index
    %c0_20 = arith.constant 0 : index
    %c0_21 = arith.constant 0 : index
    %48 = vector.load %arg16[%c0_19, %c0_20, %c0_21] : memref<10x8x48xf32, #tpu.memory_space<vmem>>, vector<10x8x48xf32>
    tpu.vector_store %arg16[%c0_19, %c0_20, %c0_21], %47 {strides = array<i32>} : memref<10x8x48xf32, #tpu.memory_space<vmem>>, vector<10x8x48xf32>,
    %c0_22 = arith.constant 0 : index
    %c0_23 = arith.constant 0 : index
    %49 = vector.load %arg15[%c0_22, %c0_23] : memref<64x128xf32, #tpu.memory_space<vmem>>, vector<64x128xf32>
    %c0_24 = arith.constant 0 : index
    %c0_25 = arith.constant 0 : index
    %c0_26 = arith.constant 0 : index
    %50 = vector.load %arg4[%c0_24, %c0_25, %c0_26] : memref<4x1x128xf32, #tpu.memory_space<vmem>>, vector<1x1x128xf32>
    %51 = vector.shape_cast %50 : vector<1x1x128xf32> to vector<1x128xf32>
    %52 = vector.broadcast %51 : vector<1x128xf32> to vector<64x128xf32>
    %53 = arith.mulf %49, %52 : vector<64x128xf32>
    %c0_27 = arith.constant 0 : index
    %c0_28 = arith.constant 0 : index
    %c0_29 = arith.constant 0 : index
    %54 = vector.load %arg5[%c0_27, %c0_28, %c0_29] : memref<4x1x128xf32, #tpu.memory_space<vmem>>, vector<1x1x128xf32>
    %55 = vector.shape_cast %54 : vector<1x1x128xf32> to vector<1x128xf32>
    %56 = vector.broadcast %55 : vector<1x128xf32> to vector<64x128xf32>
    %57 = arith.addf %53, %56 : vector<64x128xf32>
    %cst_30 = arith.constant 0.000000e+00 : f32
    %58 = vector.broadcast %cst_30 : f32 to vector<64x128xf32>
    %59 = arith.maximumf %57, %58 : vector<64x128xf32>
    %60 = arith.truncf %59 : vector<64x128xf32> to vector<64x128xbf16>
    %c0_31 = arith.constant 0 : index
    %c0_32 = arith.constant 0 : index
    %c0_33 = arith.constant 0 : index
    %61 = vector.load %arg6[%c0_31, %c0_32, %c0_33] : memref<4x128x16xbf16, #tpu.memory_space<vmem>>, vector<1x128x16xbf16>
    %62 = vector.shape_cast %61 : vector<1x128x16xbf16> to vector<128x16xbf16>
    %cst_34 = arith.constant dense<0.000000e+00> : vector<64x16xf32>
    %63 = tpu.matmul %60, %62, %cst_34 {dimension_numbers = #tpu.dot_dimension_numbers<[1], [0], [0], [1], [0, 0, 1, 1], [], []>} : vector<64x128xbf16>, vector<128x16xbf16>, vector<64x16xf32> -> vector<64x16xf32>
    %c0_35 = arith.constant 0 : index
    %c0_36 = arith.constant 0 : index
    %c0_37 = arith.constant 0 : index
    %64 = vector.load %arg7[%c0_35, %c0_36, %c0_37] : memref<4x1x16xf32, #tpu.memory_space<vmem>>, vector<1x1x16xf32>
    %65 = vector.shape_cast %64 : vector<1x1x16xf32> to vector<1x16xf32>
    %66 = vector.broadcast %65 : vector<1x16xf32> to vector<64x16xf32>
    %67 = arith.mulf %63, %66 : vector<64x16xf32>
    %c0_38 = arith.constant 0 : index
    %c0_39 = arith.constant 0 : index
    %c0_40 = arith.constant 0 : index
    %68 = vector.load %arg8[%c0_38, %c0_39, %c0_40] : memref<4x1x16xf32, #tpu.memory_space<vmem>>, vector<1x1x16xf32>
    %69 = vector.shape_cast %68 : vector<1x1x16xf32> to vector<1x16xf32>
    %70 = vector.broadcast %69 : vector<1x16xf32> to vector<64x16xf32>
    %71 = arith.addf %67, %70 : vector<64x16xf32>
    %cst_41 = arith.constant 0.000000e+00 : f32
    %72 = vector.broadcast %cst_41 : f32 to vector<64x16xf32>
    %73 = arith.maximumf %71, %72 : vector<64x16xf32>
    %74 = vector.shape_cast %73 : vector<64x16xf32> to vector<8x8x16xf32>
    %c1_i32_42 = arith.constant 1 : i32
    %75 = tpu.dynamic_rotate %74 by %c1_i32_42 dim 1 : vector<8x8x16xf32>, i32 -> vector<8x8x16xf32>
    %76 = tpu.iota {dimensions = array<i32: 1>} : vector<8x8x16xi32>
    %c1_i32_43 = arith.constant 1 : i32
    %77 = vector.broadcast %c1_i32_43 : i32 to vector<8x8x16xi32>
    %78 = arith.cmpi slt, %76, %77 : vector<8x8x16xi32>
    %cst_44 = arith.constant 0.000000e+00 : f32
    %79 = vector.broadcast %cst_44 : f32 to vector<8x8x16xf32>
    %80 = arith.select %78, %79, %75 : vector<8x8x16xi1>, vector<8x8x16xf32>
    %c1 = arith.constant 1 : index
    %c0_45 = arith.constant 0 : index
    %c0_46 = arith.constant 0 : index
    %81 = vector.load %arg16[%c1, %c0_45, %c0_46] : memref<10x8x48xf32, #tpu.memory_space<vmem>>, vector<8x8x16xf32>
    tpu.vector_store %arg16[%c1, %c0_45, %c0_46], %80 {strides = array<i32>} : memref<10x8x48xf32, #tpu.memory_space<vmem>>, vector<8x8x16xf32>,
    %c1_47 = arith.constant 1 : index
    %c0_48 = arith.constant 0 : index
    %c16 = arith.constant 16 : index
    %82 = vector.load %arg16[%c1_47, %c0_48, %c16] : memref<10x8x48xf32, #tpu.memory_space<vmem>>, vector<8x8x16xf32>
    tpu.vector_store %arg16[%c1_47, %c0_48, %c16], %74 {strides = array<i32>} : memref<10x8x48xf32, #tpu.memory_space<vmem>>, vector<8x8x16xf32>,
    %c7_i32 = arith.constant 7 : i32
    %83 = tpu.dynamic_rotate %74 by %c7_i32 dim 1 : vector<8x8x16xf32>, i32 -> vector<8x8x16xf32>
    %84 = tpu.iota {dimensions = array<i32: 1>} : vector<8x8x16xi32>
    %c7_i32_49 = arith.constant 7 : i32
    %85 = vector.broadcast %c7_i32_49 : i32 to vector<8x8x16xi32>
    %86 = arith.cmpi sge, %84, %85 : vector<8x8x16xi32>
    %cst_50 = arith.constant 0.000000e+00 : f32
    %87 = vector.broadcast %cst_50 : f32 to vector<8x8x16xf32>
    %88 = arith.select %86, %87, %83 : vector<8x8x16xi1>, vector<8x8x16xf32>
    %c1_51 = arith.constant 1 : index
    %c0_52 = arith.constant 0 : index
    %c32 = arith.constant 32 : index
    %89 = vector.load %arg16[%c1_51, %c0_52, %c32] : memref<10x8x48xf32, #tpu.memory_space<vmem>>, vector<8x8x16xf32>
    tpu.vector_store %arg16[%c1_51, %c0_52, %c32], %88 {strides = array<i32>} : memref<10x8x48xf32, #tpu.memory_space<vmem>>, vector<8x8x16xf32>,
    %cst_53 = arith.constant 0.000000e+00 : f32
    %90 = vector.broadcast %cst_53 : f32 to vector<64x8xf32>
    %c0_54 = arith.constant 0 : index
    %c0_55 = arith.constant 0 : index
    %c0_56 = arith.constant 0 : index
    %91 = vector.load %arg16[%c0_54, %c0_55, %c0_56] : memref<10x8x48xf32, #tpu.memory_space<vmem>>, vector<8x8x48xf32>
    %92 = vector.shape_cast %91 : vector<8x8x48xf32> to vector<64x48xf32>
    %93 = arith.truncf %92 : vector<64x48xf32> to vector<64x48xbf16>
    %c0_57 = arith.constant 0 : index
    %c0_58 = arith.constant 0 : index
    %c0_59 = arith.constant 0 : index
    %c0_60 = arith.constant 0 : index
    %94 = vector.load %arg9[%c0_57, %c0_58, %c0_59, %c0_60] : memref<4x3x48x8xbf16, #tpu.memory_space<vmem>>, vector<1x1x48x8xbf16>
    %95 = vector.shape_cast %94 : vector<1x1x48x8xbf16> to vector<48x8xbf16>
    %cst_61 = arith.constant dense<0.000000e+00> : vector<64x8xf32>
    %96 = tpu.matmul %93, %95, %cst_61 {dimension_numbers = #tpu.dot_dimension_numbers<[1], [0], [0], [1], [0, 0, 1, 1], [], []>} : vector<64x48xbf16>, vector<48x8xbf16>, vector<64x8xf32> -> vector<64x8xf32>
    %97 = arith.addf %90, %96 : vector<64x8xf32>
    %c1_62 = arith.constant 1 : index
    %c0_63 = arith.constant 0 : index
    %c0_64 = arith.constant 0 : index
    %98 = vector.load %arg16[%c1_62, %c0_63, %c0_64] : memref<10x8x48xf32, #tpu.memory_space<vmem>>, vector<8x8x48xf32>
    %99 = vector.shape_cast %98 : vector<8x8x48xf32> to vector<64x48xf32>
    %100 = arith.truncf %99 : vector<64x48xf32> to vector<64x48xbf16>
    %c0_65 = arith.constant 0 : index
    %c1_66 = arith.constant 1 : index
    %c0_67 = arith.constant 0 : index
    %c0_68 = arith.constant 0 : index
    %101 = vector.load %arg9[%c0_65, %c1_66, %c0_67, %c0_68] : memref<4x3x48x8xbf16, #tpu.memory_space<vmem>>, vector<1x1x48x8xbf16>
    %102 = vector.shape_cast %101 : vector<1x1x48x8xbf16> to vector<48x8xbf16>
    %cst_69 = arith.constant dense<0.000000e+00> : vector<64x8xf32>
    %103 = tpu.matmul %100, %102, %cst_69 {dimension_numbers = #tpu.dot_dimension_numbers<[1], [0], [0], [1], [0, 0, 1, 1], [], []>} : vector<64x48xbf16>, vector<48x8xbf16>, vector<64x8xf32> -> vector<64x8xf32>
    %104 = arith.addf %97, %103 : vector<64x8xf32>
    %c2 = arith.constant 2 : index
    %c0_70 = arith.constant 0 : index
    %c0_71 = arith.constant 0 : index
    %105 = vector.load %arg16[%c2, %c0_70, %c0_71] : memref<10x8x48xf32, #tpu.memory_space<vmem>>, vector<8x8x48xf32>
    %106 = vector.shape_cast %105 : vector<8x8x48xf32> to vector<64x48xf32>
    %107 = arith.truncf %106 : vector<64x48xf32> to vector<64x48xbf16>
    %c0_72 = arith.constant 0 : index
    %c2_73 = arith.constant 2 : index
    %c0_74 = arith.constant 0 : index
    %c0_75 = arith.constant 0 : index
    %108 = vector.load %arg9[%c0_72, %c2_73, %c0_74, %c0_75] : memref<4x3x48x8xbf16, #tpu.memory_space<vmem>>, vector<1x1x48x8xbf16>
    %109 = vector.shape_cast %108 : vector<1x1x48x8xbf16> to vector<48x8xbf16>
    %cst_76 = arith.constant dense<0.000000e+00> : vector<64x8xf32>
    %110 = tpu.matmul %107, %109, %cst_76 {dimension_numbers = #tpu.dot_dimension_numbers<[1], [0], [0], [1], [0, 0, 1, 1], [], []>} : vector<64x48xbf16>, vector<48x8xbf16>, vector<64x8xf32> -> vector<64x8xf32>
    %111 = arith.addf %104, %110 : vector<64x8xf32>
    %c0_77 = arith.constant 0 : index
    %c16_78 = arith.constant 16 : index
    %112 = vector.load %arg15[%c0_77, %c16_78] : memref<64x128xf32, #tpu.memory_space<vmem>>, vector<64x8xf32>
    tpu.vector_store %arg15[%c0_77, %c16_78], %111 {strides = array<i32>} : memref<64x128xf32, #tpu.memory_space<vmem>>, vector<64x8xf32>,
    %c0_79 = arith.constant 0 : index
    %c0_80 = arith.constant 0 : index
    %113 = vector.load %arg15[%c0_79, %c0_80] : memref<64x128xf32, #tpu.memory_space<vmem>>, vector<64x128xf32>
    %c1_81 = arith.constant 1 : index
    %c0_82 = arith.constant 0 : index
    %c0_83 = arith.constant 0 : index
    %114 = vector.load %arg4[%c1_81, %c0_82, %c0_83] : memref<4x1x128xf32, #tpu.memory_space<vmem>>, vector<1x1x128xf32>
    %115 = vector.shape_cast %114 : vector<1x1x128xf32> to vector<1x128xf32>
    %116 = vector.broadcast %115 : vector<1x128xf32> to vector<64x128xf32>
    %117 = arith.mulf %113, %116 : vector<64x128xf32>
    %c1_84 = arith.constant 1 : index
    %c0_85 = arith.constant 0 : index
    %c0_86 = arith.constant 0 : index
    %118 = vector.load %arg5[%c1_84, %c0_85, %c0_86] : memref<4x1x128xf32, #tpu.memory_space<vmem>>, vector<1x1x128xf32>
    %119 = vector.shape_cast %118 : vector<1x1x128xf32> to vector<1x128xf32>
    %120 = vector.broadcast %119 : vector<1x128xf32> to vector<64x128xf32>
    %121 = arith.addf %117, %120 : vector<64x128xf32>
    %cst_87 = arith.constant 0.000000e+00 : f32
    %122 = vector.broadcast %cst_87 : f32 to vector<64x128xf32>
    %123 = arith.maximumf %121, %122 : vector<64x128xf32>
    %124 = arith.truncf %123 : vector<64x128xf32> to vector<64x128xbf16>
    %c1_88 = arith.constant 1 : index
    %c0_89 = arith.constant 0 : index
    %c0_90 = arith.constant 0 : index
    %125 = vector.load %arg6[%c1_88, %c0_89, %c0_90] : memref<4x128x16xbf16, #tpu.memory_space<vmem>>, vector<1x128x16xbf16>
    %126 = vector.shape_cast %125 : vector<1x128x16xbf16> to vector<128x16xbf16>
    %cst_91 = arith.constant dense<0.000000e+00> : vector<64x16xf32>
    %127 = tpu.matmul %124, %126, %cst_91 {dimension_numbers = #tpu.dot_dimension_numbers<[1], [0], [0], [1], [0, 0, 1, 1], [], []>} : vector<64x128xbf16>, vector<128x16xbf16>, vector<64x16xf32> -> vector<64x16xf32>
    %c1_92 = arith.constant 1 : index
    %c0_93 = arith.constant 0 : index
    %c0_94 = arith.constant 0 : index
    %128 = vector.load %arg7[%c1_92, %c0_93, %c0_94] : memref<4x1x16xf32, #tpu.memory_space<vmem>>, vector<1x1x16xf32>
    %129 = vector.shape_cast %128 : vector<1x1x16xf32> to vector<1x16xf32>
    %130 = vector.broadcast %129 : vector<1x16xf32> to vector<64x16xf32>
    %131 = arith.mulf %127, %130 : vector<64x16xf32>
    %c1_95 = arith.constant 1 : index
    %c0_96 = arith.constant 0 : index
    %c0_97 = arith.constant 0 : index
    %132 = vector.load %arg8[%c1_95, %c0_96, %c0_97] : memref<4x1x16xf32, #tpu.memory_space<vmem>>, vector<1x1x16xf32>
    %133 = vector.shape_cast %132 : vector<1x1x16xf32> to vector<1x16xf32>
    %134 = vector.broadcast %133 : vector<1x16xf32> to vector<64x16xf32>
    %135 = arith.addf %131, %134 : vector<64x16xf32>
    %cst_98 = arith.constant 0.000000e+00 : f32
    %136 = vector.broadcast %cst_98 : f32 to vector<64x16xf32>
    %137 = arith.maximumf %135, %136 : vector<64x16xf32>
    %138 = vector.shape_cast %137 : vector<64x16xf32> to vector<8x8x16xf32>
    %c1_i32_99 = arith.constant 1 : i32
    %139 = tpu.dynamic_rotate %138 by %c1_i32_99 dim 1 : vector<8x8x16xf32>, i32 -> vector<8x8x16xf32>
    %140 = tpu.iota {dimensions = array<i32: 1>} : vector<8x8x16xi32>
    %c1_i32_100 = arith.constant 1 : i32
    %141 = vector.broadcast %c1_i32_100 : i32 to vector<8x8x16xi32>
    %142 = arith.cmpi slt, %140, %141 : vector<8x8x16xi32>
    %cst_101 = arith.constant 0.000000e+00 : f32
    %143 = vector.broadcast %cst_101 : f32 to vector<8x8x16xf32>
    %144 = arith.select %142, %143, %139 : vector<8x8x16xi1>, vector<8x8x16xf32>
    %c1_102 = arith.constant 1 : index
    %c0_103 = arith.constant 0 : index
    %c0_104 = arith.constant 0 : index
    %145 = vector.load %arg16[%c1_102, %c0_103, %c0_104] : memref<10x8x48xf32, #tpu.memory_space<vmem>>, vector<8x8x16xf32>
    tpu.vector_store %arg16[%c1_102, %c0_103, %c0_104], %144 {strides = array<i32>} : memref<10x8x48xf32, #tpu.memory_space<vmem>>, vector<8x8x16xf32>,
    %c1_105 = arith.constant 1 : index
    %c0_106 = arith.constant 0 : index
    %c16_107 = arith.constant 16 : index
    %146 = vector.load %arg16[%c1_105, %c0_106, %c16_107] : memref<10x8x48xf32, #tpu.memory_space<vmem>>, vector<8x8x16xf32>
    tpu.vector_store %arg16[%c1_105, %c0_106, %c16_107], %138 {strides = array<i32>} : memref<10x8x48xf32, #tpu.memory_space<vmem>>, vector<8x8x16xf32>,
    %c7_i32_108 = arith.constant 7 : i32
    %147 = tpu.dynamic_rotate %138 by %c7_i32_108 dim 1 : vector<8x8x16xf32>, i32 -> vector<8x8x16xf32>
    %148 = tpu.iota {dimensions = array<i32: 1>} : vector<8x8x16xi32>
    %c7_i32_109 = arith.constant 7 : i32
    %149 = vector.broadcast %c7_i32_109 : i32 to vector<8x8x16xi32>
    %150 = arith.cmpi sge, %148, %149 : vector<8x8x16xi32>
    %cst_110 = arith.constant 0.000000e+00 : f32
    %151 = vector.broadcast %cst_110 : f32 to vector<8x8x16xf32>
    %152 = arith.select %150, %151, %147 : vector<8x8x16xi1>, vector<8x8x16xf32>
    %c1_111 = arith.constant 1 : index
    %c0_112 = arith.constant 0 : index
    %c32_113 = arith.constant 32 : index
    %153 = vector.load %arg16[%c1_111, %c0_112, %c32_113] : memref<10x8x48xf32, #tpu.memory_space<vmem>>, vector<8x8x16xf32>
    tpu.vector_store %arg16[%c1_111, %c0_112, %c32_113], %152 {strides = array<i32>} : memref<10x8x48xf32, #tpu.memory_space<vmem>>, vector<8x8x16xf32>,
    %cst_114 = arith.constant 0.000000e+00 : f32
    %154 = vector.broadcast %cst_114 : f32 to vector<64x8xf32>
    %c0_115 = arith.constant 0 : index
    %c0_116 = arith.constant 0 : index
    %c0_117 = arith.constant 0 : index
    %155 = vector.load %arg16[%c0_115, %c0_116, %c0_117] : memref<10x8x48xf32, #tpu.memory_space<vmem>>, vector<8x8x48xf32>
    %156 = vector.shape_cast %155 : vector<8x8x48xf32> to vector<64x48xf32>
    %157 = arith.truncf %156 : vector<64x48xf32> to vector<64x48xbf16>
    %c1_118 = arith.constant 1 : index
    %c0_119 = arith.constant 0 : index
    %c0_120 = arith.constant 0 : index
    %c0_121 = arith.constant 0 : index
    %158 = vector.load %arg9[%c1_118, %c0_119, %c0_120, %c0_121] : memref<4x3x48x8xbf16, #tpu.memory_space<vmem>>, vector<1x1x48x8xbf16>
    %159 = vector.shape_cast %158 : vector<1x1x48x8xbf16> to vector<48x8xbf16>
    %cst_122 = arith.constant dense<0.000000e+00> : vector<64x8xf32>
    %160 = tpu.matmul %157, %159, %cst_122 {dimension_numbers = #tpu.dot_dimension_numbers<[1], [0], [0], [1], [0, 0, 1, 1], [], []>} : vector<64x48xbf16>, vector<48x8xbf16>, vector<64x8xf32> -> vector<64x8xf32>
    %161 = arith.addf %154, %160 : vector<64x8xf32>
    %c1_123 = arith.constant 1 : index
    %c0_124 = arith.constant 0 : index
    %c0_125 = arith.constant 0 : index
    %162 = vector.load %arg16[%c1_123, %c0_124, %c0_125] : memref<10x8x48xf32, #tpu.memory_space<vmem>>, vector<8x8x48xf32>
    %163 = vector.shape_cast %162 : vector<8x8x48xf32> to vector<64x48xf32>
    %164 = arith.truncf %163 : vector<64x48xf32> to vector<64x48xbf16>
    %c1_126 = arith.constant 1 : index
    %c1_127 = arith.constant 1 : index
    %c0_128 = arith.constant 0 : index
    %c0_129 = arith.constant 0 : index
    %165 = vector.load %arg9[%c1_126, %c1_127, %c0_128, %c0_129] : memref<4x3x48x8xbf16, #tpu.memory_space<vmem>>, vector<1x1x48x8xbf16>
    %166 = vector.shape_cast %165 : vector<1x1x48x8xbf16> to vector<48x8xbf16>
    %cst_130 = arith.constant dense<0.000000e+00> : vector<64x8xf32>
    %167 = tpu.matmul %164, %166, %cst_130 {dimension_numbers = #tpu.dot_dimension_numbers<[1], [0], [0], [1], [0, 0, 1, 1], [], []>} : vector<64x48xbf16>, vector<48x8xbf16>, vector<64x8xf32> -> vector<64x8xf32>
    %168 = arith.addf %161, %167 : vector<64x8xf32>
    %c2_131 = arith.constant 2 : index
    %c0_132 = arith.constant 0 : index
    %c0_133 = arith.constant 0 : index
    %169 = vector.load %arg16[%c2_131, %c0_132, %c0_133] : memref<10x8x48xf32, #tpu.memory_space<vmem>>, vector<8x8x48xf32>
    %170 = vector.shape_cast %169 : vector<8x8x48xf32> to vector<64x48xf32>
    %171 = arith.truncf %170 : vector<64x48xf32> to vector<64x48xbf16>
    %c1_134 = arith.constant 1 : index
    %c2_135 = arith.constant 2 : index
    %c0_136 = arith.constant 0 : index
    %c0_137 = arith.constant 0 : index
    %172 = vector.load %arg9[%c1_134, %c2_135, %c0_136, %c0_137] : memref<4x3x48x8xbf16, #tpu.memory_space<vmem>>, vector<1x1x48x8xbf16>
    %173 = vector.shape_cast %172 : vector<1x1x48x8xbf16> to vector<48x8xbf16>
    %cst_138 = arith.constant dense<0.000000e+00> : vector<64x8xf32>
    %174 = tpu.matmul %171, %173, %cst_138 {dimension_numbers = #tpu.dot_dimension_numbers<[1], [0], [0], [1], [0, 0, 1, 1], [], []>} : vector<64x48xbf16>, vector<48x8xbf16>, vector<64x8xf32> -> vector<64x8xf32>
    %175 = arith.addf %168, %174 : vector<64x8xf32>
    %c0_139 = arith.constant 0 : index
    %c24 = arith.constant 24 : index
    %176 = vector.load %arg15[%c0_139, %c24] : memref<64x128xf32, #tpu.memory_space<vmem>>, vector<64x8xf32>
    tpu.vector_store %arg15[%c0_139, %c24], %175 {strides = array<i32>} : memref<64x128xf32, #tpu.memory_space<vmem>>, vector<64x8xf32>,
    %c0_140 = arith.constant 0 : index
    %c0_141 = arith.constant 0 : index
    %177 = vector.load %arg15[%c0_140, %c0_141] : memref<64x128xf32, #tpu.memory_space<vmem>>, vector<64x128xf32>
    %c2_142 = arith.constant 2 : index
    %c0_143 = arith.constant 0 : index
    %c0_144 = arith.constant 0 : index
    %178 = vector.load %arg4[%c2_142, %c0_143, %c0_144] : memref<4x1x128xf32, #tpu.memory_space<vmem>>, vector<1x1x128xf32>
    %179 = vector.shape_cast %178 : vector<1x1x128xf32> to vector<1x128xf32>
    %180 = vector.broadcast %179 : vector<1x128xf32> to vector<64x128xf32>
    %181 = arith.mulf %177, %180 : vector<64x128xf32>
    %c2_145 = arith.constant 2 : index
    %c0_146 = arith.constant 0 : index
    %c0_147 = arith.constant 0 : index
    %182 = vector.load %arg5[%c2_145, %c0_146, %c0_147] : memref<4x1x128xf32, #tpu.memory_space<vmem>>, vector<1x1x128xf32>
    %183 = vector.shape_cast %182 : vector<1x1x128xf32> to vector<1x128xf32>
    %184 = vector.broadcast %183 : vector<1x128xf32> to vector<64x128xf32>
    %185 = arith.addf %181, %184 : vector<64x128xf32>
    %cst_148 = arith.constant 0.000000e+00 : f32
    %186 = vector.broadcast %cst_148 : f32 to vector<64x128xf32>
    %187 = arith.maximumf %185, %186 : vector<64x128xf32>
    %188 = arith.truncf %187 : vector<64x128xf32> to vector<64x128xbf16>
    %c2_149 = arith.constant 2 : index
    %c0_150 = arith.constant 0 : index
    %c0_151 = arith.constant 0 : index
    %189 = vector.load %arg6[%c2_149, %c0_150, %c0_151] : memref<4x128x16xbf16, #tpu.memory_space<vmem>>, vector<1x128x16xbf16>
    %190 = vector.shape_cast %189 : vector<1x128x16xbf16> to vector<128x16xbf16>
    %cst_152 = arith.constant dense<0.000000e+00> : vector<64x16xf32>
    %191 = tpu.matmul %188, %190, %cst_152 {dimension_numbers = #tpu.dot_dimension_numbers<[1], [0], [0], [1], [0, 0, 1, 1], [], []>} : vector<64x128xbf16>, vector<128x16xbf16>, vector<64x16xf32> -> vector<64x16xf32>
    %c2_153 = arith.constant 2 : index
    %c0_154 = arith.constant 0 : index
    %c0_155 = arith.constant 0 : index
    %192 = vector.load %arg7[%c2_153, %c0_154, %c0_155] : memref<4x1x16xf32, #tpu.memory_space<vmem>>, vector<1x1x16xf32>
    %193 = vector.shape_cast %192 : vector<1x1x16xf32> to vector<1x16xf32>
    %194 = vector.broadcast %193 : vector<1x16xf32> to vector<64x16xf32>
    %195 = arith.mulf %191, %194 : vector<64x16xf32>
    %c2_156 = arith.constant 2 : index
    %c0_157 = arith.constant 0 : index
    %c0_158 = arith.constant 0 : index
    %196 = vector.load %arg8[%c2_156, %c0_157, %c0_158] : memref<4x1x16xf32, #tpu.memory_space<vmem>>, vector<1x1x16xf32>
    %197 = vector.shape_cast %196 : vector<1x1x16xf32> to vector<1x16xf32>
    %198 = vector.broadcast %197 : vector<1x16xf32> to vector<64x16xf32>
    %199 = arith.addf %195, %198 : vector<64x16xf32>
    %cst_159 = arith.constant 0.000000e+00 : f32
    %200 = vector.broadcast %cst_159 : f32 to vector<64x16xf32>
    %201 = arith.maximumf %199, %200 : vector<64x16xf32>
    %202 = vector.shape_cast %201 : vector<64x16xf32> to vector<8x8x16xf32>
    %c1_i32_160 = arith.constant 1 : i32
    %203 = tpu.dynamic_rotate %202 by %c1_i32_160 dim 1 : vector<8x8x16xf32>, i32 -> vector<8x8x16xf32>
    %204 = tpu.iota {dimensions = array<i32: 1>} : vector<8x8x16xi32>
    %c1_i32_161 = arith.constant 1 : i32
    %205 = vector.broadcast %c1_i32_161 : i32 to vector<8x8x16xi32>
    %206 = arith.cmpi slt, %204, %205 : vector<8x8x16xi32>
    %cst_162 = arith.constant 0.000000e+00 : f32
    %207 = vector.broadcast %cst_162 : f32 to vector<8x8x16xf32>
    %208 = arith.select %206, %207, %203 : vector<8x8x16xi1>, vector<8x8x16xf32>
    %c1_163 = arith.constant 1 : index
    %c0_164 = arith.constant 0 : index
    %c0_165 = arith.constant 0 : index
    %209 = vector.load %arg16[%c1_163, %c0_164, %c0_165] : memref<10x8x48xf32, #tpu.memory_space<vmem>>, vector<8x8x16xf32>
    tpu.vector_store %arg16[%c1_163, %c0_164, %c0_165], %208 {strides = array<i32>} : memref<10x8x48xf32, #tpu.memory_space<vmem>>, vector<8x8x16xf32>,
    %c1_166 = arith.constant 1 : index
    %c0_167 = arith.constant 0 : index
    %c16_168 = arith.constant 16 : index
    %210 = vector.load %arg16[%c1_166, %c0_167, %c16_168] : memref<10x8x48xf32, #tpu.memory_space<vmem>>, vector<8x8x16xf32>
    tpu.vector_store %arg16[%c1_166, %c0_167, %c16_168], %202 {strides = array<i32>} : memref<10x8x48xf32, #tpu.memory_space<vmem>>, vector<8x8x16xf32>,
    %c7_i32_169 = arith.constant 7 : i32
    %211 = tpu.dynamic_rotate %202 by %c7_i32_169 dim 1 : vector<8x8x16xf32>, i32 -> vector<8x8x16xf32>
    %212 = tpu.iota {dimensions = array<i32: 1>} : vector<8x8x16xi32>
    %c7_i32_170 = arith.constant 7 : i32
    %213 = vector.broadcast %c7_i32_170 : i32 to vector<8x8x16xi32>
    %214 = arith.cmpi sge, %212, %213 : vector<8x8x16xi32>
    %cst_171 = arith.constant 0.000000e+00 : f32
    %215 = vector.broadcast %cst_171 : f32 to vector<8x8x16xf32>
    %216 = arith.select %214, %215, %211 : vector<8x8x16xi1>, vector<8x8x16xf32>
    %c1_172 = arith.constant 1 : index
    %c0_173 = arith.constant 0 : index
    %c32_174 = arith.constant 32 : index
    %217 = vector.load %arg16[%c1_172, %c0_173, %c32_174] : memref<10x8x48xf32, #tpu.memory_space<vmem>>, vector<8x8x16xf32>
    tpu.vector_store %arg16[%c1_172, %c0_173, %c32_174], %216 {strides = array<i32>} : memref<10x8x48xf32, #tpu.memory_space<vmem>>, vector<8x8x16xf32>,
    %cst_175 = arith.constant 0.000000e+00 : f32
    %218 = vector.broadcast %cst_175 : f32 to vector<64x8xf32>
    %c0_176 = arith.constant 0 : index
    %c0_177 = arith.constant 0 : index
    %c0_178 = arith.constant 0 : index
    %219 = vector.load %arg16[%c0_176, %c0_177, %c0_178] : memref<10x8x48xf32, #tpu.memory_space<vmem>>, vector<8x8x48xf32>
    %220 = vector.shape_cast %219 : vector<8x8x48xf32> to vector<64x48xf32>
    %221 = arith.truncf %220 : vector<64x48xf32> to vector<64x48xbf16>
    %c2_179 = arith.constant 2 : index
    %c0_180 = arith.constant 0 : index
    %c0_181 = arith.constant 0 : index
    %c0_182 = arith.constant 0 : index
    %222 = vector.load %arg9[%c2_179, %c0_180, %c0_181, %c0_182] : memref<4x3x48x8xbf16, #tpu.memory_space<vmem>>, vector<1x1x48x8xbf16>
    %223 = vector.shape_cast %222 : vector<1x1x48x8xbf16> to vector<48x8xbf16>
    %cst_183 = arith.constant dense<0.000000e+00> : vector<64x8xf32>
    %224 = tpu.matmul %221, %223, %cst_183 {dimension_numbers = #tpu.dot_dimension_numbers<[1], [0], [0], [1], [0, 0, 1, 1], [], []>} : vector<64x48xbf16>, vector<48x8xbf16>, vector<64x8xf32> -> vector<64x8xf32>
    %225 = arith.addf %218, %224 : vector<64x8xf32>
    %c1_184 = arith.constant 1 : index
    %c0_185 = arith.constant 0 : index
    %c0_186 = arith.constant 0 : index
    %226 = vector.load %arg16[%c1_184, %c0_185, %c0_186] : memref<10x8x48xf32, #tpu.memory_space<vmem>>, vector<8x8x48xf32>
    %227 = vector.shape_cast %226 : vector<8x8x48xf32> to vector<64x48xf32>
    %228 = arith.truncf %227 : vector<64x48xf32> to vector<64x48xbf16>
    %c2_187 = arith.constant 2 : index
    %c1_188 = arith.constant 1 : index
    %c0_189 = arith.constant 0 : index
    %c0_190 = arith.constant 0 : index
    %229 = vector.load %arg9[%c2_187, %c1_188, %c0_189, %c0_190] : memref<4x3x48x8xbf16, #tpu.memory_space<vmem>>, vector<1x1x48x8xbf16>
    %230 = vector.shape_cast %229 : vector<1x1x48x8xbf16> to vector<48x8xbf16>
    %cst_191 = arith.constant dense<0.000000e+00> : vector<64x8xf32>
    %231 = tpu.matmul %228, %230, %cst_191 {dimension_numbers = #tpu.dot_dimension_numbers<[1], [0], [0], [1], [0, 0, 1, 1], [], []>} : vector<64x48xbf16>, vector<48x8xbf16>, vector<64x8xf32> -> vector<64x8xf32>
    %232 = arith.addf %225, %231 : vector<64x8xf32>
    %c2_192 = arith.constant 2 : index
    %c0_193 = arith.constant 0 : index
    %c0_194 = arith.constant 0 : index
    %233 = vector.load %arg16[%c2_192, %c0_193, %c0_194] : memref<10x8x48xf32, #tpu.memory_space<vmem>>, vector<8x8x48xf32>
    %234 = vector.shape_cast %233 : vector<8x8x48xf32> to vector<64x48xf32>
    %235 = arith.truncf %234 : vector<64x48xf32> to vector<64x48xbf16>
    %c2_195 = arith.constant 2 : index
    %c2_196 = arith.constant 2 : index
    %c0_197 = arith.constant 0 : index
    %c0_198 = arith.constant 0 : index
    %236 = vector.load %arg9[%c2_195, %c2_196, %c0_197, %c0_198] : memref<4x3x48x8xbf16, #tpu.memory_space<vmem>>, vector<1x1x48x8xbf16>
    %237 = vector.shape_cast %236 : vector<1x1x48x8xbf16> to vector<48x8xbf16>
    %cst_199 = arith.constant dense<0.000000e+00> : vector<64x8xf32>
    %238 = tpu.matmul %235, %237, %cst_199 {dimension_numbers = #tpu.dot_dimension_numbers<[1], [0], [0], [1], [0, 0, 1, 1], [], []>} : vector<64x48xbf16>, vector<48x8xbf16>, vector<64x8xf32> -> vector<64x8xf32>
    %239 = arith.addf %232, %238 : vector<64x8xf32>
    %c0_200 = arith.constant 0 : index
    %c32_201 = arith.constant 32 : index
    %240 = vector.load %arg15[%c0_200, %c32_201] : memref<64x128xf32, #tpu.memory_space<vmem>>, vector<64x8xf32>
    tpu.vector_store %arg15[%c0_200, %c32_201], %239 {strides = array<i32>} : memref<64x128xf32, #tpu.memory_space<vmem>>, vector<64x8xf32>,
    %c0_202 = arith.constant 0 : index
    %c0_203 = arith.constant 0 : index
    %241 = vector.load %arg15[%c0_202, %c0_203] : memref<64x128xf32, #tpu.memory_space<vmem>>, vector<64x128xf32>
    %c3 = arith.constant 3 : index
    %c0_204 = arith.constant 0 : index
    %c0_205 = arith.constant 0 : index
    %242 = vector.load %arg4[%c3, %c0_204, %c0_205] : memref<4x1x128xf32, #tpu.memory_space<vmem>>, vector<1x1x128xf32>
    %243 = vector.shape_cast %242 : vector<1x1x128xf32> to vector<1x128xf32>
    %244 = vector.broadcast %243 : vector<1x128xf32> to vector<64x128xf32>
    %245 = arith.mulf %241, %244 : vector<64x128xf32>
    %c3_206 = arith.constant 3 : index
    %c0_207 = arith.constant 0 : index
    %c0_208 = arith.constant 0 : index
    %246 = vector.load %arg5[%c3_206, %c0_207, %c0_208] : memref<4x1x128xf32, #tpu.memory_space<vmem>>, vector<1x1x128xf32>
    %247 = vector.shape_cast %246 : vector<1x1x128xf32> to vector<1x128xf32>
    %248 = vector.broadcast %247 : vector<1x128xf32> to vector<64x128xf32>
    %249 = arith.addf %245, %248 : vector<64x128xf32>
    %cst_209 = arith.constant 0.000000e+00 : f32
    %250 = vector.broadcast %cst_209 : f32 to vector<64x128xf32>
    %251 = arith.maximumf %249, %250 : vector<64x128xf32>
    %252 = arith.truncf %251 : vector<64x128xf32> to vector<64x128xbf16>
    %c3_210 = arith.constant 3 : index
    %c0_211 = arith.constant 0 : index
    %c0_212 = arith.constant 0 : index
    %253 = vector.load %arg6[%c3_210, %c0_211, %c0_212] : memref<4x128x16xbf16, #tpu.memory_space<vmem>>, vector<1x128x16xbf16>
    %254 = vector.shape_cast %253 : vector<1x128x16xbf16> to vector<128x16xbf16>
    %cst_213 = arith.constant dense<0.000000e+00> : vector<64x16xf32>
    %255 = tpu.matmul %252, %254, %cst_213 {dimension_numbers = #tpu.dot_dimension_numbers<[1], [0], [0], [1], [0, 0, 1, 1], [], []>} : vector<64x128xbf16>, vector<128x16xbf16>, vector<64x16xf32> -> vector<64x16xf32>
    %c3_214 = arith.constant 3 : index
    %c0_215 = arith.constant 0 : index
    %c0_216 = arith.constant 0 : index
    %256 = vector.load %arg7[%c3_214, %c0_215, %c0_216] : memref<4x1x16xf32, #tpu.memory_space<vmem>>, vector<1x1x16xf32>
    %257 = vector.shape_cast %256 : vector<1x1x16xf32> to vector<1x16xf32>
    %258 = vector.broadcast %257 : vector<1x16xf32> to vector<64x16xf32>
    %259 = arith.mulf %255, %258 : vector<64x16xf32>
    %c3_217 = arith.constant 3 : index
    %c0_218 = arith.constant 0 : index
    %c0_219 = arith.constant 0 : index
    %260 = vector.load %arg8[%c3_217, %c0_218, %c0_219] : memref<4x1x16xf32, #tpu.memory_space<vmem>>, vector<1x1x16xf32>
    %261 = vector.shape_cast %260 : vector<1x1x16xf32> to vector<1x16xf32>
    %262 = vector.broadcast %261 : vector<1x16xf32> to vector<64x16xf32>
    %263 = arith.addf %259, %262 : vector<64x16xf32>
    %cst_220 = arith.constant 0.000000e+00 : f32
    %264 = vector.broadcast %cst_220 : f32 to vector<64x16xf32>
    %265 = arith.maximumf %263, %264 : vector<64x16xf32>
    %266 = vector.shape_cast %265 : vector<64x16xf32> to vector<8x8x16xf32>
    %c1_i32_221 = arith.constant 1 : i32
    %267 = tpu.dynamic_rotate %266 by %c1_i32_221 dim 1 : vector<8x8x16xf32>, i32 -> vector<8x8x16xf32>
    %268 = tpu.iota {dimensions = array<i32: 1>} : vector<8x8x16xi32>
    %c1_i32_222 = arith.constant 1 : i32
    %269 = vector.broadcast %c1_i32_222 : i32 to vector<8x8x16xi32>
    %270 = arith.cmpi slt, %268, %269 : vector<8x8x16xi32>
    %cst_223 = arith.constant 0.000000e+00 : f32
    %271 = vector.broadcast %cst_223 : f32 to vector<8x8x16xf32>
    %272 = arith.select %270, %271, %267 : vector<8x8x16xi1>, vector<8x8x16xf32>
    %c1_224 = arith.constant 1 : index
    %c0_225 = arith.constant 0 : index
    %c0_226 = arith.constant 0 : index
    %273 = vector.load %arg16[%c1_224, %c0_225, %c0_226] : memref<10x8x48xf32, #tpu.memory_space<vmem>>, vector<8x8x16xf32>
    tpu.vector_store %arg16[%c1_224, %c0_225, %c0_226], %272 {strides = array<i32>} : memref<10x8x48xf32, #tpu.memory_space<vmem>>, vector<8x8x16xf32>,
    %c1_227 = arith.constant 1 : index
    %c0_228 = arith.constant 0 : index
    %c16_229 = arith.constant 16 : index
    %274 = vector.load %arg16[%c1_227, %c0_228, %c16_229] : memref<10x8x48xf32, #tpu.memory_space<vmem>>, vector<8x8x16xf32>
    tpu.vector_store %arg16[%c1_227, %c0_228, %c16_229], %266 {strides = array<i32>} : memref<10x8x48xf32, #tpu.memory_space<vmem>>, vector<8x8x16xf32>,
    %c7_i32_230 = arith.constant 7 : i32
    %275 = tpu.dynamic_rotate %266 by %c7_i32_230 dim 1 : vector<8x8x16xf32>, i32 -> vector<8x8x16xf32>
    %276 = tpu.iota {dimensions = array<i32: 1>} : vector<8x8x16xi32>
    %c7_i32_231 = arith.constant 7 : i32
    %277 = vector.broadcast %c7_i32_231 : i32 to vector<8x8x16xi32>
    %278 = arith.cmpi sge, %276, %277 : vector<8x8x16xi32>
    %cst_232 = arith.constant 0.000000e+00 : f32
    %279 = vector.broadcast %cst_232 : f32 to vector<8x8x16xf32>
    %280 = arith.select %278, %279, %275 : vector<8x8x16xi1>, vector<8x8x16xf32>
    %c1_233 = arith.constant 1 : index
    %c0_234 = arith.constant 0 : index
    %c32_235 = arith.constant 32 : index
    %281 = vector.load %arg16[%c1_233, %c0_234, %c32_235] : memref<10x8x48xf32, #tpu.memory_space<vmem>>, vector<8x8x16xf32>
    tpu.vector_store %arg16[%c1_233, %c0_234, %c32_235], %280 {strides = array<i32>} : memref<10x8x48xf32, #tpu.memory_space<vmem>>, vector<8x8x16xf32>,
    %cst_236 = arith.constant 0.000000e+00 : f32
    %282 = vector.broadcast %cst_236 : f32 to vector<64x8xf32>
    %c0_237 = arith.constant 0 : index
    %c0_238 = arith.constant 0 : index
    %c0_239 = arith.constant 0 : index
    %283 = vector.load %arg16[%c0_237, %c0_238, %c0_239] : memref<10x8x48xf32, #tpu.memory_space<vmem>>, vector<8x8x48xf32>
    %284 = vector.shape_cast %283 : vector<8x8x48xf32> to vector<64x48xf32>
    %285 = arith.truncf %284 : vector<64x48xf32> to vector<64x48xbf16>
    %c3_240 = arith.constant 3 : index
    %c0_241 = arith.constant 0 : index
    %c0_242 = arith.constant 0 : index
    %c0_243 = arith.constant 0 : index
    %286 = vector.load %arg9[%c3_240, %c0_241, %c0_242, %c0_243] : memref<4x3x48x8xbf16, #tpu.memory_space<vmem>>, vector<1x1x48x8xbf16>
    %287 = vector.shape_cast %286 : vector<1x1x48x8xbf16> to vector<48x8xbf16>
    %cst_244 = arith.constant dense<0.000000e+00> : vector<64x8xf32>
    %288 = tpu.matmul %285, %287, %cst_244 {dimension_numbers = #tpu.dot_dimension_numbers<[1], [0], [0], [1], [0, 0, 1, 1], [], []>} : vector<64x48xbf16>, vector<48x8xbf16>, vector<64x8xf32> -> vector<64x8xf32>
    %289 = arith.addf %282, %288 : vector<64x8xf32>
    %c1_245 = arith.constant 1 : index
    %c0_246 = arith.constant 0 : index
    %c0_247 = arith.constant 0 : index
    %290 = vector.load %arg16[%c1_245, %c0_246, %c0_247] : memref<10x8x48xf32, #tpu.memory_space<vmem>>, vector<8x8x48xf32>
    %291 = vector.shape_cast %290 : vector<8x8x48xf32> to vector<64x48xf32>
    %292 = arith.truncf %291 : vector<64x48xf32> to vector<64x48xbf16>
    %c3_248 = arith.constant 3 : index
    %c1_249 = arith.constant 1 : index
    %c0_250 = arith.constant 0 : index
    %c0_251 = arith.constant 0 : index
    %293 = vector.load %arg9[%c3_248, %c1_249, %c0_250, %c0_251] : memref<4x3x48x8xbf16, #tpu.memory_space<vmem>>, vector<1x1x48x8xbf16>
    %294 = vector.shape_cast %293 : vector<1x1x48x8xbf16> to vector<48x8xbf16>
    %cst_252 = arith.constant dense<0.000000e+00> : vector<64x8xf32>
    %295 = tpu.matmul %292, %294, %cst_252 {dimension_numbers = #tpu.dot_dimension_numbers<[1], [0], [0], [1], [0, 0, 1, 1], [], []>} : vector<64x48xbf16>, vector<48x8xbf16>, vector<64x8xf32> -> vector<64x8xf32>
    %296 = arith.addf %289, %295 : vector<64x8xf32>
    %c2_253 = arith.constant 2 : index
    %c0_254 = arith.constant 0 : index
    %c0_255 = arith.constant 0 : index
    %297 = vector.load %arg16[%c2_253, %c0_254, %c0_255] : memref<10x8x48xf32, #tpu.memory_space<vmem>>, vector<8x8x48xf32>
    %298 = vector.shape_cast %297 : vector<8x8x48xf32> to vector<64x48xf32>
    %299 = arith.truncf %298 : vector<64x48xf32> to vector<64x48xbf16>
    %c3_256 = arith.constant 3 : index
    %c2_257 = arith.constant 2 : index
    %c0_258 = arith.constant 0 : index
    %c0_259 = arith.constant 0 : index
    %300 = vector.load %arg9[%c3_256, %c2_257, %c0_258, %c0_259] : memref<4x3x48x8xbf16, #tpu.memory_space<vmem>>, vector<1x1x48x8xbf16>
    %301 = vector.shape_cast %300 : vector<1x1x48x8xbf16> to vector<48x8xbf16>
    %cst_260 = arith.constant dense<0.000000e+00> : vector<64x8xf32>
    %302 = tpu.matmul %299, %301, %cst_260 {dimension_numbers = #tpu.dot_dimension_numbers<[1], [0], [0], [1], [0, 0, 1, 1], [], []>} : vector<64x48xbf16>, vector<48x8xbf16>, vector<64x8xf32> -> vector<64x8xf32>
    %303 = arith.addf %296, %302 : vector<64x8xf32>
    %c0_261 = arith.constant 0 : index
    %c40 = arith.constant 40 : index
    %304 = vector.load %arg15[%c0_261, %c40] : memref<64x128xf32, #tpu.memory_space<vmem>>, vector<64x8xf32>
    tpu.vector_store %arg15[%c0_261, %c40], %303 {strides = array<i32>} : memref<64x128xf32, #tpu.memory_space<vmem>>, vector<64x8xf32>,
    %c0_262 = arith.constant 0 : index
    %c0_263 = arith.constant 0 : index
    %305 = vector.load %arg15[%c0_262, %c0_263] : memref<64x128xf32, #tpu.memory_space<vmem>>, vector<64x128xf32>
    %c0_264 = arith.constant 0 : index
    %c0_265 = arith.constant 0 : index
    %306 = vector.load %arg10[%c0_264, %c0_265] : memref<1x128xf32, #tpu.memory_space<vmem>>, vector<1x128xf32>
    %307 = vector.broadcast %306 : vector<1x128xf32> to vector<64x128xf32>
    %308 = arith.mulf %305, %307 : vector<64x128xf32>
    %c0_266 = arith.constant 0 : index
    %c0_267 = arith.constant 0 : index
    %309 = vector.load %arg11[%c0_266, %c0_267] : memref<1x128xf32, #tpu.memory_space<vmem>>, vector<1x128xf32>
    %310 = vector.broadcast %309 : vector<1x128xf32> to vector<64x128xf32>
    %311 = arith.addf %308, %310 : vector<64x128xf32>
    %cst_268 = arith.constant 0.000000e+00 : f32
    %312 = vector.broadcast %cst_268 : f32 to vector<64x128xf32>
    %313 = arith.maximumf %311, %312 : vector<64x128xf32>
    %314 = arith.truncf %313 : vector<64x128xf32> to vector<64x128xbf16>
    %c0_269 = arith.constant 0 : index
    %c0_270 = arith.constant 0 : index
    %315 = vector.load %arg12[%c0_269, %c0_270] : memref<128x10xbf16, #tpu.memory_space<vmem>>, vector<128x10xbf16>
    %cst_271 = arith.constant dense<0.000000e+00> : vector<64x10xf32>
    %316 = tpu.matmul %314, %315, %cst_271 {dimension_numbers = #tpu.dot_dimension_numbers<[1], [0], [0], [1], [0, 0, 1, 1], [], []>} : vector<64x128xbf16>, vector<128x10xbf16>, vector<64x10xf32> -> vector<64x10xf32>
    %cst_272 = arith.constant dense<0.000000e+00> : vector<10xf32>
    %317 = vector.multi_reduction <add>, %316, %cst_272 [0] : vector<64x10xf32> to vector<10xf32>
    %318 = vector.shape_cast %317 : vector<10xf32> to vector<1x10xf32>
    %cst_273 = arith.constant 6.400000e+01 : f32
    %319 = vector.broadcast %cst_273 : f32 to vector<1x10xf32>
    %320 = arith.divf %318, %319 : vector<1x10xf32>
    %c0_274 = arith.constant 0 : index
    %c0_275 = arith.constant 0 : index
    %321 = vector.load %arg13[%c0_274, %c0_275] : memref<1x10xf32, #tpu.memory_space<vmem>>, vector<1x10xf32>
    %322 = arith.addf %320, %321 : vector<1x10xf32>
    %c0_276 = arith.constant 0 : index
    %c0_277 = arith.constant 0 : index
    %c0_278 = arith.constant 0 : index
    %323 = vector.load %arg14[%c0_276, %c0_277, %c0_278] : memref<1x1x10xf32, #tpu.memory_space<vmem>>, vector<1x1x10xf32>
    %324 = vector.shape_cast %323 : vector<1x1x10xf32> to vector<1x10xf32>
    %325 = vector.shape_cast %322 : vector<1x10xf32> to vector<1x1x10xf32>
    tpu.vector_store %arg14[%c0_276, %c0_277, %c0_278], %325 {strides = array<i32>} : memref<1x1x10xf32, #tpu.memory_space<vmem>>, vector<1x1x10xf32>,
    return
  }
  func.func @transform_0(%arg0: i32) -> (i32, i32, i32) {
    %c0_i32 = arith.constant 0 : i32
    %c0_i32_0 = arith.constant 0 : i32
    %c0_i32_1 = arith.constant 0 : i32
    return %arg0, %c0_i32, %c0_i32_0 : i32, i32, i32
  }
  func.func @transform_1(%arg0: i32) -> (i32, i32) {
    %c0_i32 = arith.constant 0 : i32
    %c0_i32_0 = arith.constant 0 : i32
    %c0_i32_1 = arith.constant 0 : i32
    return %c0_i32, %c0_i32_0 : i32, i32
  }
  func.func @transform_2(%arg0: i32) -> (i32, i32) {
    %c0_i32 = arith.constant 0 : i32
    %c0_i32_0 = arith.constant 0 : i32
    %c0_i32_1 = arith.constant 0 : i32
    return %c0_i32, %c0_i32_0 : i32, i32
  }
  func.func @transform_3(%arg0: i32) -> (i32, i32, i32) {
    %c0_i32 = arith.constant 0 : i32
    %c0_i32_0 = arith.constant 0 : i32
    %c0_i32_1 = arith.constant 0 : i32
    %c0_i32_2 = arith.constant 0 : i32
    return %c0_i32, %c0_i32_0, %c0_i32_1 : i32, i32, i32
  }
  func.func @transform_4(%arg0: i32) -> (i32, i32, i32) {
    %c0_i32 = arith.constant 0 : i32
    %c0_i32_0 = arith.constant 0 : i32
    %c0_i32_1 = arith.constant 0 : i32
    %c0_i32_2 = arith.constant 0 : i32
    return %c0_i32, %c0_i32_0, %c0_i32_1 : i32, i32, i32
  }
  func.func @transform_5(%arg0: i32) -> (i32, i32, i32) {
    %c0_i32 = arith.constant 0 : i32
    %c0_i32_0 = arith.constant 0 : i32
    %c0_i32_1 = arith.constant 0 : i32
    %c0_i32_2 = arith.constant 0 : i32
    return %c0_i32, %c0_i32_0, %c0_i32_1 : i32, i32, i32
  }
  func.func @transform_6(%arg0: i32) -> (i32, i32, i32) {
    %c0_i32 = arith.constant 0 : i32
    %c0_i32_0 = arith.constant 0 : i32
    %c0_i32_1 = arith.constant 0 : i32
    %c0_i32_2 = arith.constant 0 : i32
    return %c0_i32, %c0_i32_0, %c0_i32_1 : i32, i32, i32
  }
  func.func @transform_7(%arg0: i32) -> (i32, i32, i32) {
    %c0_i32 = arith.constant 0 : i32
    %c0_i32_0 = arith.constant 0 : i32
    %c0_i32_1 = arith.constant 0 : i32
    %c0_i32_2 = arith.constant 0 : i32
    return %c0_i32, %c0_i32_0, %c0_i32_1 : i32, i32, i32
  }
  func.func @transform_8(%arg0: i32) -> (i32, i32, i32, i32) {
    %c0_i32 = arith.constant 0 : i32
    %c0_i32_0 = arith.constant 0 : i32
    %c0_i32_1 = arith.constant 0 : i32
    %c0_i32_2 = arith.constant 0 : i32
    %c0_i32_3 = arith.constant 0 : i32
    return %c0_i32, %c0_i32_0, %c0_i32_1, %c0_i32_2 : i32, i32, i32, i32
  }
  func.func @transform_9(%arg0: i32) -> (i32, i32) {
    %c0_i32 = arith.constant 0 : i32
    %c0_i32_0 = arith.constant 0 : i32
    %c0_i32_1 = arith.constant 0 : i32
    return %c0_i32, %c0_i32_0 : i32, i32
  }
  func.func @transform_10(%arg0: i32) -> (i32, i32) {
    %c0_i32 = arith.constant 0 : i32
    %c0_i32_0 = arith.constant 0 : i32
    %c0_i32_1 = arith.constant 0 : i32
    return %c0_i32, %c0_i32_0 : i32, i32
  }
  func.func @transform_11(%arg0: i32) -> (i32, i32) {
    %c0_i32 = arith.constant 0 : i32
    %c0_i32_0 = arith.constant 0 : i32
    %c0_i32_1 = arith.constant 0 : i32
    return %c0_i32, %c0_i32_0 : i32, i32
  }
  func.func @transform_12(%arg0: i32) -> (i32, i32) {
    %c0_i32 = arith.constant 0 : i32
    %c0_i32_0 = arith.constant 0 : i32
    %c0_i32_1 = arith.constant 0 : i32
    return %c0_i32, %c0_i32_0 : i32, i32
  }
  func.func @transform_13(%arg0: i32) -> (i32, i32, i32) {
    %c0_i32 = arith.constant 0 : i32
    %c0_i32_0 = arith.constant 0 : i32
    %c0_i32_1 = arith.constant 0 : i32
    return %arg0, %c0_i32, %c0_i32_0 : i32, i32, i32
  }
}

</mosaic_0001>

<llo_original>
// kernel: densenet_forward.1
$region0: #{densenet_forward.1}
  #allocation0 [shape = 'u32[]', space=smem, size = 0x4, offset = 0x4, fixed_abs, tag = 'smem constant byte address 0x4 - core index']
  #allocation1 [shape = 'u32[144,128]{1,0:T(1,128)}', space=vmem, size = 0x12000, scoped, tag = 'internal scratch']
  #allocation2 [shape = 'f32[64,128]{1,0:T(8,128)}', space=vmem, size = 0x8000, scoped, tag = 'scratch operand']
  #allocation3 [shape = 'f32[10,8,48]{2,1,0:T(8,128)}', space=vmem, size = 0xa000, scoped, tag = 'scratch operand']
  %s0 = inlined_call_operand.vmem [shape: bf16[2,256,147], index: 0, kind: input, shape index: {}]
  %s1 = inlined_call_operand.vmem [shape: bf16[147,16], index: 1, kind: input, shape index: {}]
  %s2 = inlined_call_operand.vmem [shape: f32[1,16], index: 2, kind: input, shape index: {}]
  %s3 = inlined_call_operand.vmem [shape: f32[4,1,128], index: 3, kind: input, shape index: {}]
  %s4 = inlined_call_operand.vmem [shape: f32[4,1,128], index: 4, kind: input, shape index: {}]
  %s5 = inlined_call_operand.vmem [shape: bf16[4,128,16], index: 5, kind: input, shape index: {}]
  %s6 = inlined_call_operand.vmem [shape: f32[4,1,16], index: 6, kind: input, shape index: {}]
  %s7 = inlined_call_operand.vmem [shape: f32[4,1,16], index: 7, kind: input, shape index: {}]
  %s8 = inlined_call_operand.vmem [shape: bf16[4,3,48,8], index: 8, kind: input, shape index: {}]
  %s9 = inlined_call_operand.vmem [shape: f32[1,128], index: 9, kind: input, shape index: {}]
  %s10 = inlined_call_operand.vmem [shape: f32[1,128], index: 10, kind: input, shape index: {}]
  %s11 = inlined_call_operand.vmem [shape: bf16[128,10], index: 11, kind: input, shape index: {}]
  %s12 = inlined_call_operand.vmem [shape: f32[1,10], index: 12, kind: input, shape index: {}]
  %s13 = inlined_call_operand.hbm [shape: f32[2,1,10], index: 13, kind: output, shape index: {}]
  %s14 = sld [smem:[#allocation0]]
  $region85: #{densenet_forward.1} parent=0
    _
  %s16 = ssub.s32 1, %s14
  %s17 = scalar_select 0, %s16, %s14
  $region1: #{densenet_forward.1} parent=0
    #allocation4 [shape = 'u8[1024]{0}', space=vmem, size = 0x400, scoped, tag = 'output window, operand 0']
    #allocation5 [shape = 's32[2]{0}', space=sflag, size = 0x8, scoped, tag = 'scoped memory for densenet_forward.1']
    %18 = vsyncpa [#allocation5], 0
    %s19 = scalar_lea.sflag [#allocation5], 1
    %20 = vsyncpa %s19, 0
    loop: start=0, step=1, limit=4
    $region2: #{densenet_forward.1} parent=1 // loop_pre_header
      _
    $region3: #{densenet_forward.1} parent=1 // loop_header
      %s22 = sphi 0, %s26
      %p23 = scmp.ge.s32.totalorder %s22, 4
      %s32 = sphi 0, %s34
      %s35 = sphi 0, %s32
      %s36 = sphi 0, %s35
      %s52 = sphi 0, %s36
      %s56 = sphi 0, %s56
      %s58 = sphi 0, %s56
      %s59 = sphi 0, %s58
      %s73 = sphi 0, %s59
      %s77 = sphi 0, %s77
      %s79 = sphi 0, %s77
      %s80 = sphi 0, %s79
      %s94 = sphi 0, %s80
      %s98 = sphi 0, %s98
      %s100 = sphi 0, %s98
      %s101 = sphi 0, %s100
      %s115 = sphi 0, %s101
      %s119 = sphi 0, %s119
      %s121 = sphi 0, %s119
      %s122 = sphi 0, %s121
      %s136 = sphi 0, %s122
      %s140 = sphi 0, %s140
      %s142 = sphi 0, %s140
      %s143 = sphi 0, %s142
      %s157 = sphi 0, %s143
      %s161 = sphi 0, %s161
      %s163 = sphi 0, %s161
      %s164 = sphi 0, %s163
      %s178 = sphi 0, %s164
      %s182 = sphi 0, %s182
      %s184 = sphi 0, %s182
      %s185 = sphi 0, %s184
      %s199 = sphi 0, %s185
      %s203 = sphi 0, %s203
      %s205 = sphi 0, %s203
      %s206 = sphi 0, %s205
      %s220 = sphi 0, %s206
      %s224 = sphi 0, %s224
      %s226 = sphi 0, %s224
      %s227 = sphi 0, %s226
      %s241 = sphi 0, %s227
      %s245 = sphi 0, %s245
      %s247 = sphi 0, %s245
      %s248 = sphi 0, %s247
      %s262 = sphi 0, %s248
      %s266 = sphi 0, %s266
      %s268 = sphi 0, %s266
      %s269 = sphi 0, %s268
      %s283 = sphi 0, %s269
      %s287 = sphi 0, %s287
      %s289 = sphi 0, %s287
      %s290 = sphi 0, %s289
      %s304 = sphi 0, %s290
      %s310 = sphi 0, %s312
      %s313 = sphi 0, %s310
      %s314 = sphi 0, %s313
      %s330 = sphi 0, %s314
    $region4: #{densenet_forward.1} parent=1 // loop_header_branch
      %25 = sbr.rel (%p23) target = $region8
    $region5: #{densenet_forward.1} parent=1 // loop_body
      %s27 = ssub.s32 %s22, 1
      %s28 = ssub.s32 %s22, 2
      %s29 = sadd.s32 %s22, 1
      %s30 = ssub.s32 %s22, %s29
      %p31 = scmp.eq.s32.totalorder %s30, 0
      %s33 = sadd.s32 %s32, 1
      %s34 = scalar_select %p31, %s32, %s33
      %p37 = pneg %p31
      %p38 = scmp.eq.s32.totalorder %s22, 1
      %p39 = por %p37, %p38
      %p40 = scmp.ne.s32.totalorder %s32, %s35
      %p41 = scmp.eq.s32.totalorder %s22, 0
      %p42 = por %p40, %p41
      %p43 = scmp.ne.s32.totalorder %s32, %s35
      %p44 = scmp.eq.s32.totalorder %s27, 1
      %p45 = por %p43, %p44
      %p46 = scmp.ne.s32.totalorder %s35, %s36
      %p47 = scmp.eq.s32.totalorder %s27, 0
      %p48 = por %p46, %p47
      %p49 = scmp.ne.s32.totalorder %s35, %s36
      %p50 = scmp.eq.s32.totalorder %s28, 1
      %p51 = por %p49, %p50
      %p53 = scmp.ne.s32.totalorder %s36, %s52
      %p54 = scmp.eq.s32.totalorder %s28, 0
      %p55 = por %p53, %p54
      %s57 = sadd.s32 %s56, 1
      %p60 = scmp.eq.s32.totalorder %s22, 1
      %p61 = scmp.ne.s32.totalorder %s56, %s58
      %p62 = scmp.eq.s32.totalorder %s22, 0
      %p63 = por %p61, %p62
      %p64 = scmp.ne.s32.totalorder %s56, %s58
      %p65 = scmp.eq.s32.totalorder %s27, 1
      %p66 = por %p64, %p65
      %p67 = scmp.ne.s32.totalorder %s58, %s59
      %p68 = scmp.eq.s32.totalorder %s27, 0
      %p69 = por %p67, %p68
      %p70 = scmp.ne.s32.totalorder %s58, %s59
      %p71 = scmp.eq.s32.totalorder %s28, 1
      %p72 = por %p70, %p71
      %p74 = scmp.ne.s32.totalorder %s59, %s73
      %p75 = scmp.eq.s32.totalorder %s28, 0
      %p76 = por %p74, %p75
      %s78 = sadd.s32 %s77, 1
      %p81 = scmp.eq.s32.totalorder %s22, 1
      %p82 = scmp.ne.s32.totalorder %s77, %s79
      %p83 = scmp.eq.s32.totalorder %s22, 0
      %p84 = por %p82, %p83
      %p85 = scmp.ne.s32.totalorder %s77, %s79
      %p86 = scmp.eq.s32.totalorder %s27, 1
      %p87 = por %p85, %p86
      %p88 = scmp.ne.s32.totalorder %s79, %s80
      %p89 = scmp.eq.s32.totalorder %s27, 0
      %p90 = por %p88, %p89
      %p91 = scmp.ne.s32.totalorder %s79, %s80
      %p92 = scmp.eq.s32.totalorder %s28, 1
      %p93 = por %p91, %p92
      %p95 = scmp.ne.s32.totalorder %s80, %s94
      %p96 = scmp.eq.s32.totalorder %s28, 0
      %p97 = por %p95, %p96
      %s99 = sadd.s32 %s98, 1
      %p102 = scmp.eq.s32.totalorder %s22, 1
      %p103 = scmp.ne.s32.totalorder %s98, %s100
      %p104 = scmp.eq.s32.totalorder %s22, 0
      %p105 = por %p103, %p104
      %p106 = scmp.ne.s32.totalorder %s98, %s100
      %p107 = scmp.eq.s32.totalorder %s27, 1
      %p108 = por %p106, %p107
      %p109 = scmp.ne.s32.totalorder %s100, %s101
      %p110 = scmp.eq.s32.totalorder %s27, 0
      %p111 = por %p109, %p110
      %p112 = scmp.ne.s32.totalorder %s100, %s101
      %p113 = scmp.eq.s32.totalorder %s28, 1
      %p114 = por %p112, %p113
      %p116 = scmp.ne.s32.totalorder %s101, %s115
      %p117 = scmp.eq.s32.totalorder %s28, 0
      %p118 = por %p116, %p117
      %s120 = sadd.s32 %s119, 1
      %p123 = scmp.eq.s32.totalorder %s22, 1
      %p124 = scmp.ne.s32.totalorder %s119, %s121
      %p125 = scmp.eq.s32.totalorder %s22, 0
      %p126 = por %p124, %p125
      %p127 = scmp.ne.s32.totalorder %s119, %s121
      %p128 = scmp.eq.s32.totalorder %s27, 1
      %p129 = por %p127, %p128
      %p130 = scmp.ne.s32.totalorder %s121, %s122
      %p131 = scmp.eq.s32.totalorder %s27, 0
      %p132 = por %p130, %p131
      %p133 = scmp.ne.s32.totalorder %s121, %s122
      %p134 = scmp.eq.s32.totalorder %s28, 1
      %p135 = por %p133, %p134
      %p137 = scmp.ne.s32.totalorder %s122, %s136
      %p138 = scmp.eq.s32.totalorder %s28, 0
      %p139 = por %p137, %p138
      %s141 = sadd.s32 %s140, 1
      %p144 = scmp.eq.s32.totalorder %s22, 1
      %p145 = scmp.ne.s32.totalorder %s140, %s142
      %p146 = scmp.eq.s32.totalorder %s22, 0
      %p147 = por %p145, %p146
      %p148 = scmp.ne.s32.totalorder %s140, %s142
      %p149 = scmp.eq.s32.totalorder %s27, 1
      %p150 = por %p148, %p149
      %p151 = scmp.ne.s32.totalorder %s142, %s143
      %p152 = scmp.eq.s32.totalorder %s27, 0
      %p153 = por %p151, %p152
      %p154 = scmp.ne.s32.totalorder %s142, %s143
      %p155 = scmp.eq.s32.totalorder %s28, 1
      %p156 = por %p154, %p155
      %p158 = scmp.ne.s32.totalorder %s143, %s157
      %p159 = scmp.eq.s32.totalorder %s28, 0
      %p160 = por %p158, %p159
      %s162 = sadd.s32 %s161, 1
      %p165 = scmp.eq.s32.totalorder %s22, 1
      %p166 = scmp.ne.s32.totalorder %s161, %s163
      %p167 = scmp.eq.s32.totalorder %s22, 0
      %p168 = por %p166, %p167
      %p169 = scmp.ne.s32.totalorder %s161, %s163
      %p170 = scmp.eq.s32.totalorder %s27, 1
      %p171 = por %p169, %p170
      %p172 = scmp.ne.s32.totalorder %s163, %s164
      %p173 = scmp.eq.s32.totalorder %s27, 0
      %p174 = por %p172, %p173
      %p175 = scmp.ne.s32.totalorder %s163, %s164
      %p176 = scmp.eq.s32.totalorder %s28, 1
      %p177 = por %p175, %p176
      %p179 = scmp.ne.s32.totalorder %s164, %s178
      %p180 = scmp.eq.s32.totalorder %s28, 0
      %p181 = por %p179, %p180
      %s183 = sadd.s32 %s182, 1
      %p186 = scmp.eq.s32.totalorder %s22, 1
      %p187 = scmp.ne.s32.totalorder %s182, %s184
      %p188 = scmp.eq.s32.totalorder %s22, 0
      %p189 = por %p187, %p188
      %p190 = scmp.ne.s32.totalorder %s182, %s184
      %p191 = scmp.eq.s32.totalorder %s27, 1
      %p192 = por %p190, %p191
      %p193 = scmp.ne.s32.totalorder %s184, %s185
      %p194 = scmp.eq.s32.totalorder %s27, 0
      %p195 = por %p193, %p194
      %p196 = scmp.ne.s32.totalorder %s184, %s185
      %p197 = scmp.eq.s32.totalorder %s28, 1
      %p198 = por %p196, %p197
      %p200 = scmp.ne.s32.totalorder %s185, %s199
      %p201 = scmp.eq.s32.totalorder %s28, 0
      %p202 = por %p200, %p201
      %s204 = sadd.s32 %s203, 1
      %p207 = scmp.eq.s32.totalorder %s22, 1
      %p208 = scmp.ne.s32.totalorder %s203, %s205
      %p209 = scmp.eq.s32.totalorder %s22, 0
      %p210 = por %p208, %p209
      %p211 = scmp.ne.s32.totalorder %s203, %s205
      %p212 = scmp.eq.s32.totalorder %s27, 1
      %p213 = por %p211, %p212
      %p214 = scmp.ne.s32.totalorder %s205, %s206
      %p215 = scmp.eq.s32.totalorder %s27, 0
      %p216 = por %p214, %p215
      %p217 = scmp.ne.s32.totalorder %s205, %s206
      %p218 = scmp.eq.s32.totalorder %s28, 1
      %p219 = por %p217, %p218
      %p221 = scmp.ne.s32.totalorder %s206, %s220
      %p222 = scmp.eq.s32.totalorder %s28, 0
      %p223 = por %p221, %p222
      %s225 = sadd.s32 %s224, 1
      %p228 = scmp.eq.s32.totalorder %s22, 1
      %p229 = scmp.ne.s32.totalorder %s224, %s226
      %p230 = scmp.eq.s32.totalorder %s22, 0
      %p231 = por %p229, %p230
      %p232 = scmp.ne.s32.totalorder %s224, %s226
      %p233 = scmp.eq.s32.totalorder %s27, 1
      %p234 = por %p232, %p233
      %p235 = scmp.ne.s32.totalorder %s226, %s227
      %p236 = scmp.eq.s32.totalorder %s27, 0
      %p237 = por %p235, %p236
      %p238 = scmp.ne.s32.totalorder %s226, %s227
      %p239 = scmp.eq.s32.totalorder %s28, 1
      %p240 = por %p238, %p239
      %p242 = scmp.ne.s32.totalorder %s227, %s241
      %p243 = scmp.eq.s32.totalorder %s28, 0
      %p244 = por %p242, %p243
      %s246 = sadd.s32 %s245, 1
      %p249 = scmp.eq.s32.totalorder %s22, 1
      %p250 = scmp.ne.s32.totalorder %s245, %s247
      %p251 = scmp.eq.s32.totalorder %s22, 0
      %p252 = por %p250, %p251
      %p253 = scmp.ne.s32.totalorder %s245, %s247
      %p254 = scmp.eq.s32.totalorder %s27, 1
      %p255 = por %p253, %p254
      %p256 = scmp.ne.s32.totalorder %s247, %s248
      %p257 = scmp.eq.s32.totalorder %s27, 0
      %p258 = por %p256, %p257
      %p259 = scmp.ne.s32.totalorder %s247, %s248
      %p260 = scmp.eq.s32.totalorder %s28, 1
      %p261 = por %p259, %p260
      %p263 = scmp.ne.s32.totalorder %s248, %s262
      %p264 = scmp.eq.s32.totalorder %s28, 0
      %p265 = por %p263, %p264
      %s267 = sadd.s32 %s266, 1
      %p270 = scmp.eq.s32.totalorder %s22, 1
      %p271 = scmp.ne.s32.totalorder %s266, %s268
      %p272 = scmp.eq.s32.totalorder %s22, 0
      %p273 = por %p271, %p272
      %p274 = scmp.ne.s32.totalorder %s266, %s268
      %p275 = scmp.eq.s32.totalorder %s27, 1
      %p276 = por %p274, %p275
      %p277 = scmp.ne.s32.totalorder %s268, %s269
      %p278 = scmp.eq.s32.totalorder %s27, 0
      %p279 = por %p277, %p278
      %p280 = scmp.ne.s32.totalorder %s268, %s269
      %p281 = scmp.eq.s32.totalorder %s28, 1
      %p282 = por %p280, %p281
      %p284 = scmp.ne.s32.totalorder %s269, %s283
      %p285 = scmp.eq.s32.totalorder %s28, 0
      %p286 = por %p284, %p285
      %s288 = sadd.s32 %s287, 1
      %p291 = scmp.eq.s32.totalorder %s22, 1
      %p292 = scmp.ne.s32.totalorder %s287, %s289
      %p293 = scmp.eq.s32.totalorder %s22, 0
      %p294 = por %p292, %p293
      %p295 = scmp.ne.s32.totalorder %s287, %s289
      %p296 = scmp.eq.s32.totalorder %s27, 1
      %p297 = por %p295, %p296
      %p298 = scmp.ne.s32.totalorder %s289, %s290
      %p299 = scmp.eq.s32.totalorder %s27, 0
      %p300 = por %p298, %p299
      %p301 = scmp.ne.s32.totalorder %s289, %s290
      %p302 = scmp.eq.s32.totalorder %s28, 1
      %p303 = por %p301, %p302
      %p305 = scmp.ne.s32.totalorder %s290, %s304
      %p306 = scmp.eq.s32.totalorder %s28, 0
      %p307 = por %p305, %p306
      %s308 = ssub.s32 %s22, %s29
      %p309 = scmp.eq.s32.totalorder %s308, 0
      %s311 = sadd.s32 %s310, 1
      %s312 = scalar_select %p309, %s310, %s311
      %p315 = pneg %p309
      %p316 = scmp.eq.s32.totalorder %s22, 1
      %p317 = por %p315, %p316
      %p318 = scmp.ne.s32.totalorder %s310, %s313
      %p319 = scmp.eq.s32.totalorder %s22, 0
      %p320 = por %p318, %p319
      %p321 = scmp.ne.s32.totalorder %s310, %s313
      %p322 = scmp.eq.s32.totalorder %s27, 1
      %p323 = por %p321, %p322
      %p324 = scmp.ne.s32.totalorder %s313, %s314
      %p325 = scmp.eq.s32.totalorder %s27, 0
      %p326 = por %p324, %p325
      %p327 = scmp.ne.s32.totalorder %s313, %s314
      %p328 = scmp.eq.s32.totalorder %s28, 1
      %p329 = por %p327, %p328
      %p331 = scmp.ne.s32.totalorder %s314, %s330
      %p332 = scmp.eq.s32.totalorder %s28, 0
      %p333 = por %p331, %p332
      %p334 = scmp.le.s32.totalorder 1, %s22
      %p335 = scmp.lt.s32.totalorder %s22, 3
      %p336 = pnand %p334, %p335
      %p337 = pneg %p336
      // Predicated region
      $region9: #{densenet_forward.1} parent=5 // pred_check
        _
      $region10: #{densenet_forward.1} parent=5 // pred_check_branch
        %339 = sbr.rel (%p336) target = $region12
      $region11: #{densenet_forward.1} parent=5 // pred_region
        %s340 = ssub.s32 %s22, 1
        // Predicated region
        $region13: #{densenet_forward.1} parent=11 // pred_check
          %p341 = pneg %p69
        $region14: #{densenet_forward.1} parent=11 // pred_check_branch
          %343 = sbr.rel (%p341) target = $region16
        $region15: #{densenet_forward.1} parent=11 // pred_region
          _
        $region16: #{densenet_forward.1} parent=11 // pred_fallthru
          _
        // Predicated region
        $region17: #{densenet_forward.1} parent=11 // pred_check
          %p344 = pneg %p90
        $region18: #{densenet_forward.1} parent=11 // pred_check_branch
          %346 = sbr.rel (%p344) target = $region20
        $region19: #{densenet_forward.1} parent=11 // pred_region
          _
        $region20: #{densenet_forward.1} parent=11 // pred_fallthru
          _
        // Predicated region
        $region21: #{densenet_forward.1} parent=11 // pred_check
          %p347 = pneg %p111
        $region22: #{densenet_forward.1} parent=11 // pred_check_branch
          %349 = sbr.rel (%p347) target = $region24
        $region23: #{densenet_forward.1} parent=11 // pred_region
          _
        $region24: #{densenet_forward.1} parent=11 // pred_fallthru
          _
        // Predicated region
        $region25: #{densenet_forward.1} parent=11 // pred_check
          %p350 = pneg %p132
        $region26: #{densenet_forward.1} parent=11 // pred_check_branch
          %352 = sbr.rel (%p350) target = $region28
        $region27: #{densenet_forward.1} parent=11 // pred_region
          _
        $region28: #{densenet_forward.1} parent=11 // pred_fallthru
          _
        // Predicated region
        $region29: #{densenet_forward.1} parent=11 // pred_check
          %p353 = pneg %p153
        $region30: #{densenet_forward.1} parent=11 // pred_check_branch
          %355 = sbr.rel (%p353) target = $region32
        $region31: #{densenet_forward.1} parent=11 // pred_region
          _
        $region32: #{densenet_forward.1} parent=11 // pred_fallthru
          _
        // Predicated region
        $region33: #{densenet_forward.1} parent=11 // pred_check
          %p356 = pneg %p174
        $region34: #{densenet_forward.1} parent=11 // pred_check_branch
          %358 = sbr.rel (%p356) target = $region36
        $region35: #{densenet_forward.1} parent=11 // pred_region
          _
        $region36: #{densenet_forward.1} parent=11 // pred_fallthru
          _
        // Predicated region
        $region37: #{densenet_forward.1} parent=11 // pred_check
          %p359 = pneg %p195
        $region38: #{densenet_forward.1} parent=11 // pred_check_branch
          %361 = sbr.rel (%p359) target = $region40
        $region39: #{densenet_forward.1} parent=11 // pred_region
          _
        $region40: #{densenet_forward.1} parent=11 // pred_fallthru
          _
        // Predicated region
        $region41: #{densenet_forward.1} parent=11 // pred_check
          %p362 = pneg %p216
        $region42: #{densenet_forward.1} parent=11 // pred_check_branch
          %364 = sbr.rel (%p362) target = $region44
        $region43: #{densenet_forward.1} parent=11 // pred_region
          _
        $region44: #{densenet_forward.1} parent=11 // pred_fallthru
          _
        // Predicated region
        $region45: #{densenet_forward.1} parent=11 // pred_check
          %p365 = pneg %p237
        $region46: #{densenet_forward.1} parent=11 // pred_check_branch
          %367 = sbr.rel (%p365) target = $region48
        $region47: #{densenet_forward.1} parent=11 // pred_region
          _
        $region48: #{densenet_forward.1} parent=11 // pred_fallthru
          _
        // Predicated region
        $region49: #{densenet_forward.1} parent=11 // pred_check
          %p368 = pneg %p258
        $region50: #{densenet_forward.1} parent=11 // pred_check_branch
          %370 = sbr.rel (%p368) target = $region52
        $region51: #{densenet_forward.1} parent=11 // pred_region
          _
        $region52: #{densenet_forward.1} parent=11 // pred_fallthru
          _
        // Predicated region
        $region53: #{densenet_forward.1} parent=11 // pred_check
          %p371 = pneg %p279
        $region54: #{densenet_forward.1} parent=11 // pred_check_branch
          %373 = sbr.rel (%p371) target = $region56
        $region55: #{densenet_forward.1} parent=11 // pred_region
          _
        $region56: #{densenet_forward.1} parent=11 // pred_fallthru
          _
        // Predicated region
        $region57: #{densenet_forward.1} parent=11 // pred_check
          %p374 = pneg %p300
        $region58: #{densenet_forward.1} parent=11 // pred_check_branch
          %376 = sbr.rel (%p374) target = $region60
        $region59: #{densenet_forward.1} parent=11 // pred_region
          _
        $region60: #{densenet_forward.1} parent=11 // pred_fallthru
          _
      $region12: #{densenet_forward.1} parent=5 // pred_fallthru
        _
      %p377 = scmp.lt.s32.totalorder %s22, 2
      // Predicated region
      $region61: #{densenet_forward.1} parent=5 // pred_check
        %p378 = pneg %p377
      $region62: #{densenet_forward.1} parent=5 // pred_check_branch
        %380 = sbr.rel (%p378) target = $region64
      $region63: #{densenet_forward.1} parent=5 // pred_region
        // Predicated region
        $region65: #{densenet_forward.1} parent=63 // pred_check
          %p381 = pneg %p42
        $region66: #{densenet_forward.1} parent=63 // pred_check_branch
          %383 = sbr.rel (%p381) target = $region68
        $region67: #{densenet_forward.1} parent=63 // pred_region
          %p384 = scmp.lt.s32.totalorder %s22, 1
          %s385 = scalar_select %p384, %s22, 1
          %s386 = smul.addr %s385, 64
          %s387 = smul.addr %s386, 4
          %s388 = scalar_lea.vmem %s0, %s387
        $region68: #{densenet_forward.1} parent=63 // pred_fallthru
          _
      $region64: #{densenet_forward.1} parent=5 // pred_fallthru
        _
      %p389 = scmp.le.s32.totalorder 1, %s22
      %p390 = scmp.lt.s32.totalorder %s22, 3
      %p391 = pnand %p389, %p390
      %p392 = pneg %p391
      // Predicated region
      $region69: #{densenet_forward.1} parent=5 // pred_check
        _
      $region70: #{densenet_forward.1} parent=5 // pred_check_branch
        %394 = sbr.rel (%p391) target = $region72
      $region71: #{densenet_forward.1} parent=5 // pred_region
        %s395 = ssub.s32 %s22, 1
        %p396 = scmp.lt.s32.totalorder %s27, 1
        %s397 = scalar_select %p396, %s27, 1
        %s398 = smul.addr %s397, 64
        %s399 = smul.addr %s398, 4
        %s400 = scalar_lea.vmem %s0, %s399
        %p401 = pneg %p48
        %p402 = pneg %p45
        %p403 = pneg %p69
        %p404 = pneg %p66
        %p405 = pneg %p90
        %p406 = pneg %p87
        %p407 = pneg %p111
        %p408 = pneg %p108
        %p409 = pneg %p132
        %p410 = pneg %p129
        %p411 = pneg %p153
        %p412 = pneg %p150
        %p413 = pneg %p174
        %p414 = pneg %p171
        %p415 = pneg %p195
        %p416 = pneg %p192
        %p417 = pneg %p216
        %p418 = pneg %p213
        %p419 = pneg %p237
        %p420 = pneg %p234
        %p421 = pneg %p258
        %p422 = pneg %p255
        %p423 = pneg %p279
        %p424 = pneg %p276
        %p425 = pneg %p300
        %p426 = pneg %p297
        %p427 = pneg %p326
        %p428 = pneg %p323
        %s429 = sand.u32 %s313, 1
        %s430 = scalar_lea.sflag [#allocation5], %s429
        %s431 = sand.u32 %s313, 1
        %s432 = scalar_lea.vmem [#allocation4], %s431
        %p433 = scmp.lt.s32.totalorder %s27, 1
        %s434 = scalar_select %p433, %s27, 1
        %s435 = smul.addr %s434, 64
        %s436 = smul.addr %s435, 4
        %s437 = scalar_lea.vmem %s0, %s436
        %v439 = vld [vmem:[%s437] sm:$0xff]
        %v440 = vld [vmem:[%s437 + $0x8] sm:$0xff]
        %v441 = vld [vmem:[%s437 + $0x10] sm:$0xff]
        %v442 = vld [vmem:[%s437 + $0x18] sm:$0xff]
        %v443 = vld [vmem:[%s437 + $0x20] sm:$0xff]
        %v444 = vld [vmem:[%s437 + $0x28] sm:$0xff]
        %v445 = vld [vmem:[%s437 + $0x30] sm:$0xff]
        %v446 = vld [vmem:[%s437 + $0x38] sm:$0xff]
        %v447 = vld [vmem:[%s437 + $0x40] sm:$0xff]
        %v448 = vld [vmem:[%s437 + $0x48] sm:$0xff]
        %v449 = vld [vmem:[%s437 + $0x50] sm:$0xff]
        %v450 = vld [vmem:[%s437 + $0x58] sm:$0xff]
        %v451 = vld [vmem:[%s437 + $0x60] sm:$0xff]
        %v452 = vld [vmem:[%s437 + $0x68] sm:$0xff]
        %v453 = vld [vmem:[%s437 + $0x70] sm:$0xff]
        %v454 = vld [vmem:[%s437 + $0x78] sm:$0xff]
        %v455 = vld [vmem:[%s437 + $0x80] sm:$0xff]
        %v456 = vld [vmem:[%s437 + $0x88] sm:$0xff]
        %v457 = vld [vmem:[%s437 + $0x90] sm:$0xff]
        %v458 = vld [vmem:[%s437 + $0x98] sm:$0xff]
        %v459 = vld [vmem:[%s437 + $0xa0] sm:$0xff]
        %v460 = vld [vmem:[%s437 + $0xa8] sm:$0xff]
        %v461 = vld [vmem:[%s437 + $0xb0] sm:$0xff]
        %v462 = vld [vmem:[%s437 + $0xb8] sm:$0xff]
        %v463 = vld [vmem:[%s437 + $0xc0] sm:$0xff]
        %v464 = vld [vmem:[%s437 + $0xc8] sm:$0xff]
        %v465 = vld [vmem:[%s437 + $0xd0] sm:$0xff]
        %v466 = vld [vmem:[%s437 + $0xd8] sm:$0xff]
        %v467 = vld [vmem:[%s437 + $0xe0] sm:$0xff]
        %v468 = vld [vmem:[%s437 + $0xe8] sm:$0xff]
        %v469 = vld [vmem:[%s437 + $0xf0] sm:$0xff]
        %v470 = vld [vmem:[%s437 + $0xf8] sm:$0xff]
        %v471 = vld [vmem:[%s1] sm:$0xf]
        %v472 = vld [vmem:[%s1 + $0x4] sm:$0xf]
        %v473 = vld [vmem:[%s1 + $0x8] sm:$0xf]
        %v474 = vld [vmem:[%s1 + $0xc] sm:$0xf]
        %v475 = vld [vmem:[%s1 + $0x10] sm:$0xf]
        %v476 = vld [vmem:[%s1 + $0x14] sm:$0xf]
        %v477 = vld [vmem:[%s1 + $0x18] sm:$0xf]
        %v478 = vld [vmem:[%s1 + $0x1c] sm:$0xf]
        %v479 = vld [vmem:[%s1 + $0x20] sm:$0xf]
        %v480 = vld [vmem:[%s1 + $0x24] sm:$0xf]
        %v481 = vld [vmem:[%s1 + $0x28] sm:$0xf]
        %v482 = vld [vmem:[%s1 + $0x2c] sm:$0xf]
        %v483 = vld [vmem:[%s1 + $0x30] sm:$0xf]
        %v484 = vld [vmem:[%s1 + $0x34] sm:$0xf]
        %v485 = vld [vmem:[%s1 + $0x38] sm:$0xf]
        %v486 = vld [vmem:[%s1 + $0x3c] sm:$0xf]
        %v487 = vld [vmem:[%s1 + $0x40] sm:$0xf]
        %v488 = vld [vmem:[%s1 + $0x44] sm:$0xf]
        %v489 = vld [vmem:[%s1 + $0x48] sm:$0x3]
        %v490 = vld [vmem:[%s2] sm:$0x1]
        %v492 = vlaneseq
        %v493 = vshrl.u32 %v492, 7
        %v494 = vsub.s32 0, %v493
        %v495 = vrot.slane %v490, %v494
        %v529 = vunpack.c.l.b16 %v439
        %v530 = vunpack.c.h.b16 %v439
        %v531 = vunpack.c.l.b16 %v440
        %v532 = vunpack.c.h.b16 %v440
        %v533 = vunpack.c.l.b16 %v441
        %v534 = vunpack.c.h.b16 %v441
        %v535 = vunpack.c.l.b16 %v442
        %v536 = vunpack.c.h.b16 %v442
        %v537 = vunpack.c.l.b16 %v443
        %v538 = vunpack.c.h.b16 %v443
        %v539 = vunpack.c.l.b16 %v444
        %v540 = vunpack.c.h.b16 %v444
        %v541 = vunpack.c.l.b16 %v445
        %v542 = vunpack.c.h.b16 %v445
        %v543 = vunpack.c.l.b16 %v446
        %v544 = vunpack.c.h.b16 %v446
        %v545 = vunpack.c.l.b16 %v447
        %v546 = vunpack.c.h.b16 %v447
        %v547 = vunpack.c.l.b16 %v448
        %v548 = vunpack.c.h.b16 %v448
        %v549 = vunpack.c.l.b16 %v449
        %v550 = vunpack.c.h.b16 %v449
        %v551 = vunpack.c.l.b16 %v450
        %v552 = vunpack.c.h.b16 %v450
        %v553 = vunpack.c.l.b16 %v451
        %v554 = vunpack.c.h.b16 %v451
        %v555 = vunpack.c.l.b16 %v452
        %v556 = vunpack.c.h.b16 %v452
        %v557 = vunpack.c.l.b16 %v453
        %v558 = vunpack.c.h.b16 %v453
        %v559 = vunpack.c.l.b16 %v454
        %v560 = vunpack.c.h.b16 %v454
        %v561 = vunpack.c.l.b16 %v455
        %v562 = vunpack.c.h.b16 %v455
        %v563 = vunpack.c.l.b16 %v456
        %v564 = vunpack.c.h.b16 %v456
        %v565 = vunpack.c.l.b16 %v457
        %v566 = vunpack.c.h.b16 %v457
        %v567 = vunpack.c.l.b16 %v458
        %v568 = vunpack.c.h.b16 %v458
        %v569 = vunpack.c.l.b16 %v459
        %v570 = vunpack.c.h.b16 %v459
        %v571 = vunpack.c.l.b16 %v460
        %v572 = vunpack.c.h.b16 %v460
        %v573 = vunpack.c.l.b16 %v461
        %v574 = vunpack.c.h.b16 %v461
        %v575 = vunpack.c.l.b16 %v462
        %v576 = vunpack.c.h.b16 %v462
        %v577 = vunpack.c.l.b16 %v463
        %v578 = vunpack.c.h.b16 %v463
        %v579 = vunpack.c.l.b16 %v464
        %v580 = vunpack.c.h.b16 %v464
        %v581 = vunpack.c.l.b16 %v465
        %v582 = vunpack.c.h.b16 %v465
        %v583 = vunpack.c.l.b16 %v466
        %v584 = vunpack.c.h.b16 %v466
        %v585 = vunpack.c.l.b16 %v467
        %v586 = vunpack.c.h.b16 %v467
        %v587 = vunpack.c.l.b16 %v468
        %v588 = vunpack.c.h.b16 %v468
        %v589 = vunpack.c.l.b16 %v469
        %v590 = vunpack.c.h.b16 %v469
        %v591 = vunpack.c.l.b16 %v470
        %v592 = vunpack.c.h.b16 %v470
        %v593 = vpack.c.b16 %v531, %v529
        %v594 = vpack.c.b16 %v532, %v530
        %v595 = vpack.c.b16 %v535, %v533
        %v596 = vpack.c.b16 %v536, %v534
        %v597 = vpack.c.b16 %v539, %v537
        %v598 = vpack.c.b16 %v540, %v538
        %v599 = vpack.c.b16 %v543, %v541
        %v600 = vpack.c.b16 %v544, %v542
        %v601 = vpack.c.b16 %v547, %v545
        %v602 = vpack.c.b16 %v548, %v546
        %v603 = vpack.c.b16 %v551, %v549
        %v604 = vpack.c.b16 %v552, %v550
        %v605 = vpack.c.b16 %v555, %v553
        %v606 = vpack.c.b16 %v556, %v554
        %v607 = vpack.c.b16 %v559, %v557
        %v608 = vpack.c.b16 %v560, %v558
        %v609 = vpack.c.b16 %v563, %v561
        %v610 = vpack.c.b16 %v564, %v562
        %v611 = vpack.c.b16 %v567, %v565
        %v612 = vpack.c.b16 %v568, %v566
        %v613 = vpack.c.b16 %v571, %v569
        %v614 = vpack.c.b16 %v572, %v570
        %v615 = vpack.c.b16 %v575, %v573
        %v616 = vpack.c.b16 %v576, %v574
        %v617 = vpack.c.b16 %v579, %v577
        %v618 = vpack.c.b16 %v580, %v578
        %v619 = vpack.c.b16 %v583, %v581
        %v620 = vpack.c.b16 %v584, %v582
        %v621 = vpack.c.b16 %v587, %v585
        %v622 = vpack.c.b16 %v588, %v586
        %v623 = vpack.c.b16 %v591, %v589
        %v624 = vpack.c.b16 %v592, %v590
        %v660 = vunpack.c.l.b16 %v471
        %v661 = vunpack.c.l.b16 %v472
        %v662 = vunpack.c.l.b16 %v473
        %v663 = vunpack.c.l.b16 %v474
        %v664 = vunpack.c.l.b16 %v475
        %v665 = vunpack.c.l.b16 %v476
        %v666 = vunpack.c.l.b16 %v477
        %v667 = vunpack.c.l.b16 %v478
        %v668 = vunpack.c.l.b16 %v479
        %v669 = vunpack.c.l.b16 %v480
        %v670 = vunpack.c.l.b16 %v481
        %v671 = vunpack.c.l.b16 %v482
        %v672 = vunpack.c.l.b16 %v483
        %v673 = vunpack.c.l.b16 %v484
        %v674 = vunpack.c.l.b16 %v485
        %v675 = vunpack.c.l.b16 %v486
        %v676 = vunpack.c.l.b16 %v487
        %v677 = vunpack.c.l.b16 %v488
        %v678 = vunpack.c.l.b16 %v489
        %v679 = vpack.c.b16 %v661, %v660
        %v680 = vpack.c.b16 %v663, %v662
        %v681 = vpack.c.b16 %v665, %v664
        %v682 = vpack.c.b16 %v667, %v666
        %v683 = vpack.c.b16 %v669, %v668
        %v684 = vpack.c.b16 %v671, %v670
        %v685 = vpack.c.b16 %v673, %v672
        %v686 = vpack.c.b16 %v675, %v674
        %v687 = vpack.c.b16 %v677, %v676
        %v688 = vpack.c.b16 %v678, %v678
        %vm698 = vcmask 154624
        %v700 = vsel %vm698, %v594, 0
        %v703 = vsel %vm698, %v596, 0
        %v706 = vsel %vm698, %v598, 0
        %v709 = vsel %vm698, %v600, 0
        %v712 = vsel %vm698, %v602, 0
        %v715 = vsel %vm698, %v604, 0
        %v718 = vsel %vm698, %v606, 0
        %v721 = vsel %vm698, %v608, 0
        %v724 = vsel %vm698, %v610, 0
        %v727 = vsel %vm698, %v612, 0
        %v730 = vsel %vm698, %v614, 0
        %v733 = vsel %vm698, %v616, 0
        %v736 = vsel %vm698, %v618, 0
        %v739 = vsel %vm698, %v620, 0
        %v742 = vsel %vm698, %v622, 0
        %v745 = vsel %vm698, %v624, 0
        %vm747 = vcmask 1040384
        %vm748 = vcmask 1041408
        %v749 = vsel %vm747, 4294967295, 65535
        %v750 = vsel %vm748, %v749, 0
        %v752 = vand.u32 %v688, %v750
        %754 = vmatprep.subr.bf16.mxu0 0
        %755 = vmatpush1.bf16.msra.mxu0 %v686
        %756 = vmatprep.subr.bf16.mxu0 0
        %757 = vmatpush1.bf16.msra.mxu0 %v685
        %758 = vmatprep.subr.bf16.mxu0 0
        %759 = vmatpush1.bf16.msra.mxu0 %v684
        %760 = vmatprep.subr.bf16.mxu0 0
        %761 = vmatpush1.bf16.msra.mxu0 %v683
        %762 = vmatprep.subr.bf16.mxu0 0
        %763 = vmatpush1.bf16.msra.mxu0 %v682
        %764 = vmatprep.subr.bf16.mxu0 0
        %765 = vmatpush1.bf16.msra.mxu0 %v681
        %766 = vmatprep.subr.bf16.mxu0 0
        %767 = vmatpush1.bf16.msra.mxu0 %v680
        %768 = vmatprep.subr.bf16.mxu0 0
        %769 = vmatpush1.bf16.msra.mxu0 %v679
        %770 = vmatprep.subr.bf16.mxu0 0
        %771 = vmatpush2.bf16.msra.mxu0 0
        %772 = vmatprep.subr.bf16.mxu0 0
        %773 = vmatpush2.bf16.msra.mxu0 0
        %774 = vmatprep.subr.bf16.mxu0 0
        %775 = vmatpush2.bf16.msra.mxu0 0
        %776 = vmatprep.subr.bf16.mxu0 0
        %777 = vmatpush2.bf16.msra.mxu0 0
        %778 = vmatprep.subr.bf16.mxu0 0
        %779 = vmatpush2.bf16.msra.mxu0 0
        %780 = vmatprep.subr.bf16.mxu0 0
        %781 = vmatpush2.bf16.msra.mxu0 0
        %782 = vmatprep.subr.bf16.mxu0 0
        %783 = vmatpush2.bf16.msra.mxu0 %v752
        %784 = vmatprep.subr.bf16.mxu0 0
        %785 = vmatpush2.bf16.msra.mxu0 %v687
        %786 = vmatprep.mubr.bf16.mxu0 %v700
        %787 = vmatmul.mubr.bf16.gmra.mxu0 %v593
        %v788 = vpop.f32.mrf.mxu0
        %v789 = vadd.f32 %v495, %v788
        %v790 = vpop.f32.mrf.mxu0
        %v791 = vpop.f32.mrf.mxu0
        %v792 = vadd.f32 %v495, %v791
        %v793 = vpop.f32.mrf.mxu0
        %794 = vmatprep.mubr.bf16.mxu0 %v703
        %795 = vmatmul.mubr.bf16.gmra.mxu0 %v595
        %v796 = vpop.f32.mrf.mxu0
        %v797 = vadd.f32 %v495, %v796
        %v798 = vpop.f32.mrf.mxu0
        %v799 = vpop.f32.mrf.mxu0
        %v800 = vadd.f32 %v495, %v799
        %v801 = vpop.f32.mrf.mxu0
        %802 = vmatprep.mubr.bf16.mxu0 %v706
        %803 = vmatmul.mubr.bf16.gmra.mxu0 %v597
        %v804 = vpop.f32.mrf.mxu0
        %v805 = vadd.f32 %v495, %v804
        %v806 = vpop.f32.mrf.mxu0
        %v807 = vpop.f32.mrf.mxu0
        %v808 = vadd.f32 %v495, %v807
        %v809 = vpop.f32.mrf.mxu0
        %810 = vmatprep.mubr.bf16.mxu0 %v709
        %811 = vmatmul.mubr.bf16.gmra.mxu0 %v599
        %v812 = vpop.f32.mrf.mxu0
        %v813 = vadd.f32 %v495, %v812
        %v814 = vpop.f32.mrf.mxu0
        %v815 = vpop.f32.mrf.mxu0
        %v816 = vadd.f32 %v495, %v815
        %v817 = vpop.f32.mrf.mxu0
        %818 = vmatprep.mubr.bf16.mxu0 %v712
        %819 = vmatmul.mubr.bf16.gmra.mxu0 %v601
        %v820 = vpop.f32.mrf.mxu0
        %v821 = vadd.f32 %v495, %v820
        %v822 = vpop.f32.mrf.mxu0
        %v823 = vpop.f32.mrf.mxu0
        %v824 = vadd.f32 %v495, %v823
        %v825 = vpop.f32.mrf.mxu0
        %826 = vmatprep.mubr.bf16.mxu0 %v715
        %827 = vmatmul.mubr.bf16.gmra.mxu0 %v603
        %v828 = vpop.f32.mrf.mxu0
        %v829 = vadd.f32 %v495, %v828
        %v830 = vpop.f32.mrf.mxu0
        %v831 = vpop.f32.mrf.mxu0
        %v832 = vadd.f32 %v495, %v831
        %v833 = vpop.f32.mrf.mxu0
        %834 = vmatprep.mubr.bf16.mxu0 %v718
        %835 = vmatmul.mubr.bf16.gmra.mxu0 %v605
        %v836 = vpop.f32.mrf.mxu0
        %v837 = vadd.f32 %v495, %v836
        %v838 = vpop.f32.mrf.mxu0
        %v839 = vpop.f32.mrf.mxu0
        %v840 = vadd.f32 %v495, %v839
        %v841 = vpop.f32.mrf.mxu0
        %842 = vmatprep.mubr.bf16.mxu0 %v721
        %843 = vmatmul.mubr.bf16.gmra.mxu0 %v607
        %v844 = vpop.f32.mrf.mxu0
        %v845 = vadd.f32 %v495, %v844
        %v846 = vpop.f32.mrf.mxu0
        %v847 = vpop.f32.mrf.mxu0
        %v848 = vadd.f32 %v495, %v847
        %v849 = vpop.f32.mrf.mxu0
        %850 = vmatprep.mubr.bf16.mxu0 %v724
        %851 = vmatmul.mubr.bf16.gmra.mxu0 %v609
        %v852 = vpop.f32.mrf.mxu0
        %v853 = vadd.f32 %v495, %v852
        %v854 = vpop.f32.mrf.mxu0
        %v855 = vpop.f32.mrf.mxu0
        %v856 = vadd.f32 %v495, %v855
        %v857 = vpop.f32.mrf.mxu0
        %858 = vmatprep.mubr.bf16.mxu0 %v727
        %859 = vmatmul.mubr.bf16.gmra.mxu0 %v611
        %v860 = vpop.f32.mrf.mxu0
        %v861 = vadd.f32 %v495, %v860
        %v862 = vpop.f32.mrf.mxu0
        %v863 = vpop.f32.mrf.mxu0
        %v864 = vadd.f32 %v495, %v863
        %v865 = vpop.f32.mrf.mxu0
        %866 = vmatprep.mubr.bf16.mxu0 %v730
        %867 = vmatmul.mubr.bf16.gmra.mxu0 %v613
        %v868 = vpop.f32.mrf.mxu0
        %v869 = vadd.f32 %v495, %v868
        %v870 = vpop.f32.mrf.mxu0
        %v871 = vpop.f32.mrf.mxu0
        %v872 = vadd.f32 %v495, %v871
        %v873 = vpop.f32.mrf.mxu0
        %874 = vmatprep.mubr.bf16.mxu0 %v733
        %875 = vmatmul.mubr.bf16.gmra.mxu0 %v615
        %v876 = vpop.f32.mrf.mxu0
        %v877 = vadd.f32 %v495, %v876
        %v878 = vpop.f32.mrf.mxu0
        %v879 = vpop.f32.mrf.mxu0
        %v880 = vadd.f32 %v495, %v879
        %v881 = vpop.f32.mrf.mxu0
        %882 = vmatprep.mubr.bf16.mxu0 %v736
        %883 = vmatmul.mubr.bf16.gmra.mxu0 %v617
        %v884 = vpop.f32.mrf.mxu0
        %v885 = vadd.f32 %v495, %v884
        %v886 = vpop.f32.mrf.mxu0
        %v887 = vpop.f32.mrf.mxu0
        %v888 = vadd.f32 %v495, %v887
        %v889 = vpop.f32.mrf.mxu0
        %890 = vmatprep.mubr.bf16.mxu0 %v739
        %891 = vmatmul.mubr.bf16.gmra.mxu0 %v619
        %v892 = vpop.f32.mrf.mxu0
        %v893 = vadd.f32 %v495, %v892
        %v894 = vpop.f32.mrf.mxu0
        %v895 = vpop.f32.mrf.mxu0
        %v896 = vadd.f32 %v495, %v895
        %v897 = vpop.f32.mrf.mxu0
        %898 = vmatprep.mubr.bf16.mxu0 %v742
        %899 = vmatmul.mubr.bf16.gmra.mxu0 %v621
        %v900 = vpop.f32.mrf.mxu0
        %v901 = vadd.f32 %v495, %v900
        %v902 = vpop.f32.mrf.mxu0
        %v903 = vpop.f32.mrf.mxu0
        %v904 = vadd.f32 %v495, %v903
        %v905 = vpop.f32.mrf.mxu0
        %906 = vmatprep.mubr.bf16.mxu0 %v745
        %907 = vmatmul.mubr.bf16.gmra.mxu0 %v623
        %v908 = vpop.f32.mrf.mxu0
        %v909 = vadd.f32 %v495, %v908
        %v910 = vpop.f32.mrf.mxu0
        %v911 = vpop.f32.mrf.mxu0
        %v912 = vadd.f32 %v495, %v911
        %v913 = vpop.f32.mrf.mxu0
        %914 = vdwg.mxu0
        %v915 = vmax.f32 %v789, 0.0
        %v916 = vmax.f32 %v792, 0.0
        %v917 = vmax.f32 %v797, 0.0
        %v918 = vmax.f32 %v800, 0.0
        %v919 = vmax.f32 %v805, 0.0
        %v920 = vmax.f32 %v808, 0.0
        %v921 = vmax.f32 %v813, 0.0
        %v922 = vmax.f32 %v816, 0.0
        %v923 = vmax.f32 %v821, 0.0
        %v924 = vmax.f32 %v824, 0.0
        %v925 = vmax.f32 %v829, 0.0
        %v926 = vmax.f32 %v832, 0.0
        %v927 = vmax.f32 %v837, 0.0
        %v928 = vmax.f32 %v840, 0.0
        %v929 = vmax.f32 %v845, 0.0
        %v930 = vmax.f32 %v848, 0.0
        %v931 = vmax.f32 %v853, 0.0
        %v932 = vmax.f32 %v856, 0.0
        %v933 = vmax.f32 %v861, 0.0
        %v934 = vmax.f32 %v864, 0.0
        %v935 = vmax.f32 %v869, 0.0
        %v936 = vmax.f32 %v872, 0.0
        %v937 = vmax.f32 %v877, 0.0
        %v938 = vmax.f32 %v880, 0.0
        %v939 = vmax.f32 %v885, 0.0
        %v940 = vmax.f32 %v888, 0.0
        %v941 = vmax.f32 %v893, 0.0
        %v942 = vmax.f32 %v896, 0.0
        %v943 = vmax.f32 %v901, 0.0
        %v944 = vmax.f32 %v904, 0.0
        %v945 = vmax.f32 %v909, 0.0
        %v946 = vmax.f32 %v912, 0.0
        %v947 = vmax.f32 %v915, %v923
        %v948 = vmax.f32 %v916, %v924
        %v949 = vmax.f32 %v917, %v925
        %v950 = vmax.f32 %v918, %v926
        %v951 = vmax.f32 %v919, %v927
        %v952 = vmax.f32 %v920, %v928
        %v953 = vmax.f32 %v921, %v929
        %v954 = vmax.f32 %v922, %v930
        %v955 = vrot.slane %v923, 7
        %v956 = vrot.slane %v924, 7
        %v957 = vrot.slane %v925, 7
        %v958 = vrot.slane %v926, 7
        %v959 = vrot.slane %v927, 7
        %v960 = vrot.slane %v928, 7
        %v961 = vrot.slane %v929, 7
        %v962 = vrot.slane %v930, 7
        %v963 = vlaneseq
        %v964 = vshrl.u32 %v963, 7
        %vm965 = vcmp.lt.s32.totalorder %v964, 1
        %v966 = vsel %vm965, 0.0, %v955
        %v967 = vsel %vm965, 0.0, %v956
        %v968 = vsel %vm965, 0.0, %v957
        %v969 = vsel %vm965, 0.0, %v958
        %v970 = vsel %vm965, 0.0, %v959
        %v971 = vsel %vm965, 0.0, %v960
        %v972 = vsel %vm965, 0.0, %v961
        %v973 = vsel %vm965, 0.0, %v962
        %v974 = vmax.f32 %v947, %v966
        %v975 = vmax.f32 %v948, %v967
        %v976 = vmax.f32 %v949, %v968
        %v977 = vmax.f32 %v950, %v969
        %v978 = vmax.f32 %v951, %v970
        %v979 = vmax.f32 %v952, %v971
        %v980 = vmax.f32 %v953, %v972
        %v981 = vmax.f32 %v954, %v973
        %v982 = vmax.f32 %v931, %v939
        %v983 = vmax.f32 %v932, %v940
        %v984 = vmax.f32 %v933, %v941
        %v985 = vmax.f32 %v934, %v942
        %v986 = vmax.f32 %v935, %v943
        %v987 = vmax.f32 %v936, %v944
        %v988 = vmax.f32 %v937, %v945
        %v989 = vmax.f32 %v938, %v946
        %v990 = vrot.slane %v939, 7
        %v991 = vrot.slane %v940, 7
        %v992 = vrot.slane %v941, 7
        %v993 = vrot.slane %v942, 7
        %v994 = vrot.slane %v943, 7
        %v995 = vrot.slane %v944, 7
        %v996 = vrot.slane %v945, 7
        %v997 = vrot.slane %v946, 7
        %v998 = vsel %vm965, 0.0, %v990
        %v999 = vsel %vm965, 0.0, %v991
        %v1000 = vsel %vm965, 0.0, %v992
        %v1001 = vsel %vm965, 0.0, %v993
        %v1002 = vsel %vm965, 0.0, %v994
        %v1003 = vsel %vm965, 0.0, %v995
        %v1004 = vsel %vm965, 0.0, %v996
        %v1005 = vsel %vm965, 0.0, %v997
        %v1006 = vmax.f32 %v982, %v998
        %v1007 = vmax.f32 %v983, %v999
        %v1008 = vmax.f32 %v984, %v1000
        %v1009 = vmax.f32 %v985, %v1001
        %v1010 = vmax.f32 %v986, %v1002
        %v1011 = vmax.f32 %v987, %v1003
        %v1012 = vmax.f32 %v988, %v1004
        %v1013 = vmax.f32 %v989, %v1005
        %v1014 = vmax.f32 %v974, %v1006
        %v1015 = vmax.f32 %v975, %v1007
        %v1016 = vmax.f32 %v976, %v1008
        %v1017 = vmax.f32 %v977, %v1009
        %v1018 = vmax.f32 %v978, %v1010
        %v1019 = vmax.f32 %v979, %v1011
        %v1020 = vmax.f32 %v980, %v1012
        %v1021 = vmax.f32 %v981, %v1013
        %v1022 = vmax.f32 %v1014, 0.0
        %v1023 = vmax.f32 %v1015, %v1006
        %v1024 = vmax.f32 %v1016, %v1007
        %v1025 = vmax.f32 %v1017, %v1008
        %v1026 = vmax.f32 %v1018, %v1009
        %v1027 = vmax.f32 %v1019, %v1010
        %v1028 = vmax.f32 %v1020, %v1011
        %v1029 = vmax.f32 %v1021, %v1012
        %1030 = vst [vmem:[#allocation2] sm:$0xff] 0.0
        %1031 = vst [vmem:[#allocation2 + $0x8] sm:$0xff] 0.0
        %1032 = vst [vmem:[#allocation2 + $0x10] sm:$0xff] 0.0
        %1033 = vst [vmem:[#allocation2 + $0x18] sm:$0xff] 0.0
        %1034 = vst [vmem:[#allocation2 + $0x20] sm:$0xff] 0.0
        %1035 = vst [vmem:[#allocation2 + $0x28] sm:$0xff] 0.0
        %1036 = vst [vmem:[#allocation2 + $0x30] sm:$0xff] 0.0
        %1037 = vst [vmem:[#allocation2 + $0x38] sm:$0xff] 0.0
        %vm1038 = vcmask 130048
        %1039 = vst.msk [vmem:[#allocation2] sm:$0xff] %vm1038, %v1022
        %1040 = vst.msk [vmem:[#allocation2 + $0x8] sm:$0xff] %vm1038, %v1023
        %1041 = vst.msk [vmem:[#allocation2 + $0x10] sm:$0xff] %vm1038, %v1024
        %1042 = vst.msk [vmem:[#allocation2 + $0x18] sm:$0xff] %vm1038, %v1025
        %1043 = vst.msk [vmem:[#allocation2 + $0x20] sm:$0xff] %vm1038, %v1026
        %1044 = vst.msk [vmem:[#allocation2 + $0x28] sm:$0xff] %vm1038, %v1027
        %1045 = vst.msk [vmem:[#allocation2 + $0x30] sm:$0xff] %vm1038, %v1028
        %1046 = vst.msk [vmem:[#allocation2 + $0x38] sm:$0xff] %vm1038, %v1029
        %vm1047 = vcmask 392192
        %1048 = vst.msk [vmem:[#allocation3] sm:$0xff] %vm1047, 0.0
        %1049 = vst.msk [vmem:[#allocation3 + $0x8] sm:$0xff] %vm1047, 0.0
        %1050 = vst.msk [vmem:[#allocation3 + $0x10] sm:$0xff] %vm1047, 0.0
        %1051 = vst.msk [vmem:[#allocation3 + $0x18] sm:$0xff] %vm1047, 0.0
        %1052 = vst.msk [vmem:[#allocation3 + $0x20] sm:$0xff] %vm1047, 0.0
        %1053 = vst.msk [vmem:[#allocation3 + $0x28] sm:$0xff] %vm1047, 0.0
        %1054 = vst.msk [vmem:[#allocation3 + $0x30] sm:$0xff] %vm1047, 0.0
        %1055 = vst.msk [vmem:[#allocation3 + $0x38] sm:$0xff] %vm1047, 0.0
        %1056 = vst.msk [vmem:[#allocation3 + $0x40] sm:$0xff] %vm1047, 0.0
        %1057 = vst.msk [vmem:[#allocation3 + $0x48] sm:$0xff] %vm1047, 0.0
        %v1058 = vld [vmem:[#allocation2] sm:$0xff]
        %v1059 = vld [vmem:[#allocation2 + $0x8] sm:$0xff]
        %v1060 = vld [vmem:[#allocation2 + $0x10] sm:$0xff]
        %v1061 = vld [vmem:[#allocation2 + $0x18] sm:$0xff]
        %v1062 = vld [vmem:[#allocation2 + $0x20] sm:$0xff]
        %v1063 = vld [vmem:[#allocation2 + $0x28] sm:$0xff]
        %v1064 = vld [vmem:[#allocation2 + $0x30] sm:$0xff]
        %v1065 = vld [vmem:[#allocation2 + $0x38] sm:$0xff]
        %v1066 = vld [vmem:[%s3] sm:$0x1]
        %v1068 = vlaneseq
        %v1069 = vshrl.u32 %v1068, 7
        %v1070 = vsub.s32 0, %v1069
        %v1071 = vrot.slane %v1066, %v1070
        %v1073 = vmul.f32 %v1058, %v1071
        %v1074 = vmul.f32 %v1059, %v1071
        %v1075 = vmul.f32 %v1060, %v1071
        %v1076 = vmul.f32 %v1061, %v1071
        %v1077 = vmul.f32 %v1062, %v1071
        %v1078 = vmul.f32 %v1063, %v1071
        %v1079 = vmul.f32 %v1064, %v1071
        %v1080 = vmul.f32 %v1065, %v1071
        %v1081 = vld [vmem:[%s4] sm:$0x1]
        %v1083 = vlaneseq
        %v1084 = vshrl.u32 %v1083, 7
        %v1085 = vsub.s32 0, %v1084
        %v1086 = vrot.slane %v1081, %v1085
        %v1088 = vadd.f32 %v1073, %v1086
        %v1089 = vadd.f32 %v1074, %v1086
        %v1090 = vadd.f32 %v1075, %v1086
        %v1091 = vadd.f32 %v1076, %v1086
        %v1092 = vadd.f32 %v1077, %v1086
        %v1093 = vadd.f32 %v1078, %v1086
        %v1094 = vadd.f32 %v1079, %v1086
        %v1095 = vadd.f32 %v1080, %v1086
        %v1096 = vmax.f32 %v1088, 0.0
        %v1097 = vmax.f32 %v1089, 0.0
        %v1098 = vmax.f32 %v1090, 0.0
        %v1099 = vmax.f32 %v1091, 0.0
        %v1100 = vmax.f32 %v1092, 0.0
        %v1101 = vmax.f32 %v1093, 0.0
        %v1102 = vmax.f32 %v1094, 0.0
        %v1103 = vmax.f32 %v1095, 0.0
        %v1104 = vpack.c.bf16 %v1097, %v1096
        %v1105 = vpack.c.bf16 %v1099, %v1098
        %v1106 = vpack.c.bf16 %v1101, %v1100
        %v1107 = vpack.c.bf16 %v1103, %v1102
        %v1108 = vld [vmem:[%s5] sm:$0xf]
        %v1109 = vld [vmem:[%s5 + $0x4] sm:$0xf]
        %v1110 = vld [vmem:[%s5 + $0x8] sm:$0xf]
        %v1111 = vld [vmem:[%s5 + $0xc] sm:$0xf]
        %v1112 = vld [vmem:[%s5 + $0x10] sm:$0xf]
        %v1113 = vld [vmem:[%s5 + $0x14] sm:$0xf]
        %v1114 = vld [vmem:[%s5 + $0x18] sm:$0xf]
        %v1115 = vld [vmem:[%s5 + $0x1c] sm:$0xf]
        %v1116 = vld [vmem:[%s5 + $0x20] sm:$0xf]
        %v1117 = vld [vmem:[%s5 + $0x24] sm:$0xf]
        %v1118 = vld [vmem:[%s5 + $0x28] sm:$0xf]
        %v1119 = vld [vmem:[%s5 + $0x2c] sm:$0xf]
        %v1120 = vld [vmem:[%s5 + $0x30] sm:$0xf]
        %v1121 = vld [vmem:[%s5 + $0x34] sm:$0xf]
        %v1122 = vld [vmem:[%s5 + $0x38] sm:$0xf]
        %v1123 = vld [vmem:[%s5 + $0x3c] sm:$0xf]
        %v1140 = vunpack.c.l.b16 %v1108
        %v1141 = vunpack.c.l.b16 %v1109
        %v1142 = vunpack.c.l.b16 %v1110
        %v1143 = vunpack.c.l.b16 %v1111
        %v1144 = vunpack.c.l.b16 %v1112
        %v1145 = vunpack.c.l.b16 %v1113
        %v1146 = vunpack.c.l.b16 %v1114
        %v1147 = vunpack.c.l.b16 %v1115
        %v1148 = vunpack.c.l.b16 %v1116
        %v1149 = vunpack.c.l.b16 %v1117
        %v1150 = vunpack.c.l.b16 %v1118
        %v1151 = vunpack.c.l.b16 %v1119
        %v1152 = vunpack.c.l.b16 %v1120
        %v1153 = vunpack.c.l.b16 %v1121
        %v1154 = vunpack.c.l.b16 %v1122
        %v1155 = vunpack.c.l.b16 %v1123
        %v1156 = vpack.c.b16 %v1141, %v1140
        %v1157 = vpack.c.b16 %v1143, %v1142
        %v1158 = vpack.c.b16 %v1145, %v1144
        %v1159 = vpack.c.b16 %v1147, %v1146
        %v1160 = vpack.c.b16 %v1149, %v1148
        %v1161 = vpack.c.b16 %v1151, %v1150
        %v1162 = vpack.c.b16 %v1153, %v1152
        %v1163 = vpack.c.b16 %v1155, %v1154
        %1172 = vmatprep.subr.bf16.mxu0 0
        %1173 = vmatpush1.bf16.msra.mxu0 %v1163
        %1174 = vmatprep.subr.bf16.mxu0 0
        %1175 = vmatpush1.bf16.msra.mxu0 %v1162
        %1176 = vmatprep.subr.bf16.mxu0 0
        %1177 = vmatpush1.bf16.msra.mxu0 %v1161
        %1178 = vmatprep.subr.bf16.mxu0 0
        %1179 = vmatpush1.bf16.msra.mxu0 %v1160
        %1180 = vmatprep.subr.bf16.mxu0 0
        %1181 = vmatpush1.bf16.msra.mxu0 %v1159
        %1182 = vmatprep.subr.bf16.mxu0 0
        %1183 = vmatpush1.bf16.msra.mxu0 %v1158
        %1184 = vmatprep.subr.bf16.mxu0 0
        %1185 = vmatpush1.bf16.msra.mxu0 %v1157
        %1186 = vmatprep.subr.bf16.mxu0 0
        %1187 = vmatpush1.bf16.msra.mxu0 %v1156
        %1188 = vmatprep.subr.bf16.mxu0 0
        %1189 = vmatpush2.bf16.msra.mxu0 0
        %1190 = vmatprep.subr.bf16.mxu0 0
        %1191 = vmatpush2.bf16.msra.mxu0 0
        %1192 = vmatprep.subr.bf16.mxu0 0
        %1193 = vmatpush2.bf16.msra.mxu0 0
        %1194 = vmatprep.subr.bf16.mxu0 0
        %1195 = vmatpush2.bf16.msra.mxu0 0
        %1196 = vmatprep.subr.bf16.mxu0 0
        %1197 = vmatpush2.bf16.msra.mxu0 0
        %1198 = vmatprep.subr.bf16.mxu0 0
        %1199 = vmatpush2.bf16.msra.mxu0 0
        %1200 = vmatprep.subr.bf16.mxu0 0
        %1201 = vmatpush2.bf16.msra.mxu0 0
        %1202 = vmatprep.subr.bf16.mxu0 0
        %1203 = vmatpush2.bf16.msra.mxu0 0
        %1204 = vmatprep.mubr.bf16.mxu0 0
        %1205 = vmatmul.mubr.bf16.gmra.mxu0 %v1104
        %v1206 = vpop.f32.mrf.mxu0
        %v1207 = vadd.f32 0.0, %v1206
        %v1208 = vpop.f32.mrf.mxu0
        %v1209 = vpop.f32.mrf.mxu0
        %v1210 = vadd.f32 0.0, %v1209
        %v1211 = vpop.f32.mrf.mxu0
        %1212 = vmatprep.mubr.bf16.mxu0 0
        %1213 = vmatmul.mubr.bf16.gmra.mxu0 %v1105
        %v1214 = vpop.f32.mrf.mxu0
        %v1215 = vadd.f32 0.0, %v1214
        %v1216 = vpop.f32.mrf.mxu0
        %v1217 = vpop.f32.mrf.mxu0
        %v1218 = vadd.f32 0.0, %v1217
        %v1219 = vpop.f32.mrf.mxu0
        %1220 = vmatprep.mubr.bf16.mxu0 0
        %1221 = vmatmul.mubr.bf16.gmra.mxu0 %v1106
        %v1222 = vpop.f32.mrf.mxu0
        %v1223 = vadd.f32 0.0, %v1222
        %v1224 = vpop.f32.mrf.mxu0
        %v1225 = vpop.f32.mrf.mxu0
        %v1226 = vadd.f32 0.0, %v1225
        %v1227 = vpop.f32.mrf.mxu0
        %1228 = vmatprep.mubr.bf16.mxu0 0
        %1229 = vmatmul.mubr.bf16.gmra.mxu0 %v1107
        %v1230 = vpop.f32.mrf.mxu0
        %v1231 = vadd.f32 0.0, %v1230
        %v1232 = vpop.f32.mrf.mxu0
        %v1233 = vpop.f32.mrf.mxu0
        %v1234 = vadd.f32 0.0, %v1233
        %v1235 = vpop.f32.mrf.mxu0
        %1236 = vdwg.mxu0
        %v1237 = vld [vmem:[%s6] sm:$0x1]
        %v1239 = vlaneseq
        %v1240 = vshrl.u32 %v1239, 7
        %v1241 = vsub.s32 0, %v1240
        %v1242 = vrot.slane %v1237, %v1241
        %v1244 = vmul.f32 %v1207, %v1242
        %v1245 = vmul.f32 %v1210, %v1242
        %v1246 = vmul.f32 %v1215, %v1242
        %v1247 = vmul.f32 %v1218, %v1242
        %v1248 = vmul.f32 %v1223, %v1242
        %v1249 = vmul.f32 %v1226, %v1242
        %v1250 = vmul.f32 %v1231, %v1242
        %v1251 = vmul.f32 %v1234, %v1242
        %v1252 = vld [vmem:[%s7] sm:$0x1]
        %v1254 = vlaneseq
        %v1255 = vshrl.u32 %v1254, 7
        %v1256 = vsub.s32 0, %v1255
        %v1257 = vrot.slane %v1252, %v1256
        %v1259 = vadd.f32 %v1244, %v1257
        %v1260 = vadd.f32 %v1245, %v1257
        %v1261 = vadd.f32 %v1246, %v1257
        %v1262 = vadd.f32 %v1247, %v1257
        %v1263 = vadd.f32 %v1248, %v1257
        %v1264 = vadd.f32 %v1249, %v1257
        %v1265 = vadd.f32 %v1250, %v1257
        %v1266 = vadd.f32 %v1251, %v1257
        %v1267 = vmax.f32 %v1259, 0.0
        %v1268 = vmax.f32 %v1260, 0.0
        %v1269 = vmax.f32 %v1261, 0.0
        %v1270 = vmax.f32 %v1262, 0.0
        %v1271 = vmax.f32 %v1263, 0.0
        %v1272 = vmax.f32 %v1264, 0.0
        %v1273 = vmax.f32 %v1265, 0.0
        %v1274 = vmax.f32 %v1266, 0.0
        %v1275 = vrot.slane %v1267, 7
        %v1276 = vrot.slane %v1268, 7
        %v1277 = vrot.slane %v1269, 7
        %v1278 = vrot.slane %v1270, 7
        %v1279 = vrot.slane %v1271, 7
        %v1280 = vrot.slane %v1272, 7
        %v1281 = vrot.slane %v1273, 7
        %v1282 = vrot.slane %v1274, 7
        %v1283 = vsel %vm965, 0.0, %v1275
        %v1284 = vsel %vm965, 0.0, %v1276
        %v1285 = vsel %vm965, 0.0, %v1277
        %v1286 = vsel %vm965, 0.0, %v1278
        %v1287 = vsel %vm965, 0.0, %v1279
        %v1288 = vsel %vm965, 0.0, %v1280
        %v1289 = vsel %vm965, 0.0, %v1281
        %v1290 = vsel %vm965, 0.0, %v1282
        %s1291 = scalar_lea.vmem [#allocation3], 8
        %1292 = vst.msk [vmem:[%s1291] sm:$0xff] %vm1038, %v1283
        %1293 = vst.msk [vmem:[%s1291 + $0x8] sm:$0xff] %vm1038, %v1284
        %1294 = vst.msk [vmem:[%s1291 + $0x10] sm:$0xff] %vm1038, %v1285
        %1295 = vst.msk [vmem:[%s1291 + $0x18] sm:$0xff] %vm1038, %v1286
        %1296 = vst.msk [vmem:[%s1291 + $0x20] sm:$0xff] %vm1038, %v1287
        %1297 = vst.msk [vmem:[%s1291 + $0x28] sm:$0xff] %vm1038, %v1288
        %1298 = vst.msk [vmem:[%s1291 + $0x30] sm:$0xff] %vm1038, %v1289
        %1299 = vst.msk [vmem:[%s1291 + $0x38] sm:$0xff] %vm1038, %v1290
        %1308 = vrot.lane.b32.xlu0 %v1267, 16
        %v1309 = vpop.permute.xlu0 %1308
        %1310 = vrot.lane.b32.xlu0 %v1268, 16
        %v1311 = vpop.permute.xlu0 %1310
        %1312 = vrot.lane.b32.xlu0 %v1269, 16
        %v1313 = vpop.permute.xlu0 %1312
        %1314 = vrot.lane.b32.xlu0 %v1270, 16
        %v1315 = vpop.permute.xlu0 %1314
        %1316 = vrot.lane.b32.xlu0 %v1271, 16
        %v1317 = vpop.permute.xlu0 %1316
        %1318 = vrot.lane.b32.xlu0 %v1272, 16
        %v1319 = vpop.permute.xlu0 %1318
        %1320 = vrot.lane.b32.xlu0 %v1273, 16
        %v1321 = vpop.permute.xlu0 %1320
        %1322 = vrot.lane.b32.xlu0 %v1274, 16
        %v1323 = vpop.permute.xlu0 %1322
        %vm1332 = vcmask 261248
        %1333 = vst.msk [vmem:[%s1291] sm:$0xff] %vm1332, %v1309
        %1334 = vst.msk [vmem:[%s1291 + $0x8] sm:$0xff] %vm1332, %v1311
        %1335 = vst.msk [vmem:[%s1291 + $0x10] sm:$0xff] %vm1332, %v1313
        %1336 = vst.msk [vmem:[%s1291 + $0x18] sm:$0xff] %vm1332, %v1315
        %1337 = vst.msk [vmem:[%s1291 + $0x20] sm:$0xff] %vm1332, %v1317
        %1338 = vst.msk [vmem:[%s1291 + $0x28] sm:$0xff] %vm1332, %v1319
        %1339 = vst.msk [vmem:[%s1291 + $0x30] sm:$0xff] %vm1332, %v1321
        %1340 = vst.msk [vmem:[%s1291 + $0x38] sm:$0xff] %vm1332, %v1323
        %v1341 = vrot.slane %v1267, 1
        %v1342 = vrot.slane %v1268, 1
        %v1343 = vrot.slane %v1269, 1
        %v1344 = vrot.slane %v1270, 1
        %v1345 = vrot.slane %v1271, 1
        %v1346 = vrot.slane %v1272, 1
        %v1347 = vrot.slane %v1273, 1
        %v1348 = vrot.slane %v1274, 1
        %vm1349 = vcmp.ge.s32.totalorder %v964, 7
        %v1350 = vsel %vm1349, 0.0, %v1341
        %v1351 = vsel %vm1349, 0.0, %v1342
        %v1352 = vsel %vm1349, 0.0, %v1343
        %v1353 = vsel %vm1349, 0.0, %v1344
        %v1354 = vsel %vm1349, 0.0, %v1345
        %v1355 = vsel %vm1349, 0.0, %v1346
        %v1356 = vsel %vm1349, 0.0, %v1347
        %v1357 = vsel %vm1349, 0.0, %v1348
        %1366 = vrot.lane.b32.xlu0 %v1350, 32
        %v1367 = vpop.permute.xlu0 %1366
        %1368 = vrot.lane.b32.xlu0 %v1351, 32
        %v1369 = vpop.permute.xlu0 %1368
        %1370 = vrot.lane.b32.xlu0 %v1352, 32
        %v1371 = vpop.permute.xlu0 %1370
        %1372 = vrot.lane.b32.xlu0 %v1353, 32
        %v1373 = vpop.permute.xlu0 %1372
        %1374 = vrot.lane.b32.xlu0 %v1354, 32
        %v1375 = vpop.permute.xlu0 %1374
        %1376 = vrot.lane.b32.xlu0 %v1355, 32
        %v1377 = vpop.permute.xlu0 %1376
        %1378 = vrot.lane.b32.xlu0 %v1356, 32
        %v1379 = vpop.permute.xlu0 %1378
        %1380 = vrot.lane.b32.xlu0 %v1357, 32
        %v1381 = vpop.permute.xlu0 %1380
        %vm1390 = vcmask 392448
        %1391 = vst.msk [vmem:[%s1291] sm:$0xff] %vm1390, %v1367
        %1392 = vst.msk [vmem:[%s1291 + $0x8] sm:$0xff] %vm1390, %v1369
        %1393 = vst.msk [vmem:[%s1291 + $0x10] sm:$0xff] %vm1390, %v1371
        %1394 = vst.msk [vmem:[%s1291 + $0x18] sm:$0xff] %vm1390, %v1373
        %1395 = vst.msk [vmem:[%s1291 + $0x20] sm:$0xff] %vm1390, %v1375
        %1396 = vst.msk [vmem:[%s1291 + $0x28] sm:$0xff] %vm1390, %v1377
        %1397 = vst.msk [vmem:[%s1291 + $0x30] sm:$0xff] %vm1390, %v1379
        %1398 = vst.msk [vmem:[%s1291 + $0x38] sm:$0xff] %vm1390, %v1381
        %v1399 = vld [vmem:[#allocation3] sm:$0xff]
        %v1400 = vld [vmem:[#allocation3 + $0x8] sm:$0xff]
        %v1401 = vld [vmem:[#allocation3 + $0x10] sm:$0xff]
        %v1402 = vld [vmem:[#allocation3 + $0x18] sm:$0xff]
        %v1403 = vld [vmem:[#allocation3 + $0x20] sm:$0xff]
        %v1404 = vld [vmem:[#allocation3 + $0x28] sm:$0xff]
        %v1405 = vld [vmem:[#allocation3 + $0x30] sm:$0xff]
        %v1406 = vld [vmem:[#allocation3 + $0x38] sm:$0xff]
        %v1407 = vpack.c.bf16 %v1400, %v1399
        %v1408 = vpack.c.bf16 %v1402, %v1401
        %v1409 = vpack.c.bf16 %v1404, %v1403
        %v1410 = vpack.c.bf16 %v1406, %v1405
        %v1411 = vld [vmem:[%s8] sm:$0xf]
        %v1412 = vld [vmem:[%s8 + $0x4] sm:$0xf]
        %v1413 = vld [vmem:[%s8 + $0x8] sm:$0xf]
        %v1414 = vld [vmem:[%s8 + $0xc] sm:$0xf]
        %v1415 = vld [vmem:[%s8 + $0x10] sm:$0xf]
        %v1416 = vld [vmem:[%s8 + $0x14] sm:$0xf]
        %v1417 = vld [vmem:[%s1291] sm:$0xff]
        %v1418 = vld [vmem:[%s1291 + $0x8] sm:$0xff]
        %v1419 = vld [vmem:[%s1291 + $0x10] sm:$0xff]
        %v1420 = vld [vmem:[%s1291 + $0x18] sm:$0xff]
        %v1421 = vld [vmem:[%s1291 + $0x20] sm:$0xff]
        %v1422 = vld [vmem:[%s1291 + $0x28] sm:$0xff]
        %v1423 = vld [vmem:[%s1291 + $0x30] sm:$0xff]
        %v1424 = vld [vmem:[%s1291 + $0x38] sm:$0xff]
        %v1425 = vpack.c.bf16 %v1418, %v1417
        %v1426 = vpack.c.bf16 %v1420, %v1419
        %v1427 = vpack.c.bf16 %v1422, %v1421
        %v1428 = vpack.c.bf16 %v1424, %v1423
        %s1429 = scalar_lea.vmem %s8, 24
        %v1430 = vld [vmem:[%s1429] sm:$0xf]
        %v1431 = vld [vmem:[%s1429 + $0x4] sm:$0xf]
        %v1432 = vld [vmem:[%s1429 + $0x8] sm:$0xf]
        %v1433 = vld [vmem:[%s1429 + $0xc] sm:$0xf]
        %v1434 = vld [vmem:[%s1429 + $0x10] sm:$0xf]
        %v1435 = vld [vmem:[%s1429 + $0x14] sm:$0xf]
        %v1442 = vunpack.c.l.b16 %v1430
        %v1443 = vunpack.c.l.b16 %v1431
        %v1444 = vunpack.c.l.b16 %v1432
        %v1445 = vunpack.c.l.b16 %v1433
        %v1446 = vunpack.c.l.b16 %v1434
        %v1447 = vunpack.c.l.b16 %v1435
        %v1448 = vpack.c.b16 %v1443, %v1442
        %v1449 = vpack.c.b16 %v1445, %v1444
        %v1450 = vpack.c.b16 %v1447, %v1446
        %v1455 = vsel %vm1047, %v1425, 0
        %v1458 = vsel %vm1047, %v1426, 0
        %v1461 = vsel %vm1047, %v1427, 0
        %v1464 = vsel %vm1047, %v1428, 0
        %1466 = vmatprep.subr.bf16.mxu0 0
        %1467 = vmatpush1.bf16.msra.mxu0 0
        %1468 = vmatprep.subr.bf16.mxu0 0
        %1469 = vmatpush1.bf16.msra.mxu0 0
        %1470 = vmatprep.subr.bf16.mxu0 0
        %1471 = vmatpush1.bf16.msra.mxu0 0
        %1472 = vmatprep.subr.bf16.mxu0 0
        %1473 = vmatpush1.bf16.msra.mxu0 0
        %1474 = vmatprep.subr.bf16.mxu0 0
        %1475 = vmatpush1.bf16.msra.mxu0 0
        %1476 = vmatprep.subr.bf16.mxu0 0
        %1477 = vmatpush1.bf16.msra.mxu0 %v1450
        %1478 = vmatprep.subr.bf16.mxu0 0
        %1479 = vmatpush1.bf16.msra.mxu0 %v1449
        %1480 = vmatprep.subr.bf16.mxu0 0
        %1481 = vmatpush1.bf16.msra.mxu0 %v1448
        %1482 = vmatprep.subr.bf16.mxu0 0
        %1483 = vmatpush2.bf16.msra.mxu0 0
        %1484 = vmatprep.subr.bf16.mxu0 0
        %1485 = vmatpush2.bf16.msra.mxu0 0
        %1486 = vmatprep.subr.bf16.mxu0 0
        %1487 = vmatpush2.bf16.msra.mxu0 0
        %1488 = vmatprep.subr.bf16.mxu0 0
        %1489 = vmatpush2.bf16.msra.mxu0 0
        %1490 = vmatprep.subr.bf16.mxu0 0
        %1491 = vmatpush2.bf16.msra.mxu0 0
        %1492 = vmatprep.subr.bf16.mxu0 0
        %1493 = vmatpush2.bf16.msra.mxu0 0
        %1494 = vmatprep.subr.bf16.mxu0 0
        %1495 = vmatpush2.bf16.msra.mxu0 0
        %1496 = vmatprep.subr.bf16.mxu0 0
        %1497 = vmatpush2.bf16.msra.mxu0 0
        %1498 = vmatprep.mubr.bf16.mxu0 0
        %1499 = vmatmul.mubr.bf16.gmra.mxu0 %v1455
        %v1500 = vpop.f32.mrf.mxu0
        %v1501 = vadd.f32 0.0, %v1500
        %v1502 = vpop.f32.mrf.mxu0
        %v1503 = vpop.f32.mrf.mxu0
        %v1504 = vadd.f32 0.0, %v1503
        %v1505 = vpop.f32.mrf.mxu0
        %1506 = vmatprep.mubr.bf16.mxu0 0
        %1507 = vmatmul.mubr.bf16.gmra.mxu0 %v1458
        %v1508 = vpop.f32.mrf.mxu0
        %v1509 = vadd.f32 0.0, %v1508
        %v1510 = vpop.f32.mrf.mxu0
        %v1511 = vpop.f32.mrf.mxu0
        %v1512 = vadd.f32 0.0, %v1511
        %v1513 = vpop.f32.mrf.mxu0
        %1514 = vmatprep.mubr.bf16.mxu0 0
        %1515 = vmatmul.mubr.bf16.gmra.mxu0 %v1461
        %v1516 = vpop.f32.mrf.mxu0
        %v1517 = vadd.f32 0.0, %v1516
        %v1518 = vpop.f32.mrf.mxu0
        %v1519 = vpop.f32.mrf.mxu0
        %v1520 = vadd.f32 0.0, %v1519
        %v1521 = vpop.f32.mrf.mxu0
        %1522 = vmatprep.mubr.bf16.mxu0 0
        %1523 = vmatmul.mubr.bf16.gmra.mxu0 %v1464
        %v1524 = vpop.f32.mrf.mxu0
        %v1525 = vadd.f32 0.0, %v1524
        %v1526 = vpop.f32.mrf.mxu0
        %v1527 = vpop.f32.mrf.mxu0
        %v1528 = vadd.f32 0.0, %v1527
        %v1529 = vpop.f32.mrf.mxu0
        %1530 = vdwg.mxu0
        %v1537 = vunpack.c.l.b16 %v1411
        %v1538 = vunpack.c.l.b16 %v1412
        %v1539 = vunpack.c.l.b16 %v1413
        %v1540 = vunpack.c.l.b16 %v1414
        %v1541 = vunpack.c.l.b16 %v1415
        %v1542 = vunpack.c.l.b16 %v1416
        %v1543 = vpack.c.b16 %v1538, %v1537
        %v1544 = vpack.c.b16 %v1540, %v1539
        %v1545 = vpack.c.b16 %v1542, %v1541
        %v1550 = vsel %vm1047, %v1407, 0
        %v1553 = vsel %vm1047, %v1408, 0
        %v1556 = vsel %vm1047, %v1409, 0
        %v1559 = vsel %vm1047, %v1410, 0
        %1561 = vmatprep.subr.bf16.mxu0 0
        %1562 = vmatpush1.bf16.msra.mxu0 0
        %1563 = vmatprep.subr.bf16.mxu0 0
        %1564 = vmatpush1.bf16.msra.mxu0 0
        %1565 = vmatprep.subr.bf16.mxu0 0
        %1566 = vmatpush1.bf16.msra.mxu0 0
        %1567 = vmatprep.subr.bf16.mxu0 0
        %1568 = vmatpush1.bf16.msra.mxu0 0
        %1569 = vmatprep.subr.bf16.mxu0 0
        %1570 = vmatpush1.bf16.msra.mxu0 0
        %1571 = vmatprep.subr.bf16.mxu0 0
        %1572 = vmatpush1.bf16.msra.mxu0 %v1545
        %1573 = vmatprep.subr.bf16.mxu0 0
        %1574 = vmatpush1.bf16.msra.mxu0 %v1544
        %1575 = vmatprep.subr.bf16.mxu0 0
        %1576 = vmatpush1.bf16.msra.mxu0 %v1543
        %1577 = vmatprep.subr.bf16.mxu0 0
        %1578 = vmatpush2.bf16.msra.mxu0 0
        %1579 = vmatprep.subr.bf16.mxu0 0
        %1580 = vmatpush2.bf16.msra.mxu0 0
        %1581 = vmatprep.subr.bf16.mxu0 0
        %1582 = vmatpush2.bf16.msra.mxu0 0
        %1583 = vmatprep.subr.bf16.mxu0 0
        %1584 = vmatpush2.bf16.msra.mxu0 0
        %1585 = vmatprep.subr.bf16.mxu0 0
        %1586 = vmatpush2.bf16.msra.mxu0 0
        %1587 = vmatprep.subr.bf16.mxu0 0
        %1588 = vmatpush2.bf16.msra.mxu0 0
        %1589 = vmatprep.subr.bf16.mxu0 0
        %1590 = vmatpush2.bf16.msra.mxu0 0
        %1591 = vmatprep.subr.bf16.mxu0 0
        %1592 = vmatpush2.bf16.msra.mxu0 0
        %1593 = vmatprep.mubr.bf16.mxu0 0
        %1594 = vmatmul.mubr.bf16.gmra.mxu0 %v1550
        %v1595 = vpop.f32.mrf.mxu0
        %v1596 = vadd.f32 %v1501, %v1595
        %v1597 = vpop.f32.mrf.mxu0
        %v1598 = vpop.f32.mrf.mxu0
        %v1599 = vadd.f32 %v1504, %v1598
        %v1600 = vpop.f32.mrf.mxu0
        %1601 = vmatprep.mubr.bf16.mxu0 0
        %1602 = vmatmul.mubr.bf16.gmra.mxu0 %v1553
        %v1603 = vpop.f32.mrf.mxu0
        %v1604 = vadd.f32 %v1509, %v1603
        %v1605 = vpop.f32.mrf.mxu0
        %v1606 = vpop.f32.mrf.mxu0
        %v1607 = vadd.f32 %v1512, %v1606
        %v1608 = vpop.f32.mrf.mxu0
        %1609 = vmatprep.mubr.bf16.mxu0 0
        %1610 = vmatmul.mubr.bf16.gmra.mxu0 %v1556
        %v1611 = vpop.f32.mrf.mxu0
        %v1612 = vadd.f32 %v1517, %v1611
        %v1613 = vpop.f32.mrf.mxu0
        %v1614 = vpop.f32.mrf.mxu0
        %v1615 = vadd.f32 %v1520, %v1614
        %v1616 = vpop.f32.mrf.mxu0
        %1617 = vmatprep.mubr.bf16.mxu0 0
        %1618 = vmatmul.mubr.bf16.gmra.mxu0 %v1559
        %v1619 = vpop.f32.mrf.mxu0
        %v1620 = vadd.f32 %v1525, %v1619
        %v1621 = vpop.f32.mrf.mxu0
        %v1622 = vpop.f32.mrf.mxu0
        %v1623 = vadd.f32 %v1528, %v1622
        %v1624 = vpop.f32.mrf.mxu0
        %1625 = vdwg.mxu0
        %s1626 = scalar_lea.vmem [#allocation3], 16
        %v1627 = vld [vmem:[%s1626] sm:$0xff]
        %v1628 = vld [vmem:[%s1626 + $0x8] sm:$0xff]
        %v1629 = vld [vmem:[%s1626 + $0x10] sm:$0xff]
        %v1630 = vld [vmem:[%s1626 + $0x18] sm:$0xff]
        %v1631 = vld [vmem:[%s1626 + $0x20] sm:$0xff]
        %v1632 = vld [vmem:[%s1626 + $0x28] sm:$0xff]
        %v1633 = vld [vmem:[%s1626 + $0x30] sm:$0xff]
        %v1634 = vld [vmem:[%s1626 + $0x38] sm:$0xff]
        %v1635 = vpack.c.bf16 %v1628, %v1627
        %v1636 = vpack.c.bf16 %v1630, %v1629
        %v1637 = vpack.c.bf16 %v1632, %v1631
        %v1638 = vpack.c.bf16 %v1634, %v1633
        %s1639 = scalar_lea.vmem %s8, 48
        %v1640 = vld [vmem:[%s1639] sm:$0xf]
        %v1641 = vld [vmem:[%s1639 + $0x4] sm:$0xf]
        %v1642 = vld [vmem:[%s1639 + $0x8] sm:$0xf]
        %v1643 = vld [vmem:[%s1639 + $0xc] sm:$0xf]
        %v1644 = vld [vmem:[%s1639 + $0x10] sm:$0xf]
        %v1645 = vld [vmem:[%s1639 + $0x14] sm:$0xf]
        %v1652 = vunpack.c.l.b16 %v1640
        %v1653 = vunpack.c.l.b16 %v1641
        %v1654 = vunpack.c.l.b16 %v1642
        %v1655 = vunpack.c.l.b16 %v1643
        %v1656 = vunpack.c.l.b16 %v1644
        %v1657 = vunpack.c.l.b16 %v1645
        %v1658 = vpack.c.b16 %v1653, %v1652
        %v1659 = vpack.c.b16 %v1655, %v1654
        %v1660 = vpack.c.b16 %v1657, %v1656
        %v1665 = vsel %vm1047, %v1635, 0
        %v1668 = vsel %vm1047, %v1636, 0
        %v1671 = vsel %vm1047, %v1637, 0
        %v1674 = vsel %vm1047, %v1638, 0
        %1676 = vmatprep.subr.bf16.mxu0 0
        %1677 = vmatpush1.bf16.msra.mxu0 0
        %1678 = vmatprep.subr.bf16.mxu0 0
        %1679 = vmatpush1.bf16.msra.mxu0 0
        %1680 = vmatprep.subr.bf16.mxu0 0
        %1681 = vmatpush1.bf16.msra.mxu0 0
        %1682 = vmatprep.subr.bf16.mxu0 0
        %1683 = vmatpush1.bf16.msra.mxu0 0
        %1684 = vmatprep.subr.bf16.mxu0 0
        %1685 = vmatpush1.bf16.msra.mxu0 0
        %1686 = vmatprep.subr.bf16.mxu0 0
        %1687 = vmatpush1.bf16.msra.mxu0 %v1660
        %1688 = vmatprep.subr.bf16.mxu0 0
        %1689 = vmatpush1.bf16.msra.mxu0 %v1659
        %1690 = vmatprep.subr.bf16.mxu0 0
        %1691 = vmatpush1.bf16.msra.mxu0 %v1658
        %1692 = vmatprep.subr.bf16.mxu0 0
        %1693 = vmatpush2.bf16.msra.mxu0 0
        %1694 = vmatprep.subr.bf16.mxu0 0
        %1695 = vmatpush2.bf16.msra.mxu0 0
        %1696 = vmatprep.subr.bf16.mxu0 0
        %1697 = vmatpush2.bf16.msra.mxu0 0
        %1698 = vmatprep.subr.bf16.mxu0 0
        %1699 = vmatpush2.bf16.msra.mxu0 0
        %1700 = vmatprep.subr.bf16.mxu0 0
        %1701 = vmatpush2.bf16.msra.mxu0 0
        %1702 = vmatprep.subr.bf16.mxu0 0
        %1703 = vmatpush2.bf16.msra.mxu0 0
        %1704 = vmatprep.subr.bf16.mxu0 0
        %1705 = vmatpush2.bf16.msra.mxu0 0
        %1706 = vmatprep.subr.bf16.mxu0 0
        %1707 = vmatpush2.bf16.msra.mxu0 0
        %1708 = vmatprep.mubr.bf16.mxu0 0
        %1709 = vmatmul.mubr.bf16.gmra.mxu0 %v1665
        %v1710 = vpop.f32.mrf.mxu0
        %v1711 = vadd.f32 0.0, %v1710
        %v1712 = vpop.f32.mrf.mxu0
        %v1713 = vpop.f32.mrf.mxu0
        %v1714 = vadd.f32 0.0, %v1713
        %v1715 = vpop.f32.mrf.mxu0
        %1716 = vmatprep.mubr.bf16.mxu0 0
        %1717 = vmatmul.mubr.bf16.gmra.mxu0 %v1668
        %v1718 = vpop.f32.mrf.mxu0
        %v1719 = vadd.f32 0.0, %v1718
        %v1720 = vpop.f32.mrf.mxu0
        %v1721 = vpop.f32.mrf.mxu0
        %v1722 = vadd.f32 0.0, %v1721
        %v1723 = vpop.f32.mrf.mxu0
        %1724 = vmatprep.mubr.bf16.mxu0 0
        %1725 = vmatmul.mubr.bf16.gmra.mxu0 %v1671
        %v1726 = vpop.f32.mrf.mxu0
        %v1727 = vadd.f32 0.0, %v1726
        %v1728 = vpop.f32.mrf.mxu0
        %v1729 = vpop.f32.mrf.mxu0
        %v1730 = vadd.f32 0.0, %v1729
        %v1731 = vpop.f32.mrf.mxu0
        %1732 = vmatprep.mubr.bf16.mxu0 0
        %1733 = vmatmul.mubr.bf16.gmra.mxu0 %v1674
        %v1734 = vpop.f32.mrf.mxu0
        %v1735 = vadd.f32 0.0, %v1734
        %v1736 = vpop.f32.mrf.mxu0
        %v1737 = vpop.f32.mrf.mxu0
        %v1738 = vadd.f32 0.0, %v1737
        %v1739 = vpop.f32.mrf.mxu0
        %1740 = vdwg.mxu0
        %v1741 = vadd.f32 %v1596, %v1711
        %v1742 = vadd.f32 %v1599, %v1714
        %v1743 = vadd.f32 %v1604, %v1719
        %v1744 = vadd.f32 %v1607, %v1722
        %v1745 = vadd.f32 %v1612, %v1727
        %v1746 = vadd.f32 %v1615, %v1730
        %v1747 = vadd.f32 %v1620, %v1735
        %v1748 = vadd.f32 %v1623, %v1738
        %1757 = vrot.lane.b32.xlu0 %v1741, 16
        %v1758 = vpop.permute.xlu0 %1757
        %1759 = vrot.lane.b32.xlu0 %v1742, 16
        %v1760 = vpop.permute.xlu0 %1759
        %1761 = vrot.lane.b32.xlu0 %v1743, 16
        %v1762 = vpop.permute.xlu0 %1761
        %1763 = vrot.lane.b32.xlu0 %v1744, 16
        %v1764 = vpop.permute.xlu0 %1763
        %1765 = vrot.lane.b32.xlu0 %v1745, 16
        %v1766 = vpop.permute.xlu0 %1765
        %1767 = vrot.lane.b32.xlu0 %v1746, 16
        %v1768 = vpop.permute.xlu0 %1767
        %1769 = vrot.lane.b32.xlu0 %v1747, 16
        %v1770 = vpop.permute.xlu0 %1769
        %1771 = vrot.lane.b32.xlu0 %v1748, 16
        %v1772 = vpop.permute.xlu0 %1771
        %vm1781 = vcmask 195712
        %1782 = vst.msk [vmem:[#allocation2] sm:$0xff] %vm1781, %v1758
        %1783 = vst.msk [vmem:[#allocation2 + $0x8] sm:$0xff] %vm1781, %v1760
        %1784 = vst.msk [vmem:[#allocation2 + $0x10] sm:$0xff] %vm1781, %v1762
        %1785 = vst.msk [vmem:[#allocation2 + $0x18] sm:$0xff] %vm1781, %v1764
        %1786 = vst.msk [vmem:[#allocation2 + $0x20] sm:$0xff] %vm1781, %v1766
        %1787 = vst.msk [vmem:[#allocation2 + $0x28] sm:$0xff] %vm1781, %v1768
        %1788 = vst.msk [vmem:[#allocation2 + $0x30] sm:$0xff] %vm1781, %v1770
        %1789 = vst.msk [vmem:[#allocation2 + $0x38] sm:$0xff] %vm1781, %v1772
        %v1790 = vld [vmem:[#allocation2] sm:$0xff]
        %v1791 = vld [vmem:[#allocation2 + $0x8] sm:$0xff]
        %v1792 = vld [vmem:[#allocation2 + $0x10] sm:$0xff]
        %v1793 = vld [vmem:[#allocation2 + $0x18] sm:$0xff]
        %v1794 = vld [vmem:[#allocation2 + $0x20] sm:$0xff]
        %v1795 = vld [vmem:[#allocation2 + $0x28] sm:$0xff]
        %v1796 = vld [vmem:[#allocation2 + $0x30] sm:$0xff]
        %v1797 = vld [vmem:[#allocation2 + $0x38] sm:$0xff]
        %s1798 = scalar_lea.vmem %s3, 1
        %v1799 = vld [vmem:[%s1798] sm:$0x1]
        %v1801 = vlaneseq
        %v1802 = vshrl.u32 %v1801, 7
        %v1803 = vsub.s32 0, %v1802
        %v1804 = vrot.slane %v1799, %v1803
        %v1806 = vmul.f32 %v1790, %v1804
        %v1807 = vmul.f32 %v1791, %v1804
        %v1808 = vmul.f32 %v1792, %v1804
        %v1809 = vmul.f32 %v1793, %v1804
        %v1810 = vmul.f32 %v1794, %v1804
        %v1811 = vmul.f32 %v1795, %v1804
        %v1812 = vmul.f32 %v1796, %v1804
        %v1813 = vmul.f32 %v1797, %v1804
        %s1814 = scalar_lea.vmem %s4, 1
        %v1815 = vld [vmem:[%s1814] sm:$0x1]
        %v1817 = vlaneseq
        %v1818 = vshrl.u32 %v1817, 7
        %v1819 = vsub.s32 0, %v1818
        %v1820 = vrot.slane %v1815, %v1819
        %v1822 = vadd.f32 %v1806, %v1820
        %v1823 = vadd.f32 %v1807, %v1820
        %v1824 = vadd.f32 %v1808, %v1820
        %v1825 = vadd.f32 %v1809, %v1820
        %v1826 = vadd.f32 %v1810, %v1820
        %v1827 = vadd.f32 %v1811, %v1820
        %v1828 = vadd.f32 %v1812, %v1820
        %v1829 = vadd.f32 %v1813, %v1820
        %v1830 = vmax.f32 %v1822, 0.0
        %v1831 = vmax.f32 %v1823, 0.0
        %v1832 = vmax.f32 %v1824, 0.0
        %v1833 = vmax.f32 %v1825, 0.0
        %v1834 = vmax.f32 %v1826, 0.0
        %v1835 = vmax.f32 %v1827, 0.0
        %v1836 = vmax.f32 %v1828, 0.0
        %v1837 = vmax.f32 %v1829, 0.0
        %v1838 = vpack.c.bf16 %v1831, %v1830
        %v1839 = vpack.c.bf16 %v1833, %v1832
        %v1840 = vpack.c.bf16 %v1835, %v1834
        %v1841 = vpack.c.bf16 %v1837, %v1836
        %s1842 = scalar_lea.vmem %s5, 64
        %v1843 = vld [vmem:[%s1842] sm:$0xf]
        %v1844 = vld [vmem:[%s1842 + $0x4] sm:$0xf]
        %v1845 = vld [vmem:[%s1842 + $0x8] sm:$0xf]
        %v1846 = vld [vmem:[%s1842 + $0xc] sm:$0xf]
        %v1847 = vld [vmem:[%s1842 + $0x10] sm:$0xf]
        %v1848 = vld [vmem:[%s1842 + $0x14] sm:$0xf]
        %v1849 = vld [vmem:[%s1842 + $0x18] sm:$0xf]
        %v1850 = vld [vmem:[%s1842 + $0x1c] sm:$0xf]
        %v1851 = vld [vmem:[%s1842 + $0x20] sm:$0xf]
        %v1852 = vld [vmem:[%s1842 + $0x24] sm:$0xf]
        %v1853 = vld [vmem:[%s1842 + $0x28] sm:$0xf]
        %v1854 = vld [vmem:[%s1842 + $0x2c] sm:$0xf]
        %v1855 = vld [vmem:[%s1842 + $0x30] sm:$0xf]
        %v1856 = vld [vmem:[%s1842 + $0x34] sm:$0xf]
        %v1857 = vld [vmem:[%s1842 + $0x38] sm:$0xf]
        %v1858 = vld [vmem:[%s1842 + $0x3c] sm:$0xf]
        %v1875 = vunpack.c.l.b16 %v1843
        %v1876 = vunpack.c.l.b16 %v1844
        %v1877 = vunpack.c.l.b16 %v1845
        %v1878 = vunpack.c.l.b16 %v1846
        %v1879 = vunpack.c.l.b16 %v1847
        %v1880 = vunpack.c.l.b16 %v1848
        %v1881 = vunpack.c.l.b16 %v1849
        %v1882 = vunpack.c.l.b16 %v1850
        %v1883 = vunpack.c.l.b16 %v1851
        %v1884 = vunpack.c.l.b16 %v1852
        %v1885 = vunpack.c.l.b16 %v1853
        %v1886 = vunpack.c.l.b16 %v1854
        %v1887 = vunpack.c.l.b16 %v1855
        %v1888 = vunpack.c.l.b16 %v1856
        %v1889 = vunpack.c.l.b16 %v1857
        %v1890 = vunpack.c.l.b16 %v1858
        %v1891 = vpack.c.b16 %v1876, %v1875
        %v1892 = vpack.c.b16 %v1878, %v1877
        %v1893 = vpack.c.b16 %v1880, %v1879
        %v1894 = vpack.c.b16 %v1882, %v1881
        %v1895 = vpack.c.b16 %v1884, %v1883
        %v1896 = vpack.c.b16 %v1886, %v1885
        %v1897 = vpack.c.b16 %v1888, %v1887
        %v1898 = vpack.c.b16 %v1890, %v1889
        %1907 = vmatprep.subr.bf16.mxu0 0
        %1908 = vmatpush1.bf16.msra.mxu0 %v1898
        %1909 = vmatprep.subr.bf16.mxu0 0
        %1910 = vmatpush1.bf16.msra.mxu0 %v1897
        %1911 = vmatprep.subr.bf16.mxu0 0
        %1912 = vmatpush1.bf16.msra.mxu0 %v1896
        %1913 = vmatprep.subr.bf16.mxu0 0
        %1914 = vmatpush1.bf16.msra.mxu0 %v1895
        %1915 = vmatprep.subr.bf16.mxu0 0
        %1916 = vmatpush1.bf16.msra.mxu0 %v1894
        %1917 = vmatprep.subr.bf16.mxu0 0
        %1918 = vmatpush1.bf16.msra.mxu0 %v1893
        %1919 = vmatprep.subr.bf16.mxu0 0
        %1920 = vmatpush1.bf16.msra.mxu0 %v1892
        %1921 = vmatprep.subr.bf16.mxu0 0
        %1922 = vmatpush1.bf16.msra.mxu0 %v1891
        %1923 = vmatprep.subr.bf16.mxu0 0
        %1924 = vmatpush2.bf16.msra.mxu0 0
        %1925 = vmatprep.subr.bf16.mxu0 0
        %1926 = vmatpush2.bf16.msra.mxu0 0
        %1927 = vmatprep.subr.bf16.mxu0 0
        %1928 = vmatpush2.bf16.msra.mxu0 0
        %1929 = vmatprep.subr.bf16.mxu0 0
        %1930 = vmatpush2.bf16.msra.mxu0 0
        %1931 = vmatprep.subr.bf16.mxu0 0
        %1932 = vmatpush2.bf16.msra.mxu0 0
        %1933 = vmatprep.subr.bf16.mxu0 0
        %1934 = vmatpush2.bf16.msra.mxu0 0
        %1935 = vmatprep.subr.bf16.mxu0 0
        %1936 = vmatpush2.bf16.msra.mxu0 0
        %1937 = vmatprep.subr.bf16.mxu0 0
        %1938 = vmatpush2.bf16.msra.mxu0 0
        %1939 = vmatprep.mubr.bf16.mxu0 0
        %1940 = vmatmul.mubr.bf16.gmra.mxu0 %v1838
        %v1941 = vpop.f32.mrf.mxu0
        %v1942 = vadd.f32 0.0, %v1941
        %v1943 = vpop.f32.mrf.mxu0
        %v1944 = vpop.f32.mrf.mxu0
        %v1945 = vadd.f32 0.0, %v1944
        %v1946 = vpop.f32.mrf.mxu0
        %1947 = vmatprep.mubr.bf16.mxu0 0
        %1948 = vmatmul.mubr.bf16.gmra.mxu0 %v1839
        %v1949 = vpop.f32.mrf.mxu0
        %v1950 = vadd.f32 0.0, %v1949
        %v1951 = vpop.f32.mrf.mxu0
        %v1952 = vpop.f32.mrf.mxu0
        %v1953 = vadd.f32 0.0, %v1952
        %v1954 = vpop.f32.mrf.mxu0
        %1955 = vmatprep.mubr.bf16.mxu0 0
        %1956 = vmatmul.mubr.bf16.gmra.mxu0 %v1840
        %v1957 = vpop.f32.mrf.mxu0
        %v1958 = vadd.f32 0.0, %v1957
        %v1959 = vpop.f32.mrf.mxu0
        %v1960 = vpop.f32.mrf.mxu0
        %v1961 = vadd.f32 0.0, %v1960
        %v1962 = vpop.f32.mrf.mxu0
        %1963 = vmatprep.mubr.bf16.mxu0 0
        %1964 = vmatmul.mubr.bf16.gmra.mxu0 %v1841
        %v1965 = vpop.f32.mrf.mxu0
        %v1966 = vadd.f32 0.0, %v1965
        %v1967 = vpop.f32.mrf.mxu0
        %v1968 = vpop.f32.mrf.mxu0
        %v1969 = vadd.f32 0.0, %v1968
        %v1970 = vpop.f32.mrf.mxu0
        %1971 = vdwg.mxu0
        %s1972 = scalar_lea.vmem %s6, 1
        %v1973 = vld [vmem:[%s1972] sm:$0x1]
        %v1975 = vlaneseq
        %v1976 = vshrl.u32 %v1975, 7
        %v1977 = vsub.s32 0, %v1976
        %v1978 = vrot.slane %v1973, %v1977
        %v1980 = vmul.f32 %v1942, %v1978
        %v1981 = vmul.f32 %v1945, %v1978
        %v1982 = vmul.f32 %v1950, %v1978
        %v1983 = vmul.f32 %v1953, %v1978
        %v1984 = vmul.f32 %v1958, %v1978
        %v1985 = vmul.f32 %v1961, %v1978
        %v1986 = vmul.f32 %v1966, %v1978
        %v1987 = vmul.f32 %v1969, %v1978
        %s1988 = scalar_lea.vmem %s7, 1
        %v1989 = vld [vmem:[%s1988] sm:$0x1]
        %v1991 = vlaneseq
        %v1992 = vshrl.u32 %v1991, 7
        %v1993 = vsub.s32 0, %v1992
        %v1994 = vrot.slane %v1989, %v1993
        %v1996 = vadd.f32 %v1980, %v1994
        %v1997 = vadd.f32 %v1981, %v1994
        %v1998 = vadd.f32 %v1982, %v1994
        %v1999 = vadd.f32 %v1983, %v1994
        %v2000 = vadd.f32 %v1984, %v1994
        %v2001 = vadd.f32 %v1985, %v1994
        %v2002 = vadd.f32 %v1986, %v1994
        %v2003 = vadd.f32 %v1987, %v1994
        %v2004 = vmax.f32 %v1996, 0.0
        %v2005 = vmax.f32 %v1997, 0.0
        %v2006 = vmax.f32 %v1998, 0.0
        %v2007 = vmax.f32 %v1999, 0.0
        %v2008 = vmax.f32 %v2000, 0.0
        %v2009 = vmax.f32 %v2001, 0.0
        %v2010 = vmax.f32 %v2002, 0.0
        %v2011 = vmax.f32 %v2003, 0.0
        %v2012 = vrot.slane %v2004, 7
        %v2013 = vrot.slane %v2005, 7
        %v2014 = vrot.slane %v2006, 7
        %v2015 = vrot.slane %v2007, 7
        %v2016 = vrot.slane %v2008, 7
        %v2017 = vrot.slane %v2009, 7
        %v2018 = vrot.slane %v2010, 7
        %v2019 = vrot.slane %v2011, 7
        %v2020 = vsel %vm965, 0.0, %v2012
        %v2021 = vsel %vm965, 0.0, %v2013
        %v2022 = vsel %vm965, 0.0, %v2014
        %v2023 = vsel %vm965, 0.0, %v2015
        %v2024 = vsel %vm965, 0.0, %v2016
        %v2025 = vsel %vm965, 0.0, %v2017
        %v2026 = vsel %vm965, 0.0, %v2018
        %v2027 = vsel %vm965, 0.0, %v2019
        %2028 = vst.msk [vmem:[%s1291] sm:$0xff] %vm1038, %v2020
        %2029 = vst.msk [vmem:[%s1291 + $0x8] sm:$0xff] %vm1038, %v2021
        %2030 = vst.msk [vmem:[%s1291 + $0x10] sm:$0xff] %vm1038, %v2022
        %2031 = vst.msk [vmem:[%s1291 + $0x18] sm:$0xff] %vm1038, %v2023
        %2032 = vst.msk [vmem:[%s1291 + $0x20] sm:$0xff] %vm1038, %v2024
        %2033 = vst.msk [vmem:[%s1291 + $0x28] sm:$0xff] %vm1038, %v2025
        %2034 = vst.msk [vmem:[%s1291 + $0x30] sm:$0xff] %vm1038, %v2026
        %2035 = vst.msk [vmem:[%s1291 + $0x38] sm:$0xff] %vm1038, %v2027
        %2044 = vrot.lane.b32.xlu0 %v2004, 16
        %v2045 = vpop.permute.xlu0 %2044
        %2046 = vrot.lane.b32.xlu0 %v2005, 16
        %v2047 = vpop.permute.xlu0 %2046
        %2048 = vrot.lane.b32.xlu0 %v2006, 16
        %v2049 = vpop.permute.xlu0 %2048
        %2050 = vrot.lane.b32.xlu0 %v2007, 16
        %v2051 = vpop.permute.xlu0 %2050
        %2052 = vrot.lane.b32.xlu0 %v2008, 16
        %v2053 = vpop.permute.xlu0 %2052
        %2054 = vrot.lane.b32.xlu0 %v2009, 16
        %v2055 = vpop.permute.xlu0 %2054
        %2056 = vrot.lane.b32.xlu0 %v2010, 16
        %v2057 = vpop.permute.xlu0 %2056
        %2058 = vrot.lane.b32.xlu0 %v2011, 16
        %v2059 = vpop.permute.xlu0 %2058
        %2068 = vst.msk [vmem:[%s1291] sm:$0xff] %vm1332, %v2045
        %2069 = vst.msk [vmem:[%s1291 + $0x8] sm:$0xff] %vm1332, %v2047
        %2070 = vst.msk [vmem:[%s1291 + $0x10] sm:$0xff] %vm1332, %v2049
        %2071 = vst.msk [vmem:[%s1291 + $0x18] sm:$0xff] %vm1332, %v2051
        %2072 = vst.msk [vmem:[%s1291 + $0x20] sm:$0xff] %vm1332, %v2053
        %2073 = vst.msk [vmem:[%s1291 + $0x28] sm:$0xff] %vm1332, %v2055
        %2074 = vst.msk [vmem:[%s1291 + $0x30] sm:$0xff] %vm1332, %v2057
        %2075 = vst.msk [vmem:[%s1291 + $0x38] sm:$0xff] %vm1332, %v2059
        %v2076 = vrot.slane %v2004, 1
        %v2077 = vrot.slane %v2005, 1
        %v2078 = vrot.slane %v2006, 1
        %v2079 = vrot.slane %v2007, 1
        %v2080 = vrot.slane %v2008, 1
        %v2081 = vrot.slane %v2009, 1
        %v2082 = vrot.slane %v2010, 1
        %v2083 = vrot.slane %v2011, 1
        %v2084 = vsel %vm1349, 0.0, %v2076
        %v2085 = vsel %vm1349, 0.0, %v2077
        %v2086 = vsel %vm1349, 0.0, %v2078
        %v2087 = vsel %vm1349, 0.0, %v2079
        %v2088 = vsel %vm1349, 0.0, %v2080
        %v2089 = vsel %vm1349, 0.0, %v2081
        %v2090 = vsel %vm1349, 0.0, %v2082
        %v2091 = vsel %vm1349, 0.0, %v2083
        %2100 = vrot.lane.b32.xlu0 %v2084, 32
        %v2101 = vpop.permute.xlu0 %2100
        %2102 = vrot.lane.b32.xlu0 %v2085, 32
        %v2103 = vpop.permute.xlu0 %2102
        %2104 = vrot.lane.b32.xlu0 %v2086, 32
        %v2105 = vpop.permute.xlu0 %2104
        %2106 = vrot.lane.b32.xlu0 %v2087, 32
        %v2107 = vpop.permute.xlu0 %2106
        %2108 = vrot.lane.b32.xlu0 %v2088, 32
        %v2109 = vpop.permute.xlu0 %2108
        %2110 = vrot.lane.b32.xlu0 %v2089, 32
        %v2111 = vpop.permute.xlu0 %2110
        %2112 = vrot.lane.b32.xlu0 %v2090, 32
        %v2113 = vpop.permute.xlu0 %2112
        %2114 = vrot.lane.b32.xlu0 %v2091, 32
        %v2115 = vpop.permute.xlu0 %2114
        %2124 = vst.msk [vmem:[%s1291] sm:$0xff] %vm1390, %v2101
        %2125 = vst.msk [vmem:[%s1291 + $0x8] sm:$0xff] %vm1390, %v2103
        %2126 = vst.msk [vmem:[%s1291 + $0x10] sm:$0xff] %vm1390, %v2105
        %2127 = vst.msk [vmem:[%s1291 + $0x18] sm:$0xff] %vm1390, %v2107
        %2128 = vst.msk [vmem:[%s1291 + $0x20] sm:$0xff] %vm1390, %v2109
        %2129 = vst.msk [vmem:[%s1291 + $0x28] sm:$0xff] %vm1390, %v2111
        %2130 = vst.msk [vmem:[%s1291 + $0x30] sm:$0xff] %vm1390, %v2113
        %2131 = vst.msk [vmem:[%s1291 + $0x38] sm:$0xff] %vm1390, %v2115
        %v2132 = vld [vmem:[#allocation3] sm:$0xff]
        %v2133 = vld [vmem:[#allocation3 + $0x8] sm:$0xff]
        %v2134 = vld [vmem:[#allocation3 + $0x10] sm:$0xff]
        %v2135 = vld [vmem:[#allocation3 + $0x18] sm:$0xff]
        %v2136 = vld [vmem:[#allocation3 + $0x20] sm:$0xff]
        %v2137 = vld [vmem:[#allocation3 + $0x28] sm:$0xff]
        %v2138 = vld [vmem:[#allocation3 + $0x30] sm:$0xff]
        %v2139 = vld [vmem:[#allocation3 + $0x38] sm:$0xff]
        %v2140 = vpack.c.bf16 %v2133, %v2132
        %v2141 = vpack.c.bf16 %v2135, %v2134
        %v2142 = vpack.c.bf16 %v2137, %v2136
        %v2143 = vpack.c.bf16 %v2139, %v2138
        %s2144 = scalar_lea.vmem %s8, 72
        %v2145 = vld [vmem:[%s2144] sm:$0xf]
        %v2146 = vld [vmem:[%s2144 + $0x4] sm:$0xf]
        %v2147 = vld [vmem:[%s2144 + $0x8] sm:$0xf]
        %v2148 = vld [vmem:[%s2144 + $0xc] sm:$0xf]
        %v2149 = vld [vmem:[%s2144 + $0x10] sm:$0xf]
        %v2150 = vld [vmem:[%s2144 + $0x14] sm:$0xf]
        %v2151 = vld [vmem:[%s1291] sm:$0xff]
        %v2152 = vld [vmem:[%s1291 + $0x8] sm:$0xff]
        %v2153 = vld [vmem:[%s1291 + $0x10] sm:$0xff]
        %v2154 = vld [vmem:[%s1291 + $0x18] sm:$0xff]
        %v2155 = vld [vmem:[%s1291 + $0x20] sm:$0xff]
        %v2156 = vld [vmem:[%s1291 + $0x28] sm:$0xff]
        %v2157 = vld [vmem:[%s1291 + $0x30] sm:$0xff]
        %v2158 = vld [vmem:[%s1291 + $0x38] sm:$0xff]
        %v2159 = vpack.c.bf16 %v2152, %v2151
        %v2160 = vpack.c.bf16 %v2154, %v2153
        %v2161 = vpack.c.bf16 %v2156, %v2155
        %v2162 = vpack.c.bf16 %v2158, %v2157
        %s2163 = scalar_lea.vmem %s8, 96
        %v2164 = vld [vmem:[%s2163] sm:$0xf]
        %v2165 = vld [vmem:[%s2163 + $0x4] sm:$0xf]
        %v2166 = vld [vmem:[%s2163 + $0x8] sm:$0xf]
        %v2167 = vld [vmem:[%s2163 + $0xc] sm:$0xf]
        %v2168 = vld [vmem:[%s2163 + $0x10] sm:$0xf]
        %v2169 = vld [vmem:[%s2163 + $0x14] sm:$0xf]
        %v2176 = vunpack.c.l.b16 %v2164
        %v2177 = vunpack.c.l.b16 %v2165
        %v2178 = vunpack.c.l.b16 %v2166
        %v2179 = vunpack.c.l.b16 %v2167
        %v2180 = vunpack.c.l.b16 %v2168
        %v2181 = vunpack.c.l.b16 %v2169
        %v2182 = vpack.c.b16 %v2177, %v2176
        %v2183 = vpack.c.b16 %v2179, %v2178
        %v2184 = vpack.c.b16 %v2181, %v2180
        %v2189 = vsel %vm1047, %v2159, 0
        %v2192 = vsel %vm1047, %v2160, 0
        %v2195 = vsel %vm1047, %v2161, 0
        %v2198 = vsel %vm1047, %v2162, 0
        %2200 = vmatprep.subr.bf16.mxu0 0
        %2201 = vmatpush1.bf16.msra.mxu0 0
        %2202 = vmatprep.subr.bf16.mxu0 0
        %2203 = vmatpush1.bf16.msra.mxu0 0
        %2204 = vmatprep.subr.bf16.mxu0 0
        %2205 = vmatpush1.bf16.msra.mxu0 0
        %2206 = vmatprep.subr.bf16.mxu0 0
        %2207 = vmatpush1.bf16.msra.mxu0 0
        %2208 = vmatprep.subr.bf16.mxu0 0
        %2209 = vmatpush1.bf16.msra.mxu0 0
        %2210 = vmatprep.subr.bf16.mxu0 0
        %2211 = vmatpush1.bf16.msra.mxu0 %v2184
        %2212 = vmatprep.subr.bf16.mxu0 0
        %2213 = vmatpush1.bf16.msra.mxu0 %v2183
        %2214 = vmatprep.subr.bf16.mxu0 0
        %2215 = vmatpush1.bf16.msra.mxu0 %v2182
        %2216 = vmatprep.subr.bf16.mxu0 0
        %2217 = vmatpush2.bf16.msra.mxu0 0
        %2218 = vmatprep.subr.bf16.mxu0 0
        %2219 = vmatpush2.bf16.msra.mxu0 0
        %2220 = vmatprep.subr.bf16.mxu0 0
        %2221 = vmatpush2.bf16.msra.mxu0 0
        %2222 = vmatprep.subr.bf16.mxu0 0
        %2223 = vmatpush2.bf16.msra.mxu0 0
        %2224 = vmatprep.subr.bf16.mxu0 0
        %2225 = vmatpush2.bf16.msra.mxu0 0
        %2226 = vmatprep.subr.bf16.mxu0 0
        %2227 = vmatpush2.bf16.msra.mxu0 0
        %2228 = vmatprep.subr.bf16.mxu0 0
        %2229 = vmatpush2.bf16.msra.mxu0 0
        %2230 = vmatprep.subr.bf16.mxu0 0
        %2231 = vmatpush2.bf16.msra.mxu0 0
        %2232 = vmatprep.mubr.bf16.mxu0 0
        %2233 = vmatmul.mubr.bf16.gmra.mxu0 %v2189
        %v2234 = vpop.f32.mrf.mxu0
        %v2235 = vadd.f32 0.0, %v2234
        %v2236 = vpop.f32.mrf.mxu0
        %v2237 = vpop.f32.mrf.mxu0
        %v2238 = vadd.f32 0.0, %v2237
        %v2239 = vpop.f32.mrf.mxu0
        %2240 = vmatprep.mubr.bf16.mxu0 0
        %2241 = vmatmul.mubr.bf16.gmra.mxu0 %v2192
        %v2242 = vpop.f32.mrf.mxu0
        %v2243 = vadd.f32 0.0, %v2242
        %v2244 = vpop.f32.mrf.mxu0
        %v2245 = vpop.f32.mrf.mxu0
        %v2246 = vadd.f32 0.0, %v2245
        %v2247 = vpop.f32.mrf.mxu0
        %2248 = vmatprep.mubr.bf16.mxu0 0
        %2249 = vmatmul.mubr.bf16.gmra.mxu0 %v2195
        %v2250 = vpop.f32.mrf.mxu0
        %v2251 = vadd.f32 0.0, %v2250
        %v2252 = vpop.f32.mrf.mxu0
        %v2253 = vpop.f32.mrf.mxu0
        %v2254 = vadd.f32 0.0, %v2253
        %v2255 = vpop.f32.mrf.mxu0
        %2256 = vmatprep.mubr.bf16.mxu0 0
        %2257 = vmatmul.mubr.bf16.gmra.mxu0 %v2198
        %v2258 = vpop.f32.mrf.mxu0
        %v2259 = vadd.f32 0.0, %v2258
        %v2260 = vpop.f32.mrf.mxu0
        %v2261 = vpop.f32.mrf.mxu0
        %v2262 = vadd.f32 0.0, %v2261
        %v2263 = vpop.f32.mrf.mxu0
        %2264 = vdwg.mxu0
        %v2271 = vunpack.c.l.b16 %v2145
        %v2272 = vunpack.c.l.b16 %v2146
        %v2273 = vunpack.c.l.b16 %v2147
        %v2274 = vunpack.c.l.b16 %v2148
        %v2275 = vunpack.c.l.b16 %v2149
        %v2276 = vunpack.c.l.b16 %v2150
        %v2277 = vpack.c.b16 %v2272, %v2271
        %v2278 = vpack.c.b16 %v2274, %v2273
        %v2279 = vpack.c.b16 %v2276, %v2275
        %v2284 = vsel %vm1047, %v2140, 0
        %v2287 = vsel %vm1047, %v2141, 0
        %v2290 = vsel %vm1047, %v2142, 0
        %v2293 = vsel %vm1047, %v2143, 0
        %2295 = vmatprep.subr.bf16.mxu0 0
        %2296 = vmatpush1.bf16.msra.mxu0 0
        %2297 = vmatprep.subr.bf16.mxu0 0
        %2298 = vmatpush1.bf16.msra.mxu0 0
        %2299 = vmatprep.subr.bf16.mxu0 0
        %2300 = vmatpush1.bf16.msra.mxu0 0
        %2301 = vmatprep.subr.bf16.mxu0 0
        %2302 = vmatpush1.bf16.msra.mxu0 0
        %2303 = vmatprep.subr.bf16.mxu0 0
        %2304 = vmatpush1.bf16.msra.mxu0 0
        %2305 = vmatprep.subr.bf16.mxu0 0
        %2306 = vmatpush1.bf16.msra.mxu0 %v2279
        %2307 = vmatprep.subr.bf16.mxu0 0
        %2308 = vmatpush1.bf16.msra.mxu0 %v2278
        %2309 = vmatprep.subr.bf16.mxu0 0
        %2310 = vmatpush1.bf16.msra.mxu0 %v2277
        %2311 = vmatprep.subr.bf16.mxu0 0
        %2312 = vmatpush2.bf16.msra.mxu0 0
        %2313 = vmatprep.subr.bf16.mxu0 0
        %2314 = vmatpush2.bf16.msra.mxu0 0
        %2315 = vmatprep.subr.bf16.mxu0 0
        %2316 = vmatpush2.bf16.msra.mxu0 0
        %2317 = vmatprep.subr.bf16.mxu0 0
        %2318 = vmatpush2.bf16.msra.mxu0 0
        %2319 = vmatprep.subr.bf16.mxu0 0
        %2320 = vmatpush2.bf16.msra.mxu0 0
        %2321 = vmatprep.subr.bf16.mxu0 0
        %2322 = vmatpush2.bf16.msra.mxu0 0
        %2323 = vmatprep.subr.bf16.mxu0 0
        %2324 = vmatpush2.bf16.msra.mxu0 0
        %2325 = vmatprep.subr.bf16.mxu0 0
        %2326 = vmatpush2.bf16.msra.mxu0 0
        %2327 = vmatprep.mubr.bf16.mxu0 0
        %2328 = vmatmul.mubr.bf16.gmra.mxu0 %v2284
        %v2329 = vpop.f32.mrf.mxu0
        %v2330 = vadd.f32 %v2235, %v2329
        %v2331 = vpop.f32.mrf.mxu0
        %v2332 = vpop.f32.mrf.mxu0
        %v2333 = vadd.f32 %v2238, %v2332
        %v2334 = vpop.f32.mrf.mxu0
        %2335 = vmatprep.mubr.bf16.mxu0 0
        %2336 = vmatmul.mubr.bf16.gmra.mxu0 %v2287
        %v2337 = vpop.f32.mrf.mxu0
        %v2338 = vadd.f32 %v2243, %v2337
        %v2339 = vpop.f32.mrf.mxu0
        %v2340 = vpop.f32.mrf.mxu0
        %v2341 = vadd.f32 %v2246, %v2340
        %v2342 = vpop.f32.mrf.mxu0
        %2343 = vmatprep.mubr.bf16.mxu0 0
        %2344 = vmatmul.mubr.bf16.gmra.mxu0 %v2290
        %v2345 = vpop.f32.mrf.mxu0
        %v2346 = vadd.f32 %v2251, %v2345
        %v2347 = vpop.f32.mrf.mxu0
        %v2348 = vpop.f32.mrf.mxu0
        %v2349 = vadd.f32 %v2254, %v2348
        %v2350 = vpop.f32.mrf.mxu0
        %2351 = vmatprep.mubr.bf16.mxu0 0
        %2352 = vmatmul.mubr.bf16.gmra.mxu0 %v2293
        %v2353 = vpop.f32.mrf.mxu0
        %v2354 = vadd.f32 %v2259, %v2353
        %v2355 = vpop.f32.mrf.mxu0
        %v2356 = vpop.f32.mrf.mxu0
        %v2357 = vadd.f32 %v2262, %v2356
        %v2358 = vpop.f32.mrf.mxu0
        %2359 = vdwg.mxu0
        %v2360 = vld [vmem:[%s1626] sm:$0xff]
        %v2361 = vld [vmem:[%s1626 + $0x8] sm:$0xff]
        %v2362 = vld [vmem:[%s1626 + $0x10] sm:$0xff]
        %v2363 = vld [vmem:[%s1626 + $0x18] sm:$0xff]
        %v2364 = vld [vmem:[%s1626 + $0x20] sm:$0xff]
        %v2365 = vld [vmem:[%s1626 + $0x28] sm:$0xff]
        %v2366 = vld [vmem:[%s1626 + $0x30] sm:$0xff]
        %v2367 = vld [vmem:[%s1626 + $0x38] sm:$0xff]
        %v2368 = vpack.c.bf16 %v2361, %v2360
        %v2369 = vpack.c.bf16 %v2363, %v2362
        %v2370 = vpack.c.bf16 %v2365, %v2364
        %v2371 = vpack.c.bf16 %v2367, %v2366
        %s2372 = scalar_lea.vmem %s8, 120
        %v2373 = vld [vmem:[%s2372] sm:$0xf]
        %v2374 = vld [vmem:[%s2372 + $0x4] sm:$0xf]
        %v2375 = vld [vmem:[%s2372 + $0x8] sm:$0xf]
        %v2376 = vld [vmem:[%s2372 + $0xc] sm:$0xf]
        %v2377 = vld [vmem:[%s2372 + $0x10] sm:$0xf]
        %v2378 = vld [vmem:[%s2372 + $0x14] sm:$0xf]
        %v2385 = vunpack.c.l.b16 %v2373
        %v2386 = vunpack.c.l.b16 %v2374
        %v2387 = vunpack.c.l.b16 %v2375
        %v2388 = vunpack.c.l.b16 %v2376
        %v2389 = vunpack.c.l.b16 %v2377
        %v2390 = vunpack.c.l.b16 %v2378
        %v2391 = vpack.c.b16 %v2386, %v2385
        %v2392 = vpack.c.b16 %v2388, %v2387
        %v2393 = vpack.c.b16 %v2390, %v2389
        %v2398 = vsel %vm1047, %v2368, 0
        %v2401 = vsel %vm1047, %v2369, 0
        %v2404 = vsel %vm1047, %v2370, 0
        %v2407 = vsel %vm1047, %v2371, 0
        %2409 = vmatprep.subr.bf16.mxu0 0
        %2410 = vmatpush1.bf16.msra.mxu0 0
        %2411 = vmatprep.subr.bf16.mxu0 0
        %2412 = vmatpush1.bf16.msra.mxu0 0
        %2413 = vmatprep.subr.bf16.mxu0 0
        %2414 = vmatpush1.bf16.msra.mxu0 0
        %2415 = vmatprep.subr.bf16.mxu0 0
        %2416 = vmatpush1.bf16.msra.mxu0 0
        %2417 = vmatprep.subr.bf16.mxu0 0
        %2418 = vmatpush1.bf16.msra.mxu0 0
        %2419 = vmatprep.subr.bf16.mxu0 0
        %2420 = vmatpush1.bf16.msra.mxu0 %v2393
        %2421 = vmatprep.subr.bf16.mxu0 0
        %2422 = vmatpush1.bf16.msra.mxu0 %v2392
        %2423 = vmatprep.subr.bf16.mxu0 0
        %2424 = vmatpush1.bf16.msra.mxu0 %v2391
        %2425 = vmatprep.subr.bf16.mxu0 0
        %2426 = vmatpush2.bf16.msra.mxu0 0
        %2427 = vmatprep.subr.bf16.mxu0 0
        %2428 = vmatpush2.bf16.msra.mxu0 0
        %2429 = vmatprep.subr.bf16.mxu0 0
        %2430 = vmatpush2.bf16.msra.mxu0 0
        %2431 = vmatprep.subr.bf16.mxu0 0
        %2432 = vmatpush2.bf16.msra.mxu0 0
        %2433 = vmatprep.subr.bf16.mxu0 0
        %2434 = vmatpush2.bf16.msra.mxu0 0
        %2435 = vmatprep.subr.bf16.mxu0 0
        %2436 = vmatpush2.bf16.msra.mxu0 0
        %2437 = vmatprep.subr.bf16.mxu0 0
        %2438 = vmatpush2.bf16.msra.mxu0 0
        %2439 = vmatprep.subr.bf16.mxu0 0
        %2440 = vmatpush2.bf16.msra.mxu0 0
        %2441 = vmatprep.mubr.bf16.mxu0 0
        %2442 = vmatmul.mubr.bf16.gmra.mxu0 %v2398
        %v2443 = vpop.f32.mrf.mxu0
        %v2444 = vadd.f32 0.0, %v2443
        %v2445 = vpop.f32.mrf.mxu0
        %v2446 = vpop.f32.mrf.mxu0
        %v2447 = vadd.f32 0.0, %v2446
        %v2448 = vpop.f32.mrf.mxu0
        %2449 = vmatprep.mubr.bf16.mxu0 0
        %2450 = vmatmul.mubr.bf16.gmra.mxu0 %v2401
        %v2451 = vpop.f32.mrf.mxu0
        %v2452 = vadd.f32 0.0, %v2451
        %v2453 = vpop.f32.mrf.mxu0
        %v2454 = vpop.f32.mrf.mxu0
        %v2455 = vadd.f32 0.0, %v2454
        %v2456 = vpop.f32.mrf.mxu0
        %2457 = vmatprep.mubr.bf16.mxu0 0
        %2458 = vmatmul.mubr.bf16.gmra.mxu0 %v2404
        %v2459 = vpop.f32.mrf.mxu0
        %v2460 = vadd.f32 0.0, %v2459
        %v2461 = vpop.f32.mrf.mxu0
        %v2462 = vpop.f32.mrf.mxu0
        %v2463 = vadd.f32 0.0, %v2462
        %v2464 = vpop.f32.mrf.mxu0
        %2465 = vmatprep.mubr.bf16.mxu0 0
        %2466 = vmatmul.mubr.bf16.gmra.mxu0 %v2407
        %v2467 = vpop.f32.mrf.mxu0
        %v2468 = vadd.f32 0.0, %v2467
        %v2469 = vpop.f32.mrf.mxu0
        %v2470 = vpop.f32.mrf.mxu0
        %v2471 = vadd.f32 0.0, %v2470
        %v2472 = vpop.f32.mrf.mxu0
        %2473 = vdwg.mxu0
        %v2474 = vadd.f32 %v2330, %v2444
        %v2475 = vadd.f32 %v2333, %v2447
        %v2476 = vadd.f32 %v2338, %v2452
        %v2477 = vadd.f32 %v2341, %v2455
        %v2478 = vadd.f32 %v2346, %v2460
        %v2479 = vadd.f32 %v2349, %v2463
        %v2480 = vadd.f32 %v2354, %v2468
        %v2481 = vadd.f32 %v2357, %v2471
        %2490 = vrot.lane.b32.xlu0 %v2474, 24
        %v2491 = vpop.permute.xlu0 %2490
        %2492 = vrot.lane.b32.xlu0 %v2475, 24
        %v2493 = vpop.permute.xlu0 %2492
        %2494 = vrot.lane.b32.xlu0 %v2476, 24
        %v2495 = vpop.permute.xlu0 %2494
        %2496 = vrot.lane.b32.xlu0 %v2477, 24
        %v2497 = vpop.permute.xlu0 %2496
        %2498 = vrot.lane.b32.xlu0 %v2478, 24
        %v2499 = vpop.permute.xlu0 %2498
        %2500 = vrot.lane.b32.xlu0 %v2479, 24
        %v2501 = vpop.permute.xlu0 %2500
        %2502 = vrot.lane.b32.xlu0 %v2480, 24
        %v2503 = vpop.permute.xlu0 %2502
        %2504 = vrot.lane.b32.xlu0 %v2481, 24
        %v2505 = vpop.permute.xlu0 %2504
        %vm2514 = vcmask 261312
        %2515 = vst.msk [vmem:[#allocation2] sm:$0xff] %vm2514, %v2491
        %2516 = vst.msk [vmem:[#allocation2 + $0x8] sm:$0xff] %vm2514, %v2493
        %2517 = vst.msk [vmem:[#allocation2 + $0x10] sm:$0xff] %vm2514, %v2495
        %2518 = vst.msk [vmem:[#allocation2 + $0x18] sm:$0xff] %vm2514, %v2497
        %2519 = vst.msk [vmem:[#allocation2 + $0x20] sm:$0xff] %vm2514, %v2499
        %2520 = vst.msk [vmem:[#allocation2 + $0x28] sm:$0xff] %vm2514, %v2501
        %2521 = vst.msk [vmem:[#allocation2 + $0x30] sm:$0xff] %vm2514, %v2503
        %2522 = vst.msk [vmem:[#allocation2 + $0x38] sm:$0xff] %vm2514, %v2505
        %v2523 = vld [vmem:[#allocation2] sm:$0xff]
        %v2524 = vld [vmem:[#allocation2 + $0x8] sm:$0xff]
        %v2525 = vld [vmem:[#allocation2 + $0x10] sm:$0xff]
        %v2526 = vld [vmem:[#allocation2 + $0x18] sm:$0xff]
        %v2527 = vld [vmem:[#allocation2 + $0x20] sm:$0xff]
        %v2528 = vld [vmem:[#allocation2 + $0x28] sm:$0xff]
        %v2529 = vld [vmem:[#allocation2 + $0x30] sm:$0xff]
        %v2530 = vld [vmem:[#allocation2 + $0x38] sm:$0xff]
        %s2531 = scalar_lea.vmem %s3, 2
        %v2532 = vld [vmem:[%s2531] sm:$0x1]
        %v2534 = vlaneseq
        %v2535 = vshrl.u32 %v2534, 7
        %v2536 = vsub.s32 0, %v2535
        %v2537 = vrot.slane %v2532, %v2536
        %v2539 = vmul.f32 %v2523, %v2537
        %v2540 = vmul.f32 %v2524, %v2537
        %v2541 = vmul.f32 %v2525, %v2537
        %v2542 = vmul.f32 %v2526, %v2537
        %v2543 = vmul.f32 %v2527, %v2537
        %v2544 = vmul.f32 %v2528, %v2537
        %v2545 = vmul.f32 %v2529, %v2537
        %v2546 = vmul.f32 %v2530, %v2537
        %s2547 = scalar_lea.vmem %s4, 2
        %v2548 = vld [vmem:[%s2547] sm:$0x1]
        %v2550 = vlaneseq
        %v2551 = vshrl.u32 %v2550, 7
        %v2552 = vsub.s32 0, %v2551
        %v2553 = vrot.slane %v2548, %v2552
        %v2555 = vadd.f32 %v2539, %v2553
        %v2556 = vadd.f32 %v2540, %v2553
        %v2557 = vadd.f32 %v2541, %v2553
        %v2558 = vadd.f32 %v2542, %v2553
        %v2559 = vadd.f32 %v2543, %v2553
        %v2560 = vadd.f32 %v2544, %v2553
        %v2561 = vadd.f32 %v2545, %v2553
        %v2562 = vadd.f32 %v2546, %v2553
        %v2563 = vmax.f32 %v2555, 0.0
        %v2564 = vmax.f32 %v2556, 0.0
        %v2565 = vmax.f32 %v2557, 0.0
        %v2566 = vmax.f32 %v2558, 0.0
        %v2567 = vmax.f32 %v2559, 0.0
        %v2568 = vmax.f32 %v2560, 0.0
        %v2569 = vmax.f32 %v2561, 0.0
        %v2570 = vmax.f32 %v2562, 0.0
        %v2571 = vpack.c.bf16 %v2564, %v2563
        %v2572 = vpack.c.bf16 %v2566, %v2565
        %v2573 = vpack.c.bf16 %v2568, %v2567
        %v2574 = vpack.c.bf16 %v2570, %v2569
        %s2575 = scalar_lea.vmem %s5, 128
        %v2576 = vld [vmem:[%s2575] sm:$0xf]
        %v2577 = vld [vmem:[%s2575 + $0x4] sm:$0xf]
        %v2578 = vld [vmem:[%s2575 + $0x8] sm:$0xf]
        %v2579 = vld [vmem:[%s2575 + $0xc] sm:$0xf]
        %v2580 = vld [vmem:[%s2575 + $0x10] sm:$0xf]
        %v2581 = vld [vmem:[%s2575 + $0x14] sm:$0xf]
        %v2582 = vld [vmem:[%s2575 + $0x18] sm:$0xf]
        %v2583 = vld [vmem:[%s2575 + $0x1c] sm:$0xf]
        %v2584 = vld [vmem:[%s2575 + $0x20] sm:$0xf]
        %v2585 = vld [vmem:[%s2575 + $0x24] sm:$0xf]
        %v2586 = vld [vmem:[%s2575 + $0x28] sm:$0xf]
        %v2587 = vld [vmem:[%s2575 + $0x2c] sm:$0xf]
        %v2588 = vld [vmem:[%s2575 + $0x30] sm:$0xf]
        %v2589 = vld [vmem:[%s2575 + $0x34] sm:$0xf]
        %v2590 = vld [vmem:[%s2575 + $0x38] sm:$0xf]
        %v2591 = vld [vmem:[%s2575 + $0x3c] sm:$0xf]
        %v2608 = vunpack.c.l.b16 %v2576
        %v2609 = vunpack.c.l.b16 %v2577
        %v2610 = vunpack.c.l.b16 %v2578
        %v2611 = vunpack.c.l.b16 %v2579
        %v2612 = vunpack.c.l.b16 %v2580
        %v2613 = vunpack.c.l.b16 %v2581
        %v2614 = vunpack.c.l.b16 %v2582
        %v2615 = vunpack.c.l.b16 %v2583
        %v2616 = vunpack.c.l.b16 %v2584
        %v2617 = vunpack.c.l.b16 %v2585
        %v2618 = vunpack.c.l.b16 %v2586
        %v2619 = vunpack.c.l.b16 %v2587
        %v2620 = vunpack.c.l.b16 %v2588
        %v2621 = vunpack.c.l.b16 %v2589
        %v2622 = vunpack.c.l.b16 %v2590
        %v2623 = vunpack.c.l.b16 %v2591
        %v2624 = vpack.c.b16 %v2609, %v2608
        %v2625 = vpack.c.b16 %v2611, %v2610
        %v2626 = vpack.c.b16 %v2613, %v2612
        %v2627 = vpack.c.b16 %v2615, %v2614
        %v2628 = vpack.c.b16 %v2617, %v2616
        %v2629 = vpack.c.b16 %v2619, %v2618
        %v2630 = vpack.c.b16 %v2621, %v2620
        %v2631 = vpack.c.b16 %v2623, %v2622
        %2640 = vmatprep.subr.bf16.mxu0 0
        %2641 = vmatpush1.bf16.msra.mxu0 %v2631
        %2642 = vmatprep.subr.bf16.mxu0 0
        %2643 = vmatpush1.bf16.msra.mxu0 %v2630
        %2644 = vmatprep.subr.bf16.mxu0 0
        %2645 = vmatpush1.bf16.msra.mxu0 %v2629
        %2646 = vmatprep.subr.bf16.mxu0 0
        %2647 = vmatpush1.bf16.msra.mxu0 %v2628
        %2648 = vmatprep.subr.bf16.mxu0 0
        %2649 = vmatpush1.bf16.msra.mxu0 %v2627
        %2650 = vmatprep.subr.bf16.mxu0 0
        %2651 = vmatpush1.bf16.msra.mxu0 %v2626
        %2652 = vmatprep.subr.bf16.mxu0 0
        %2653 = vmatpush1.bf16.msra.mxu0 %v2625
        %2654 = vmatprep.subr.bf16.mxu0 0
        %2655 = vmatpush1.bf16.msra.mxu0 %v2624
        %2656 = vmatprep.subr.bf16.mxu0 0
        %2657 = vmatpush2.bf16.msra.mxu0 0
        %2658 = vmatprep.subr.bf16.mxu0 0
        %2659 = vmatpush2.bf16.msra.mxu0 0
        %2660 = vmatprep.subr.bf16.mxu0 0
        %2661 = vmatpush2.bf16.msra.mxu0 0
        %2662 = vmatprep.subr.bf16.mxu0 0
        %2663 = vmatpush2.bf16.msra.mxu0 0
        %2664 = vmatprep.subr.bf16.mxu0 0
        %2665 = vmatpush2.bf16.msra.mxu0 0
        %2666 = vmatprep.subr.bf16.mxu0 0
        %2667 = vmatpush2.bf16.msra.mxu0 0
        %2668 = vmatprep.subr.bf16.mxu0 0
        %2669 = vmatpush2.bf16.msra.mxu0 0
        %2670 = vmatprep.subr.bf16.mxu0 0
        %2671 = vmatpush2.bf16.msra.mxu0 0
        %2672 = vmatprep.mubr.bf16.mxu0 0
        %2673 = vmatmul.mubr.bf16.gmra.mxu0 %v2571
        %v2674 = vpop.f32.mrf.mxu0
        %v2675 = vadd.f32 0.0, %v2674
        %v2676 = vpop.f32.mrf.mxu0
        %v2677 = vpop.f32.mrf.mxu0
        %v2678 = vadd.f32 0.0, %v2677
        %v2679 = vpop.f32.mrf.mxu0
        %2680 = vmatprep.mubr.bf16.mxu0 0
        %2681 = vmatmul.mubr.bf16.gmra.mxu0 %v2572
        %v2682 = vpop.f32.mrf.mxu0
        %v2683 = vadd.f32 0.0, %v2682
        %v2684 = vpop.f32.mrf.mxu0
        %v2685 = vpop.f32.mrf.mxu0
        %v2686 = vadd.f32 0.0, %v2685
        %v2687 = vpop.f32.mrf.mxu0
        %2688 = vmatprep.mubr.bf16.mxu0 0
        %2689 = vmatmul.mubr.bf16.gmra.mxu0 %v2573
        %v2690 = vpop.f32.mrf.mxu0
        %v2691 = vadd.f32 0.0, %v2690
        %v2692 = vpop.f32.mrf.mxu0
        %v2693 = vpop.f32.mrf.mxu0
        %v2694 = vadd.f32 0.0, %v2693
        %v2695 = vpop.f32.mrf.mxu0
        %2696 = vmatprep.mubr.bf16.mxu0 0
        %2697 = vmatmul.mubr.bf16.gmra.mxu0 %v2574
        %v2698 = vpop.f32.mrf.mxu0
        %v2699 = vadd.f32 0.0, %v2698
        %v2700 = vpop.f32.mrf.mxu0
        %v2701 = vpop.f32.mrf.mxu0
        %v2702 = vadd.f32 0.0, %v2701
        %v2703 = vpop.f32.mrf.mxu0
        %2704 = vdwg.mxu0
        %s2705 = scalar_lea.vmem %s6, 2
        %v2706 = vld [vmem:[%s2705] sm:$0x1]
        %v2708 = vlaneseq
        %v2709 = vshrl.u32 %v2708, 7
        %v2710 = vsub.s32 0, %v2709
        %v2711 = vrot.slane %v2706, %v2710
        %v2713 = vmul.f32 %v2675, %v2711
        %v2714 = vmul.f32 %v2678, %v2711
        %v2715 = vmul.f32 %v2683, %v2711
        %v2716 = vmul.f32 %v2686, %v2711
        %v2717 = vmul.f32 %v2691, %v2711
        %v2718 = vmul.f32 %v2694, %v2711
        %v2719 = vmul.f32 %v2699, %v2711
        %v2720 = vmul.f32 %v2702, %v2711
        %s2721 = scalar_lea.vmem %s7, 2
        %v2722 = vld [vmem:[%s2721] sm:$0x1]
        %v2724 = vlaneseq
        %v2725 = vshrl.u32 %v2724, 7
        %v2726 = vsub.s32 0, %v2725
        %v2727 = vrot.slane %v2722, %v2726
        %v2729 = vadd.f32 %v2713, %v2727
        %v2730 = vadd.f32 %v2714, %v2727
        %v2731 = vadd.f32 %v2715, %v2727
        %v2732 = vadd.f32 %v2716, %v2727
        %v2733 = vadd.f32 %v2717, %v2727
        %v2734 = vadd.f32 %v2718, %v2727
        %v2735 = vadd.f32 %v2719, %v2727
        %v2736 = vadd.f32 %v2720, %v2727
        %v2737 = vmax.f32 %v2729, 0.0
        %v2738 = vmax.f32 %v2730, 0.0
        %v2739 = vmax.f32 %v2731, 0.0
        %v2740 = vmax.f32 %v2732, 0.0
        %v2741 = vmax.f32 %v2733, 0.0
        %v2742 = vmax.f32 %v2734, 0.0
        %v2743 = vmax.f32 %v2735, 0.0
        %v2744 = vmax.f32 %v2736, 0.0
        %v2745 = vrot.slane %v2737, 7
        %v2746 = vrot.slane %v2738, 7
        %v2747 = vrot.slane %v2739, 7
        %v2748 = vrot.slane %v2740, 7
        %v2749 = vrot.slane %v2741, 7
        %v2750 = vrot.slane %v2742, 7
        %v2751 = vrot.slane %v2743, 7
        %v2752 = vrot.slane %v2744, 7
        %v2753 = vsel %vm965, 0.0, %v2745
        %v2754 = vsel %vm965, 0.0, %v2746
        %v2755 = vsel %vm965, 0.0, %v2747
        %v2756 = vsel %vm965, 0.0, %v2748
        %v2757 = vsel %vm965, 0.0, %v2749
        %v2758 = vsel %vm965, 0.0, %v2750
        %v2759 = vsel %vm965, 0.0, %v2751
        %v2760 = vsel %vm965, 0.0, %v2752
        %2761 = vst.msk [vmem:[%s1291] sm:$0xff] %vm1038, %v2753
        %2762 = vst.msk [vmem:[%s1291 + $0x8] sm:$0xff] %vm1038, %v2754
        %2763 = vst.msk [vmem:[%s1291 + $0x10] sm:$0xff] %vm1038, %v2755
        %2764 = vst.msk [vmem:[%s1291 + $0x18] sm:$0xff] %vm1038, %v2756
        %2765 = vst.msk [vmem:[%s1291 + $0x20] sm:$0xff] %vm1038, %v2757
        %2766 = vst.msk [vmem:[%s1291 + $0x28] sm:$0xff] %vm1038, %v2758
        %2767 = vst.msk [vmem:[%s1291 + $0x30] sm:$0xff] %vm1038, %v2759
        %2768 = vst.msk [vmem:[%s1291 + $0x38] sm:$0xff] %vm1038, %v2760
        %2777 = vrot.lane.b32.xlu0 %v2737, 16
        %v2778 = vpop.permute.xlu0 %2777
        %2779 = vrot.lane.b32.xlu0 %v2738, 16
        %v2780 = vpop.permute.xlu0 %2779
        %2781 = vrot.lane.b32.xlu0 %v2739, 16
        %v2782 = vpop.permute.xlu0 %2781
        %2783 = vrot.lane.b32.xlu0 %v2740, 16
        %v2784 = vpop.permute.xlu0 %2783
        %2785 = vrot.lane.b32.xlu0 %v2741, 16
        %v2786 = vpop.permute.xlu0 %2785
        %2787 = vrot.lane.b32.xlu0 %v2742, 16
        %v2788 = vpop.permute.xlu0 %2787
        %2789 = vrot.lane.b32.xlu0 %v2743, 16
        %v2790 = vpop.permute.xlu0 %2789
        %2791 = vrot.lane.b32.xlu0 %v2744, 16
        %v2792 = vpop.permute.xlu0 %2791
        %2801 = vst.msk [vmem:[%s1291] sm:$0xff] %vm1332, %v2778
        %2802 = vst.msk [vmem:[%s1291 + $0x8] sm:$0xff] %vm1332, %v2780
        %2803 = vst.msk [vmem:[%s1291 + $0x10] sm:$0xff] %vm1332, %v2782
        %2804 = vst.msk [vmem:[%s1291 + $0x18] sm:$0xff] %vm1332, %v2784
        %2805 = vst.msk [vmem:[%s1291 + $0x20] sm:$0xff] %vm1332, %v2786
        %2806 = vst.msk [vmem:[%s1291 + $0x28] sm:$0xff] %vm1332, %v2788
        %2807 = vst.msk [vmem:[%s1291 + $0x30] sm:$0xff] %vm1332, %v2790
        %2808 = vst.msk [vmem:[%s1291 + $0x38] sm:$0xff] %vm1332, %v2792
        %v2809 = vrot.slane %v2737, 1
        %v2810 = vrot.slane %v2738, 1
        %v2811 = vrot.slane %v2739, 1
        %v2812 = vrot.slane %v2740, 1
        %v2813 = vrot.slane %v2741, 1
        %v2814 = vrot.slane %v2742, 1
        %v2815 = vrot.slane %v2743, 1
        %v2816 = vrot.slane %v2744, 1
        %v2817 = vsel %vm1349, 0.0, %v2809
        %v2818 = vsel %vm1349, 0.0, %v2810
        %v2819 = vsel %vm1349, 0.0, %v2811
        %v2820 = vsel %vm1349, 0.0, %v2812
        %v2821 = vsel %vm1349, 0.0, %v2813
        %v2822 = vsel %vm1349, 0.0, %v2814
        %v2823 = vsel %vm1349, 0.0, %v2815
        %v2824 = vsel %vm1349, 0.0, %v2816
        %2833 = vrot.lane.b32.xlu0 %v2817, 32
        %v2834 = vpop.permute.xlu0 %2833
        %2835 = vrot.lane.b32.xlu0 %v2818, 32
        %v2836 = vpop.permute.xlu0 %2835
        %2837 = vrot.lane.b32.xlu0 %v2819, 32
        %v2838 = vpop.permute.xlu0 %2837
        %2839 = vrot.lane.b32.xlu0 %v2820, 32
        %v2840 = vpop.permute.xlu0 %2839
        %2841 = vrot.lane.b32.xlu0 %v2821, 32
        %v2842 = vpop.permute.xlu0 %2841
        %2843 = vrot.lane.b32.xlu0 %v2822, 32
        %v2844 = vpop.permute.xlu0 %2843
        %2845 = vrot.lane.b32.xlu0 %v2823, 32
        %v2846 = vpop.permute.xlu0 %2845
        %2847 = vrot.lane.b32.xlu0 %v2824, 32
        %v2848 = vpop.permute.xlu0 %2847
        %2857 = vst.msk [vmem:[%s1291] sm:$0xff] %vm1390, %v2834
        %2858 = vst.msk [vmem:[%s1291 + $0x8] sm:$0xff] %vm1390, %v2836
        %2859 = vst.msk [vmem:[%s1291 + $0x10] sm:$0xff] %vm1390, %v2838
        %2860 = vst.msk [vmem:[%s1291 + $0x18] sm:$0xff] %vm1390, %v2840
        %2861 = vst.msk [vmem:[%s1291 + $0x20] sm:$0xff] %vm1390, %v2842
        %2862 = vst.msk [vmem:[%s1291 + $0x28] sm:$0xff] %vm1390, %v2844
        %2863 = vst.msk [vmem:[%s1291 + $0x30] sm:$0xff] %vm1390, %v2846
        %2864 = vst.msk [vmem:[%s1291 + $0x38] sm:$0xff] %vm1390, %v2848
        %v2865 = vld [vmem:[#allocation3] sm:$0xff]
        %v2866 = vld [vmem:[#allocation3 + $0x8] sm:$0xff]
        %v2867 = vld [vmem:[#allocation3 + $0x10] sm:$0xff]
        %v2868 = vld [vmem:[#allocation3 + $0x18] sm:$0xff]
        %v2869 = vld [vmem:[#allocation3 + $0x20] sm:$0xff]
        %v2870 = vld [vmem:[#allocation3 + $0x28] sm:$0xff]
        %v2871 = vld [vmem:[#allocation3 + $0x30] sm:$0xff]
        %v2872 = vld [vmem:[#allocation3 + $0x38] sm:$0xff]
        %v2873 = vpack.c.bf16 %v2866, %v2865
        %v2874 = vpack.c.bf16 %v2868, %v2867
        %v2875 = vpack.c.bf16 %v2870, %v2869
        %v2876 = vpack.c.bf16 %v2872, %v2871
        %s2877 = scalar_lea.vmem %s8, 144
        %v2878 = vld [vmem:[%s2877] sm:$0xf]
        %v2879 = vld [vmem:[%s2877 + $0x4] sm:$0xf]
        %v2880 = vld [vmem:[%s2877 + $0x8] sm:$0xf]
        %v2881 = vld [vmem:[%s2877 + $0xc] sm:$0xf]
        %v2882 = vld [vmem:[%s2877 + $0x10] sm:$0xf]
        %v2883 = vld [vmem:[%s2877 + $0x14] sm:$0xf]
        %v2884 = vld [vmem:[%s1291] sm:$0xff]
        %v2885 = vld [vmem:[%s1291 + $0x8] sm:$0xff]
        %v2886 = vld [vmem:[%s1291 + $0x10] sm:$0xff]
        %v2887 = vld [vmem:[%s1291 + $0x18] sm:$0xff]
        %v2888 = vld [vmem:[%s1291 + $0x20] sm:$0xff]
        %v2889 = vld [vmem:[%s1291 + $0x28] sm:$0xff]
        %v2890 = vld [vmem:[%s1291 + $0x30] sm:$0xff]
        %v2891 = vld [vmem:[%s1291 + $0x38] sm:$0xff]
        %v2892 = vpack.c.bf16 %v2885, %v2884
        %v2893 = vpack.c.bf16 %v2887, %v2886
        %v2894 = vpack.c.bf16 %v2889, %v2888
        %v2895 = vpack.c.bf16 %v2891, %v2890
        %s2896 = scalar_lea.vmem %s8, 168
        %v2897 = vld [vmem:[%s2896] sm:$0xf]
        %v2898 = vld [vmem:[%s2896 + $0x4] sm:$0xf]
        %v2899 = vld [vmem:[%s2896 + $0x8] sm:$0xf]
        %v2900 = vld [vmem:[%s2896 + $0xc] sm:$0xf]
        %v2901 = vld [vmem:[%s2896 + $0x10] sm:$0xf]
        %v2902 = vld [vmem:[%s2896 + $0x14] sm:$0xf]
        %v2909 = vunpack.c.l.b16 %v2897
        %v2910 = vunpack.c.l.b16 %v2898
        %v2911 = vunpack.c.l.b16 %v2899
        %v2912 = vunpack.c.l.b16 %v2900
        %v2913 = vunpack.c.l.b16 %v2901
        %v2914 = vunpack.c.l.b16 %v2902
        %v2915 = vpack.c.b16 %v2910, %v2909
        %v2916 = vpack.c.b16 %v2912, %v2911
        %v2917 = vpack.c.b16 %v2914, %v2913
        %v2922 = vsel %vm1047, %v2892, 0
        %v2925 = vsel %vm1047, %v2893, 0
        %v2928 = vsel %vm1047, %v2894, 0
        %v2931 = vsel %vm1047, %v2895, 0
        %2933 = vmatprep.subr.bf16.mxu0 0
        %2934 = vmatpush1.bf16.msra.mxu0 0
        %2935 = vmatprep.subr.bf16.mxu0 0
        %2936 = vmatpush1.bf16.msra.mxu0 0
        %2937 = vmatprep.subr.bf16.mxu0 0
        %2938 = vmatpush1.bf16.msra.mxu0 0
        %2939 = vmatprep.subr.bf16.mxu0 0
        %2940 = vmatpush1.bf16.msra.mxu0 0
        %2941 = vmatprep.subr.bf16.mxu0 0
        %2942 = vmatpush1.bf16.msra.mxu0 0
        %2943 = vmatprep.subr.bf16.mxu0 0
        %2944 = vmatpush1.bf16.msra.mxu0 %v2917
        %2945 = vmatprep.subr.bf16.mxu0 0
        %2946 = vmatpush1.bf16.msra.mxu0 %v2916
        %2947 = vmatprep.subr.bf16.mxu0 0
        %2948 = vmatpush1.bf16.msra.mxu0 %v2915
        %2949 = vmatprep.subr.bf16.mxu0 0
        %2950 = vmatpush2.bf16.msra.mxu0 0
        %2951 = vmatprep.subr.bf16.mxu0 0
        %2952 = vmatpush2.bf16.msra.mxu0 0
        %2953 = vmatprep.subr.bf16.mxu0 0
        %2954 = vmatpush2.bf16.msra.mxu0 0
        %2955 = vmatprep.subr.bf16.mxu0 0
        %2956 = vmatpush2.bf16.msra.mxu0 0
        %2957 = vmatprep.subr.bf16.mxu0 0
        %2958 = vmatpush2.bf16.msra.mxu0 0
        %2959 = vmatprep.subr.bf16.mxu0 0
        %2960 = vmatpush2.bf16.msra.mxu0 0
        %2961 = vmatprep.subr.bf16.mxu0 0
        %2962 = vmatpush2.bf16.msra.mxu0 0
        %2963 = vmatprep.subr.bf16.mxu0 0
        %2964 = vmatpush2.bf16.msra.mxu0 0
        %2965 = vmatprep.mubr.bf16.mxu0 0
        %2966 = vmatmul.mubr.bf16.gmra.mxu0 %v2922
        %v2967 = vpop.f32.mrf.mxu0
        %v2968 = vadd.f32 0.0, %v2967
        %v2969 = vpop.f32.mrf.mxu0
        %v2970 = vpop.f32.mrf.mxu0
        %v2971 = vadd.f32 0.0, %v2970
        %v2972 = vpop.f32.mrf.mxu0
        %2973 = vmatprep.mubr.bf16.mxu0 0
        %2974 = vmatmul.mubr.bf16.gmra.mxu0 %v2925
        %v2975 = vpop.f32.mrf.mxu0
        %v2976 = vadd.f32 0.0, %v2975
        %v2977 = vpop.f32.mrf.mxu0
        %v2978 = vpop.f32.mrf.mxu0
        %v2979 = vadd.f32 0.0, %v2978
        %v2980 = vpop.f32.mrf.mxu0
        %2981 = vmatprep.mubr.bf16.mxu0 0
        %2982 = vmatmul.mubr.bf16.gmra.mxu0 %v2928
        %v2983 = vpop.f32.mrf.mxu0
        %v2984 = vadd.f32 0.0, %v2983
        %v2985 = vpop.f32.mrf.mxu0
        %v2986 = vpop.f32.mrf.mxu0
        %v2987 = vadd.f32 0.0, %v2986
        %v2988 = vpop.f32.mrf.mxu0
        %2989 = vmatprep.mubr.bf16.mxu0 0
        %2990 = vmatmul.mubr.bf16.gmra.mxu0 %v2931
        %v2991 = vpop.f32.mrf.mxu0
        %v2992 = vadd.f32 0.0, %v2991
        %v2993 = vpop.f32.mrf.mxu0
        %v2994 = vpop.f32.mrf.mxu0
        %v2995 = vadd.f32 0.0, %v2994
        %v2996 = vpop.f32.mrf.mxu0
        %2997 = vdwg.mxu0
        %v3004 = vunpack.c.l.b16 %v2878
        %v3005 = vunpack.c.l.b16 %v2879
        %v3006 = vunpack.c.l.b16 %v2880
        %v3007 = vunpack.c.l.b16 %v2881
        %v3008 = vunpack.c.l.b16 %v2882
        %v3009 = vunpack.c.l.b16 %v2883
        %v3010 = vpack.c.b16 %v3005, %v3004
        %v3011 = vpack.c.b16 %v3007, %v3006
        %v3012 = vpack.c.b16 %v3009, %v3008
        %v3017 = vsel %vm1047, %v2873, 0
        %v3020 = vsel %vm1047, %v2874, 0
        %v3023 = vsel %vm1047, %v2875, 0
        %v3026 = vsel %vm1047, %v2876, 0
        %3028 = vmatprep.subr.bf16.mxu0 0
        %3029 = vmatpush1.bf16.msra.mxu0 0
        %3030 = vmatprep.subr.bf16.mxu0 0
        %3031 = vmatpush1.bf16.msra.mxu0 0
        %3032 = vmatprep.subr.bf16.mxu0 0
        %3033 = vmatpush1.bf16.msra.mxu0 0
        %3034 = vmatprep.subr.bf16.mxu0 0
        %3035 = vmatpush1.bf16.msra.mxu0 0
        %3036 = vmatprep.subr.bf16.mxu0 0
        %3037 = vmatpush1.bf16.msra.mxu0 0
        %3038 = vmatprep.subr.bf16.mxu0 0
        %3039 = vmatpush1.bf16.msra.mxu0 %v3012
        %3040 = vmatprep.subr.bf16.mxu0 0
        %3041 = vmatpush1.bf16.msra.mxu0 %v3011
        %3042 = vmatprep.subr.bf16.mxu0 0
        %3043 = vmatpush1.bf16.msra.mxu0 %v3010
        %3044 = vmatprep.subr.bf16.mxu0 0
        %3045 = vmatpush2.bf16.msra.mxu0 0
        %3046 = vmatprep.subr.bf16.mxu0 0
        %3047 = vmatpush2.bf16.msra.mxu0 0
        %3048 = vmatprep.subr.bf16.mxu0 0
        %3049 = vmatpush2.bf16.msra.mxu0 0
        %3050 = vmatprep.subr.bf16.mxu0 0
        %3051 = vmatpush2.bf16.msra.mxu0 0
        %3052 = vmatprep.subr.bf16.mxu0 0
        %3053 = vmatpush2.bf16.msra.mxu0 0
        %3054 = vmatprep.subr.bf16.mxu0 0
        %3055 = vmatpush2.bf16.msra.mxu0 0
        %3056 = vmatprep.subr.bf16.mxu0 0
        %3057 = vmatpush2.bf16.msra.mxu0 0
        %3058 = vmatprep.subr.bf16.mxu0 0
        %3059 = vmatpush2.bf16.msra.mxu0 0
        %3060 = vmatprep.mubr.bf16.mxu0 0
        %3061 = vmatmul.mubr.bf16.gmra.mxu0 %v3017
        %v3062 = vpop.f32.mrf.mxu0
        %v3063 = vadd.f32 %v2968, %v3062
        %v3064 = vpop.f32.mrf.mxu0
        %v3065 = vpop.f32.mrf.mxu0
        %v3066 = vadd.f32 %v2971, %v3065
        %v3067 = vpop.f32.mrf.mxu0
        %3068 = vmatprep.mubr.bf16.mxu0 0
        %3069 = vmatmul.mubr.bf16.gmra.mxu0 %v3020
        %v3070 = vpop.f32.mrf.mxu0
        %v3071 = vadd.f32 %v2976, %v3070
        %v3072 = vpop.f32.mrf.mxu0
        %v3073 = vpop.f32.mrf.mxu0
        %v3074 = vadd.f32 %v2979, %v3073
        %v3075 = vpop.f32.mrf.mxu0
        %3076 = vmatprep.mubr.bf16.mxu0 0
        %3077 = vmatmul.mubr.bf16.gmra.mxu0 %v3023
        %v3078 = vpop.f32.mrf.mxu0
        %v3079 = vadd.f32 %v2984, %v3078
        %v3080 = vpop.f32.mrf.mxu0
        %v3081 = vpop.f32.mrf.mxu0
        %v3082 = vadd.f32 %v2987, %v3081
        %v3083 = vpop.f32.mrf.mxu0
        %3084 = vmatprep.mubr.bf16.mxu0 0
        %3085 = vmatmul.mubr.bf16.gmra.mxu0 %v3026
        %v3086 = vpop.f32.mrf.mxu0
        %v3087 = vadd.f32 %v2992, %v3086
        %v3088 = vpop.f32.mrf.mxu0
        %v3089 = vpop.f32.mrf.mxu0
        %v3090 = vadd.f32 %v2995, %v3089
        %v3091 = vpop.f32.mrf.mxu0
        %3092 = vdwg.mxu0
        %v3093 = vld [vmem:[%s1626] sm:$0xff]
        %v3094 = vld [vmem:[%s1626 + $0x8] sm:$0xff]
        %v3095 = vld [vmem:[%s1626 + $0x10] sm:$0xff]
        %v3096 = vld [vmem:[%s1626 + $0x18] sm:$0xff]
        %v3097 = vld [vmem:[%s1626 + $0x20] sm:$0xff]
        %v3098 = vld [vmem:[%s1626 + $0x28] sm:$0xff]
        %v3099 = vld [vmem:[%s1626 + $0x30] sm:$0xff]
        %v3100 = vld [vmem:[%s1626 + $0x38] sm:$0xff]
        %v3101 = vpack.c.bf16 %v3094, %v3093
        %v3102 = vpack.c.bf16 %v3096, %v3095
        %v3103 = vpack.c.bf16 %v3098, %v3097
        %v3104 = vpack.c.bf16 %v3100, %v3099
        %s3105 = scalar_lea.vmem %s8, 192
        %v3106 = vld [vmem:[%s3105] sm:$0xf]
        %v3107 = vld [vmem:[%s3105 + $0x4] sm:$0xf]
        %v3108 = vld [vmem:[%s3105 + $0x8] sm:$0xf]
        %v3109 = vld [vmem:[%s3105 + $0xc] sm:$0xf]
        %v3110 = vld [vmem:[%s3105 + $0x10] sm:$0xf]
        %v3111 = vld [vmem:[%s3105 + $0x14] sm:$0xf]
        %v3118 = vunpack.c.l.b16 %v3106
        %v3119 = vunpack.c.l.b16 %v3107
        %v3120 = vunpack.c.l.b16 %v3108
        %v3121 = vunpack.c.l.b16 %v3109
        %v3122 = vunpack.c.l.b16 %v3110
        %v3123 = vunpack.c.l.b16 %v3111
        %v3124 = vpack.c.b16 %v3119, %v3118
        %v3125 = vpack.c.b16 %v3121, %v3120
        %v3126 = vpack.c.b16 %v3123, %v3122
        %v3131 = vsel %vm1047, %v3101, 0
        %v3134 = vsel %vm1047, %v3102, 0
        %v3137 = vsel %vm1047, %v3103, 0
        %v3140 = vsel %vm1047, %v3104, 0
        %3142 = vmatprep.subr.bf16.mxu0 0
        %3143 = vmatpush1.bf16.msra.mxu0 0
        %3144 = vmatprep.subr.bf16.mxu0 0
        %3145 = vmatpush1.bf16.msra.mxu0 0
        %3146 = vmatprep.subr.bf16.mxu0 0
        %3147 = vmatpush1.bf16.msra.mxu0 0
        %3148 = vmatprep.subr.bf16.mxu0 0
        %3149 = vmatpush1.bf16.msra.mxu0 0
        %3150 = vmatprep.subr.bf16.mxu0 0
        %3151 = vmatpush1.bf16.msra.mxu0 0
        %3152 = vmatprep.subr.bf16.mxu0 0
        %3153 = vmatpush1.bf16.msra.mxu0 %v3126
        %3154 = vmatprep.subr.bf16.mxu0 0
        %3155 = vmatpush1.bf16.msra.mxu0 %v3125
        %3156 = vmatprep.subr.bf16.mxu0 0
        %3157 = vmatpush1.bf16.msra.mxu0 %v3124
        %3158 = vmatprep.subr.bf16.mxu0 0
        %3159 = vmatpush2.bf16.msra.mxu0 0
        %3160 = vmatprep.subr.bf16.mxu0 0
        %3161 = vmatpush2.bf16.msra.mxu0 0
        %3162 = vmatprep.subr.bf16.mxu0 0
        %3163 = vmatpush2.bf16.msra.mxu0 0
        %3164 = vmatprep.subr.bf16.mxu0 0
        %3165 = vmatpush2.bf16.msra.mxu0 0
        %3166 = vmatprep.subr.bf16.mxu0 0
        %3167 = vmatpush2.bf16.msra.mxu0 0
        %3168 = vmatprep.subr.bf16.mxu0 0
        %3169 = vmatpush2.bf16.msra.mxu0 0
        %3170 = vmatprep.subr.bf16.mxu0 0
        %3171 = vmatpush2.bf16.msra.mxu0 0
        %3172 = vmatprep.subr.bf16.mxu0 0
        %3173 = vmatpush2.bf16.msra.mxu0 0
        %3174 = vmatprep.mubr.bf16.mxu0 0
        %3175 = vmatmul.mubr.bf16.gmra.mxu0 %v3131
        %v3176 = vpop.f32.mrf.mxu0
        %v3177 = vadd.f32 0.0, %v3176
        %v3178 = vpop.f32.mrf.mxu0
        %v3179 = vpop.f32.mrf.mxu0
        %v3180 = vadd.f32 0.0, %v3179
        %v3181 = vpop.f32.mrf.mxu0
        %3182 = vmatprep.mubr.bf16.mxu0 0
        %3183 = vmatmul.mubr.bf16.gmra.mxu0 %v3134
        %v3184 = vpop.f32.mrf.mxu0
        %v3185 = vadd.f32 0.0, %v3184
        %v3186 = vpop.f32.mrf.mxu0
        %v3187 = vpop.f32.mrf.mxu0
        %v3188 = vadd.f32 0.0, %v3187
        %v3189 = vpop.f32.mrf.mxu0
        %3190 = vmatprep.mubr.bf16.mxu0 0
        %3191 = vmatmul.mubr.bf16.gmra.mxu0 %v3137
        %v3192 = vpop.f32.mrf.mxu0
        %v3193 = vadd.f32 0.0, %v3192
        %v3194 = vpop.f32.mrf.mxu0
        %v3195 = vpop.f32.mrf.mxu0
        %v3196 = vadd.f32 0.0, %v3195
        %v3197 = vpop.f32.mrf.mxu0
        %3198 = vmatprep.mubr.bf16.mxu0 0
        %3199 = vmatmul.mubr.bf16.gmra.mxu0 %v3140
        %v3200 = vpop.f32.mrf.mxu0
        %v3201 = vadd.f32 0.0, %v3200
        %v3202 = vpop.f32.mrf.mxu0
        %v3203 = vpop.f32.mrf.mxu0
        %v3204 = vadd.f32 0.0, %v3203
        %v3205 = vpop.f32.mrf.mxu0
        %3206 = vdwg.mxu0
        %v3207 = vadd.f32 %v3063, %v3177
        %v3208 = vadd.f32 %v3066, %v3180
        %v3209 = vadd.f32 %v3071, %v3185
        %v3210 = vadd.f32 %v3074, %v3188
        %v3211 = vadd.f32 %v3079, %v3193
        %v3212 = vadd.f32 %v3082, %v3196
        %v3213 = vadd.f32 %v3087, %v3201
        %v3214 = vadd.f32 %v3090, %v3204
        %3223 = vrot.lane.b32.xlu0 %v3207, 32
        %v3224 = vpop.permute.xlu0 %3223
        %3225 = vrot.lane.b32.xlu0 %v3208, 32
        %v3226 = vpop.permute.xlu0 %3225
        %3227 = vrot.lane.b32.xlu0 %v3209, 32
        %v3228 = vpop.permute.xlu0 %3227
        %3229 = vrot.lane.b32.xlu0 %v3210, 32
        %v3230 = vpop.permute.xlu0 %3229
        %3231 = vrot.lane.b32.xlu0 %v3211, 32
        %v3232 = vpop.permute.xlu0 %3231
        %3233 = vrot.lane.b32.xlu0 %v3212, 32
        %v3234 = vpop.permute.xlu0 %3233
        %3235 = vrot.lane.b32.xlu0 %v3213, 32
        %v3236 = vpop.permute.xlu0 %3235
        %3237 = vrot.lane.b32.xlu0 %v3214, 32
        %v3238 = vpop.permute.xlu0 %3237
        %vm3247 = vcmask 326912
        %3248 = vst.msk [vmem:[#allocation2] sm:$0xff] %vm3247, %v3224
        %3249 = vst.msk [vmem:[#allocation2 + $0x8] sm:$0xff] %vm3247, %v3226
        %3250 = vst.msk [vmem:[#allocation2 + $0x10] sm:$0xff] %vm3247, %v3228
        %3251 = vst.msk [vmem:[#allocation2 + $0x18] sm:$0xff] %vm3247, %v3230
        %3252 = vst.msk [vmem:[#allocation2 + $0x20] sm:$0xff] %vm3247, %v3232
        %3253 = vst.msk [vmem:[#allocation2 + $0x28] sm:$0xff] %vm3247, %v3234
        %3254 = vst.msk [vmem:[#allocation2 + $0x30] sm:$0xff] %vm3247, %v3236
        %3255 = vst.msk [vmem:[#allocation2 + $0x38] sm:$0xff] %vm3247, %v3238
        %v3256 = vld [vmem:[#allocation2] sm:$0xff]
        %v3257 = vld [vmem:[#allocation2 + $0x8] sm:$0xff]
        %v3258 = vld [vmem:[#allocation2 + $0x10] sm:$0xff]
        %v3259 = vld [vmem:[#allocation2 + $0x18] sm:$0xff]
        %v3260 = vld [vmem:[#allocation2 + $0x20] sm:$0xff]
        %v3261 = vld [vmem:[#allocation2 + $0x28] sm:$0xff]
        %v3262 = vld [vmem:[#allocation2 + $0x30] sm:$0xff]
        %v3263 = vld [vmem:[#allocation2 + $0x38] sm:$0xff]
        %s3264 = scalar_lea.vmem %s3, 3
        %v3265 = vld [vmem:[%s3264] sm:$0x1]
        %v3267 = vlaneseq
        %v3268 = vshrl.u32 %v3267, 7
        %v3269 = vsub.s32 0, %v3268
        %v3270 = vrot.slane %v3265, %v3269
        %v3272 = vmul.f32 %v3256, %v3270
        %v3273 = vmul.f32 %v3257, %v3270
        %v3274 = vmul.f32 %v3258, %v3270
        %v3275 = vmul.f32 %v3259, %v3270
        %v3276 = vmul.f32 %v3260, %v3270
        %v3277 = vmul.f32 %v3261, %v3270
        %v3278 = vmul.f32 %v3262, %v3270
        %v3279 = vmul.f32 %v3263, %v3270
        %s3280 = scalar_lea.vmem %s4, 3
        %v3281 = vld [vmem:[%s3280] sm:$0x1]
        %v3283 = vlaneseq
        %v3284 = vshrl.u32 %v3283, 7
        %v3285 = vsub.s32 0, %v3284
        %v3286 = vrot.slane %v3281, %v3285
        %v3288 = vadd.f32 %v3272, %v3286
        %v3289 = vadd.f32 %v3273, %v3286
        %v3290 = vadd.f32 %v3274, %v3286
        %v3291 = vadd.f32 %v3275, %v3286
        %v3292 = vadd.f32 %v3276, %v3286
        %v3293 = vadd.f32 %v3277, %v3286
        %v3294 = vadd.f32 %v3278, %v3286
        %v3295 = vadd.f32 %v3279, %v3286
        %v3296 = vmax.f32 %v3288, 0.0
        %v3297 = vmax.f32 %v3289, 0.0
        %v3298 = vmax.f32 %v3290, 0.0
        %v3299 = vmax.f32 %v3291, 0.0
        %v3300 = vmax.f32 %v3292, 0.0
        %v3301 = vmax.f32 %v3293, 0.0
        %v3302 = vmax.f32 %v3294, 0.0
        %v3303 = vmax.f32 %v3295, 0.0
        %v3304 = vpack.c.bf16 %v3297, %v3296
        %v3305 = vpack.c.bf16 %v3299, %v3298
        %v3306 = vpack.c.bf16 %v3301, %v3300
        %v3307 = vpack.c.bf16 %v3303, %v3302
        %s3308 = scalar_lea.vmem %s5, 192
        %v3309 = vld [vmem:[%s3308] sm:$0xf]
        %v3310 = vld [vmem:[%s3308 + $0x4] sm:$0xf]
        %v3311 = vld [vmem:[%s3308 + $0x8] sm:$0xf]
        %v3312 = vld [vmem:[%s3308 + $0xc] sm:$0xf]
        %v3313 = vld [vmem:[%s3308 + $0x10] sm:$0xf]
        %v3314 = vld [vmem:[%s3308 + $0x14] sm:$0xf]
        %v3315 = vld [vmem:[%s3308 + $0x18] sm:$0xf]
        %v3316 = vld [vmem:[%s3308 + $0x1c] sm:$0xf]
        %v3317 = vld [vmem:[%s3308 + $0x20] sm:$0xf]
        %v3318 = vld [vmem:[%s3308 + $0x24] sm:$0xf]
        %v3319 = vld [vmem:[%s3308 + $0x28] sm:$0xf]
        %v3320 = vld [vmem:[%s3308 + $0x2c] sm:$0xf]
        %v3321 = vld [vmem:[%s3308 + $0x30] sm:$0xf]
        %v3322 = vld [vmem:[%s3308 + $0x34] sm:$0xf]
        %v3323 = vld [vmem:[%s3308 + $0x38] sm:$0xf]
        %v3324 = vld [vmem:[%s3308 + $0x3c] sm:$0xf]
        %v3341 = vunpack.c.l.b16 %v3309
        %v3342 = vunpack.c.l.b16 %v3310
        %v3343 = vunpack.c.l.b16 %v3311
        %v3344 = vunpack.c.l.b16 %v3312
        %v3345 = vunpack.c.l.b16 %v3313
        %v3346 = vunpack.c.l.b16 %v3314
        %v3347 = vunpack.c.l.b16 %v3315
        %v3348 = vunpack.c.l.b16 %v3316
        %v3349 = vunpack.c.l.b16 %v3317
        %v3350 = vunpack.c.l.b16 %v3318
        %v3351 = vunpack.c.l.b16 %v3319
        %v3352 = vunpack.c.l.b16 %v3320
        %v3353 = vunpack.c.l.b16 %v3321
        %v3354 = vunpack.c.l.b16 %v3322
        %v3355 = vunpack.c.l.b16 %v3323
        %v3356 = vunpack.c.l.b16 %v3324
        %v3357 = vpack.c.b16 %v3342, %v3341
        %v3358 = vpack.c.b16 %v3344, %v3343
        %v3359 = vpack.c.b16 %v3346, %v3345
        %v3360 = vpack.c.b16 %v3348, %v3347
        %v3361 = vpack.c.b16 %v3350, %v3349
        %v3362 = vpack.c.b16 %v3352, %v3351
        %v3363 = vpack.c.b16 %v3354, %v3353
        %v3364 = vpack.c.b16 %v3356, %v3355
        %3373 = vmatprep.subr.bf16.mxu0 0
        %3374 = vmatpush1.bf16.msra.mxu0 %v3364
        %3375 = vmatprep.subr.bf16.mxu0 0
        %3376 = vmatpush1.bf16.msra.mxu0 %v3363
        %3377 = vmatprep.subr.bf16.mxu0 0
        %3378 = vmatpush1.bf16.msra.mxu0 %v3362
        %3379 = vmatprep.subr.bf16.mxu0 0
        %3380 = vmatpush1.bf16.msra.mxu0 %v3361
        %3381 = vmatprep.subr.bf16.mxu0 0
        %3382 = vmatpush1.bf16.msra.mxu0 %v3360
        %3383 = vmatprep.subr.bf16.mxu0 0
        %3384 = vmatpush1.bf16.msra.mxu0 %v3359
        %3385 = vmatprep.subr.bf16.mxu0 0
        %3386 = vmatpush1.bf16.msra.mxu0 %v3358
        %3387 = vmatprep.subr.bf16.mxu0 0
        %3388 = vmatpush1.bf16.msra.mxu0 %v3357
        %3389 = vmatprep.subr.bf16.mxu0 0
        %3390 = vmatpush2.bf16.msra.mxu0 0
        %3391 = vmatprep.subr.bf16.mxu0 0
        %3392 = vmatpush2.bf16.msra.mxu0 0
        %3393 = vmatprep.subr.bf16.mxu0 0
        %3394 = vmatpush2.bf16.msra.mxu0 0
        %3395 = vmatprep.subr.bf16.mxu0 0
        %3396 = vmatpush2.bf16.msra.mxu0 0
        %3397 = vmatprep.subr.bf16.mxu0 0
        %3398 = vmatpush2.bf16.msra.mxu0 0
        %3399 = vmatprep.subr.bf16.mxu0 0
        %3400 = vmatpush2.bf16.msra.mxu0 0
        %3401 = vmatprep.subr.bf16.mxu0 0
        %3402 = vmatpush2.bf16.msra.mxu0 0
        %3403 = vmatprep.subr.bf16.mxu0 0
        %3404 = vmatpush2.bf16.msra.mxu0 0
        %3405 = vmatprep.mubr.bf16.mxu0 0
        %3406 = vmatmul.mubr.bf16.gmra.mxu0 %v3304
        %v3407 = vpop.f32.mrf.mxu0
        %v3408 = vadd.f32 0.0, %v3407
        %v3409 = vpop.f32.mrf.mxu0
        %v3410 = vpop.f32.mrf.mxu0
        %v3411 = vadd.f32 0.0, %v3410
        %v3412 = vpop.f32.mrf.mxu0
        %3413 = vmatprep.mubr.bf16.mxu0 0
        %3414 = vmatmul.mubr.bf16.gmra.mxu0 %v3305
        %v3415 = vpop.f32.mrf.mxu0
        %v3416 = vadd.f32 0.0, %v3415
        %v3417 = vpop.f32.mrf.mxu0
        %v3418 = vpop.f32.mrf.mxu0
        %v3419 = vadd.f32 0.0, %v3418
        %v3420 = vpop.f32.mrf.mxu0
        %3421 = vmatprep.mubr.bf16.mxu0 0
        %3422 = vmatmul.mubr.bf16.gmra.mxu0 %v3306
        %v3423 = vpop.f32.mrf.mxu0
        %v3424 = vadd.f32 0.0, %v3423
        %v3425 = vpop.f32.mrf.mxu0
        %v3426 = vpop.f32.mrf.mxu0
        %v3427 = vadd.f32 0.0, %v3426
        %v3428 = vpop.f32.mrf.mxu0
        %3429 = vmatprep.mubr.bf16.mxu0 0
        %3430 = vmatmul.mubr.bf16.gmra.mxu0 %v3307
        %v3431 = vpop.f32.mrf.mxu0
        %v3432 = vadd.f32 0.0, %v3431
        %v3433 = vpop.f32.mrf.mxu0
        %v3434 = vpop.f32.mrf.mxu0
        %v3435 = vadd.f32 0.0, %v3434
        %v3436 = vpop.f32.mrf.mxu0
        %3437 = vdwg.mxu0
        %s3438 = scalar_lea.vmem %s6, 3
        %v3439 = vld [vmem:[%s3438] sm:$0x1]
        %v3441 = vlaneseq
        %v3442 = vshrl.u32 %v3441, 7
        %v3443 = vsub.s32 0, %v3442
        %v3444 = vrot.slane %v3439, %v3443
        %v3446 = vmul.f32 %v3408, %v3444
        %v3447 = vmul.f32 %v3411, %v3444
        %v3448 = vmul.f32 %v3416, %v3444
        %v3449 = vmul.f32 %v3419, %v3444
        %v3450 = vmul.f32 %v3424, %v3444
        %v3451 = vmul.f32 %v3427, %v3444
        %v3452 = vmul.f32 %v3432, %v3444
        %v3453 = vmul.f32 %v3435, %v3444
        %s3454 = scalar_lea.vmem %s7, 3
        %v3455 = vld [vmem:[%s3454] sm:$0x1]
        %v3457 = vlaneseq
        %v3458 = vshrl.u32 %v3457, 7
        %v3459 = vsub.s32 0, %v3458
        %v3460 = vrot.slane %v3455, %v3459
        %v3462 = vadd.f32 %v3446, %v3460
        %v3463 = vadd.f32 %v3447, %v3460
        %v3464 = vadd.f32 %v3448, %v3460
        %v3465 = vadd.f32 %v3449, %v3460
        %v3466 = vadd.f32 %v3450, %v3460
        %v3467 = vadd.f32 %v3451, %v3460
        %v3468 = vadd.f32 %v3452, %v3460
        %v3469 = vadd.f32 %v3453, %v3460
        %v3470 = vmax.f32 %v3462, 0.0
        %v3471 = vmax.f32 %v3463, 0.0
        %v3472 = vmax.f32 %v3464, 0.0
        %v3473 = vmax.f32 %v3465, 0.0
        %v3474 = vmax.f32 %v3466, 0.0
        %v3475 = vmax.f32 %v3467, 0.0
        %v3476 = vmax.f32 %v3468, 0.0
        %v3477 = vmax.f32 %v3469, 0.0
        %v3478 = vrot.slane %v3470, 7
        %v3479 = vrot.slane %v3471, 7
        %v3480 = vrot.slane %v3472, 7
        %v3481 = vrot.slane %v3473, 7
        %v3482 = vrot.slane %v3474, 7
        %v3483 = vrot.slane %v3475, 7
        %v3484 = vrot.slane %v3476, 7
        %v3485 = vrot.slane %v3477, 7
        %v3486 = vsel %vm965, 0.0, %v3478
        %v3487 = vsel %vm965, 0.0, %v3479
        %v3488 = vsel %vm965, 0.0, %v3480
        %v3489 = vsel %vm965, 0.0, %v3481
        %v3490 = vsel %vm965, 0.0, %v3482
        %v3491 = vsel %vm965, 0.0, %v3483
        %v3492 = vsel %vm965, 0.0, %v3484
        %v3493 = vsel %vm965, 0.0, %v3485
        %3494 = vst.msk [vmem:[%s1291] sm:$0xff] %vm1038, %v3486
        %3495 = vst.msk [vmem:[%s1291 + $0x8] sm:$0xff] %vm1038, %v3487
        %3496 = vst.msk [vmem:[%s1291 + $0x10] sm:$0xff] %vm1038, %v3488
        %3497 = vst.msk [vmem:[%s1291 + $0x18] sm:$0xff] %vm1038, %v3489
        %3498 = vst.msk [vmem:[%s1291 + $0x20] sm:$0xff] %vm1038, %v3490
        %3499 = vst.msk [vmem:[%s1291 + $0x28] sm:$0xff] %vm1038, %v3491
        %3500 = vst.msk [vmem:[%s1291 + $0x30] sm:$0xff] %vm1038, %v3492
        %3501 = vst.msk [vmem:[%s1291 + $0x38] sm:$0xff] %vm1038, %v3493
        %3510 = vrot.lane.b32.xlu0 %v3470, 16
        %v3511 = vpop.permute.xlu0 %3510
        %3512 = vrot.lane.b32.xlu0 %v3471, 16
        %v3513 = vpop.permute.xlu0 %3512
        %3514 = vrot.lane.b32.xlu0 %v3472, 16
        %v3515 = vpop.permute.xlu0 %3514
        %3516 = vrot.lane.b32.xlu0 %v3473, 16
        %v3517 = vpop.permute.xlu0 %3516
        %3518 = vrot.lane.b32.xlu0 %v3474, 16
        %v3519 = vpop.permute.xlu0 %3518
        %3520 = vrot.lane.b32.xlu0 %v3475, 16
        %v3521 = vpop.permute.xlu0 %3520
        %3522 = vrot.lane.b32.xlu0 %v3476, 16
        %v3523 = vpop.permute.xlu0 %3522
        %3524 = vrot.lane.b32.xlu0 %v3477, 16
        %v3525 = vpop.permute.xlu0 %3524
        %3534 = vst.msk [vmem:[%s1291] sm:$0xff] %vm1332, %v3511
        %3535 = vst.msk [vmem:[%s1291 + $0x8] sm:$0xff] %vm1332, %v3513
        %3536 = vst.msk [vmem:[%s1291 + $0x10] sm:$0xff] %vm1332, %v3515
        %3537 = vst.msk [vmem:[%s1291 + $0x18] sm:$0xff] %vm1332, %v3517
        %3538 = vst.msk [vmem:[%s1291 + $0x20] sm:$0xff] %vm1332, %v3519
        %3539 = vst.msk [vmem:[%s1291 + $0x28] sm:$0xff] %vm1332, %v3521
        %3540 = vst.msk [vmem:[%s1291 + $0x30] sm:$0xff] %vm1332, %v3523
        %3541 = vst.msk [vmem:[%s1291 + $0x38] sm:$0xff] %vm1332, %v3525
        %v3542 = vrot.slane %v3470, 1
        %v3543 = vrot.slane %v3471, 1
        %v3544 = vrot.slane %v3472, 1
        %v3545 = vrot.slane %v3473, 1
        %v3546 = vrot.slane %v3474, 1
        %v3547 = vrot.slane %v3475, 1
        %v3548 = vrot.slane %v3476, 1
        %v3549 = vrot.slane %v3477, 1
        %v3550 = vsel %vm1349, 0.0, %v3542
        %v3551 = vsel %vm1349, 0.0, %v3543
        %v3552 = vsel %vm1349, 0.0, %v3544
        %v3553 = vsel %vm1349, 0.0, %v3545
        %v3554 = vsel %vm1349, 0.0, %v3546
        %v3555 = vsel %vm1349, 0.0, %v3547
        %v3556 = vsel %vm1349, 0.0, %v3548
        %v3557 = vsel %vm1349, 0.0, %v3549
        %3566 = vrot.lane.b32.xlu0 %v3550, 32
        %v3567 = vpop.permute.xlu0 %3566
        %3568 = vrot.lane.b32.xlu0 %v3551, 32
        %v3569 = vpop.permute.xlu0 %3568
        %3570 = vrot.lane.b32.xlu0 %v3552, 32
        %v3571 = vpop.permute.xlu0 %3570
        %3572 = vrot.lane.b32.xlu0 %v3553, 32
        %v3573 = vpop.permute.xlu0 %3572
        %3574 = vrot.lane.b32.xlu0 %v3554, 32
        %v3575 = vpop.permute.xlu0 %3574
        %3576 = vrot.lane.b32.xlu0 %v3555, 32
        %v3577 = vpop.permute.xlu0 %3576
        %3578 = vrot.lane.b32.xlu0 %v3556, 32
        %v3579 = vpop.permute.xlu0 %3578
        %3580 = vrot.lane.b32.xlu0 %v3557, 32
        %v3581 = vpop.permute.xlu0 %3580
        %3590 = vst.msk [vmem:[%s1291] sm:$0xff] %vm1390, %v3567
        %3591 = vst.msk [vmem:[%s1291 + $0x8] sm:$0xff] %vm1390, %v3569
        %3592 = vst.msk [vmem:[%s1291 + $0x10] sm:$0xff] %vm1390, %v3571
        %3593 = vst.msk [vmem:[%s1291 + $0x18] sm:$0xff] %vm1390, %v3573
        %3594 = vst.msk [vmem:[%s1291 + $0x20] sm:$0xff] %vm1390, %v3575
        %3595 = vst.msk [vmem:[%s1291 + $0x28] sm:$0xff] %vm1390, %v3577
        %3596 = vst.msk [vmem:[%s1291 + $0x30] sm:$0xff] %vm1390, %v3579
        %3597 = vst.msk [vmem:[%s1291 + $0x38] sm:$0xff] %vm1390, %v3581
        %v3598 = vld [vmem:[#allocation3] sm:$0xff]
        %v3599 = vld [vmem:[#allocation3 + $0x8] sm:$0xff]
        %v3600 = vld [vmem:[#allocation3 + $0x10] sm:$0xff]
        %v3601 = vld [vmem:[#allocation3 + $0x18] sm:$0xff]
        %v3602 = vld [vmem:[#allocation3 + $0x20] sm:$0xff]
        %v3603 = vld [vmem:[#allocation3 + $0x28] sm:$0xff]
        %v3604 = vld [vmem:[#allocation3 + $0x30] sm:$0xff]
        %v3605 = vld [vmem:[#allocation3 + $0x38] sm:$0xff]
        %v3606 = vpack.c.bf16 %v3599, %v3598
        %v3607 = vpack.c.bf16 %v3601, %v3600
        %v3608 = vpack.c.bf16 %v3603, %v3602
        %v3609 = vpack.c.bf16 %v3605, %v3604
        %s3610 = scalar_lea.vmem %s8, 216
        %v3611 = vld [vmem:[%s3610] sm:$0xf]
        %v3612 = vld [vmem:[%s3610 + $0x4] sm:$0xf]
        %v3613 = vld [vmem:[%s3610 + $0x8] sm:$0xf]
        %v3614 = vld [vmem:[%s3610 + $0xc] sm:$0xf]
        %v3615 = vld [vmem:[%s3610 + $0x10] sm:$0xf]
        %v3616 = vld [vmem:[%s3610 + $0x14] sm:$0xf]
        %v3617 = vld [vmem:[%s1291] sm:$0xff]
        %v3618 = vld [vmem:[%s1291 + $0x8] sm:$0xff]
        %v3619 = vld [vmem:[%s1291 + $0x10] sm:$0xff]
        %v3620 = vld [vmem:[%s1291 + $0x18] sm:$0xff]
        %v3621 = vld [vmem:[%s1291 + $0x20] sm:$0xff]
        %v3622 = vld [vmem:[%s1291 + $0x28] sm:$0xff]
        %v3623 = vld [vmem:[%s1291 + $0x30] sm:$0xff]
        %v3624 = vld [vmem:[%s1291 + $0x38] sm:$0xff]
        %v3625 = vpack.c.bf16 %v3618, %v3617
        %v3626 = vpack.c.bf16 %v3620, %v3619
        %v3627 = vpack.c.bf16 %v3622, %v3621
        %v3628 = vpack.c.bf16 %v3624, %v3623
        %s3629 = scalar_lea.vmem %s8, 240
        %v3630 = vld [vmem:[%s3629] sm:$0xf]
        %v3631 = vld [vmem:[%s3629 + $0x4] sm:$0xf]
        %v3632 = vld [vmem:[%s3629 + $0x8] sm:$0xf]
        %v3633 = vld [vmem:[%s3629 + $0xc] sm:$0xf]
        %v3634 = vld [vmem:[%s3629 + $0x10] sm:$0xf]
        %v3635 = vld [vmem:[%s3629 + $0x14] sm:$0xf]
        %v3642 = vunpack.c.l.b16 %v3630
        %v3643 = vunpack.c.l.b16 %v3631
        %v3644 = vunpack.c.l.b16 %v3632
        %v3645 = vunpack.c.l.b16 %v3633
        %v3646 = vunpack.c.l.b16 %v3634
        %v3647 = vunpack.c.l.b16 %v3635
        %v3648 = vpack.c.b16 %v3643, %v3642
        %v3649 = vpack.c.b16 %v3645, %v3644
        %v3650 = vpack.c.b16 %v3647, %v3646
        %v3655 = vsel %vm1047, %v3625, 0
        %v3658 = vsel %vm1047, %v3626, 0
        %v3661 = vsel %vm1047, %v3627, 0
        %v3664 = vsel %vm1047, %v3628, 0
        %3666 = vmatprep.subr.bf16.mxu0 0
        %3667 = vmatpush1.bf16.msra.mxu0 0
        %3668 = vmatprep.subr.bf16.mxu0 0
        %3669 = vmatpush1.bf16.msra.mxu0 0
        %3670 = vmatprep.subr.bf16.mxu0 0
        %3671 = vmatpush1.bf16.msra.mxu0 0
        %3672 = vmatprep.subr.bf16.mxu0 0
        %3673 = vmatpush1.bf16.msra.mxu0 0
        %3674 = vmatprep.subr.bf16.mxu0 0
        %3675 = vmatpush1.bf16.msra.mxu0 0
        %3676 = vmatprep.subr.bf16.mxu0 0
        %3677 = vmatpush1.bf16.msra.mxu0 %v3650
        %3678 = vmatprep.subr.bf16.mxu0 0
        %3679 = vmatpush1.bf16.msra.mxu0 %v3649
        %3680 = vmatprep.subr.bf16.mxu0 0
        %3681 = vmatpush1.bf16.msra.mxu0 %v3648
        %3682 = vmatprep.subr.bf16.mxu0 0
        %3683 = vmatpush2.bf16.msra.mxu0 0
        %3684 = vmatprep.subr.bf16.mxu0 0
        %3685 = vmatpush2.bf16.msra.mxu0 0
        %3686 = vmatprep.subr.bf16.mxu0 0
        %3687 = vmatpush2.bf16.msra.mxu0 0
        %3688 = vmatprep.subr.bf16.mxu0 0
        %3689 = vmatpush2.bf16.msra.mxu0 0
        %3690 = vmatprep.subr.bf16.mxu0 0
        %3691 = vmatpush2.bf16.msra.mxu0 0
        %3692 = vmatprep.subr.bf16.mxu0 0
        %3693 = vmatpush2.bf16.msra.mxu0 0
        %3694 = vmatprep.subr.bf16.mxu0 0
        %3695 = vmatpush2.bf16.msra.mxu0 0
        %3696 = vmatprep.subr.bf16.mxu0 0
        %3697 = vmatpush2.bf16.msra.mxu0 0
        %3698 = vmatprep.mubr.bf16.mxu0 0
        %3699 = vmatmul.mubr.bf16.gmra.mxu0 %v3655
        %v3700 = vpop.f32.mrf.mxu0
        %v3701 = vadd.f32 0.0, %v3700
        %v3702 = vpop.f32.mrf.mxu0
        %v3703 = vpop.f32.mrf.mxu0
        %v3704 = vadd.f32 0.0, %v3703
        %v3705 = vpop.f32.mrf.mxu0
        %3706 = vmatprep.mubr.bf16.mxu0 0
        %3707 = vmatmul.mubr.bf16.gmra.mxu0 %v3658
        %v3708 = vpop.f32.mrf.mxu0
        %v3709 = vadd.f32 0.0, %v3708
        %v3710 = vpop.f32.mrf.mxu0
        %v3711 = vpop.f32.mrf.mxu0
        %v3712 = vadd.f32 0.0, %v3711
        %v3713 = vpop.f32.mrf.mxu0
        %3714 = vmatprep.mubr.bf16.mxu0 0
        %3715 = vmatmul.mubr.bf16.gmra.mxu0 %v3661
        %v3716 = vpop.f32.mrf.mxu0
        %v3717 = vadd.f32 0.0, %v3716
        %v3718 = vpop.f32.mrf.mxu0
        %v3719 = vpop.f32.mrf.mxu0
        %v3720 = vadd.f32 0.0, %v3719
        %v3721 = vpop.f32.mrf.mxu0
        %3722 = vmatprep.mubr.bf16.mxu0 0
        %3723 = vmatmul.mubr.bf16.gmra.mxu0 %v3664
        %v3724 = vpop.f32.mrf.mxu0
        %v3725 = vadd.f32 0.0, %v3724
        %v3726 = vpop.f32.mrf.mxu0
        %v3727 = vpop.f32.mrf.mxu0
        %v3728 = vadd.f32 0.0, %v3727
        %v3729 = vpop.f32.mrf.mxu0
        %3730 = vdwg.mxu0
        %v3737 = vunpack.c.l.b16 %v3611
        %v3738 = vunpack.c.l.b16 %v3612
        %v3739 = vunpack.c.l.b16 %v3613
        %v3740 = vunpack.c.l.b16 %v3614
        %v3741 = vunpack.c.l.b16 %v3615
        %v3742 = vunpack.c.l.b16 %v3616
        %v3743 = vpack.c.b16 %v3738, %v3737
        %v3744 = vpack.c.b16 %v3740, %v3739
        %v3745 = vpack.c.b16 %v3742, %v3741
        %v3750 = vsel %vm1047, %v3606, 0
        %v3753 = vsel %vm1047, %v3607, 0
        %v3756 = vsel %vm1047, %v3608, 0
        %v3759 = vsel %vm1047, %v3609, 0
        %3761 = vmatprep.subr.bf16.mxu0 0
        %3762 = vmatpush1.bf16.msra.mxu0 0
        %3763 = vmatprep.subr.bf16.mxu0 0
        %3764 = vmatpush1.bf16.msra.mxu0 0
        %3765 = vmatprep.subr.bf16.mxu0 0
        %3766 = vmatpush1.bf16.msra.mxu0 0
        %3767 = vmatprep.subr.bf16.mxu0 0
        %3768 = vmatpush1.bf16.msra.mxu0 0
        %3769 = vmatprep.subr.bf16.mxu0 0
        %3770 = vmatpush1.bf16.msra.mxu0 0
        %3771 = vmatprep.subr.bf16.mxu0 0
        %3772 = vmatpush1.bf16.msra.mxu0 %v3745
        %3773 = vmatprep.subr.bf16.mxu0 0
        %3774 = vmatpush1.bf16.msra.mxu0 %v3744
        %3775 = vmatprep.subr.bf16.mxu0 0
        %3776 = vmatpush1.bf16.msra.mxu0 %v3743
        %3777 = vmatprep.subr.bf16.mxu0 0
        %3778 = vmatpush2.bf16.msra.mxu0 0
        %3779 = vmatprep.subr.bf16.mxu0 0
        %3780 = vmatpush2.bf16.msra.mxu0 0
        %3781 = vmatprep.subr.bf16.mxu0 0
        %3782 = vmatpush2.bf16.msra.mxu0 0
        %3783 = vmatprep.subr.bf16.mxu0 0
        %3784 = vmatpush2.bf16.msra.mxu0 0
        %3785 = vmatprep.subr.bf16.mxu0 0
        %3786 = vmatpush2.bf16.msra.mxu0 0
        %3787 = vmatprep.subr.bf16.mxu0 0
        %3788 = vmatpush2.bf16.msra.mxu0 0
        %3789 = vmatprep.subr.bf16.mxu0 0
        %3790 = vmatpush2.bf16.msra.mxu0 0
        %3791 = vmatprep.subr.bf16.mxu0 0
        %3792 = vmatpush2.bf16.msra.mxu0 0
        %3793 = vmatprep.mubr.bf16.mxu0 0
        %3794 = vmatmul.mubr.bf16.gmra.mxu0 %v3750
        %v3795 = vpop.f32.mrf.mxu0
        %v3796 = vadd.f32 %v3701, %v3795
        %v3797 = vpop.f32.mrf.mxu0
        %v3798 = vpop.f32.mrf.mxu0
        %v3799 = vadd.f32 %v3704, %v3798
        %v3800 = vpop.f32.mrf.mxu0
        %3801 = vmatprep.mubr.bf16.mxu0 0
        %3802 = vmatmul.mubr.bf16.gmra.mxu0 %v3753
        %v3803 = vpop.f32.mrf.mxu0
        %v3804 = vadd.f32 %v3709, %v3803
        %v3805 = vpop.f32.mrf.mxu0
        %v3806 = vpop.f32.mrf.mxu0
        %v3807 = vadd.f32 %v3712, %v3806
        %v3808 = vpop.f32.mrf.mxu0
        %3809 = vmatprep.mubr.bf16.mxu0 0
        %3810 = vmatmul.mubr.bf16.gmra.mxu0 %v3756
        %v3811 = vpop.f32.mrf.mxu0
        %v3812 = vadd.f32 %v3717, %v3811
        %v3813 = vpop.f32.mrf.mxu0
        %v3814 = vpop.f32.mrf.mxu0
        %v3815 = vadd.f32 %v3720, %v3814
        %v3816 = vpop.f32.mrf.mxu0
        %3817 = vmatprep.mubr.bf16.mxu0 0
        %3818 = vmatmul.mubr.bf16.gmra.mxu0 %v3759
        %v3819 = vpop.f32.mrf.mxu0
        %v3820 = vadd.f32 %v3725, %v3819
        %v3821 = vpop.f32.mrf.mxu0
        %v3822 = vpop.f32.mrf.mxu0
        %v3823 = vadd.f32 %v3728, %v3822
        %v3824 = vpop.f32.mrf.mxu0
        %3825 = vdwg.mxu0
        %v3826 = vld [vmem:[%s1626] sm:$0xff]
        %v3827 = vld [vmem:[%s1626 + $0x8] sm:$0xff]
        %v3828 = vld [vmem:[%s1626 + $0x10] sm:$0xff]
        %v3829 = vld [vmem:[%s1626 + $0x18] sm:$0xff]
        %v3830 = vld [vmem:[%s1626 + $0x20] sm:$0xff]
        %v3831 = vld [vmem:[%s1626 + $0x28] sm:$0xff]
        %v3832 = vld [vmem:[%s1626 + $0x30] sm:$0xff]
        %v3833 = vld [vmem:[%s1626 + $0x38] sm:$0xff]
        %v3834 = vpack.c.bf16 %v3827, %v3826
        %v3835 = vpack.c.bf16 %v3829, %v3828
        %v3836 = vpack.c.bf16 %v3831, %v3830
        %v3837 = vpack.c.bf16 %v3833, %v3832
        %s3838 = scalar_lea.vmem %s8, 264
        %v3839 = vld [vmem:[%s3838] sm:$0xf]
        %v3840 = vld [vmem:[%s3838 + $0x4] sm:$0xf]
        %v3841 = vld [vmem:[%s3838 + $0x8] sm:$0xf]
        %v3842 = vld [vmem:[%s3838 + $0xc] sm:$0xf]
        %v3843 = vld [vmem:[%s3838 + $0x10] sm:$0xf]
        %v3844 = vld [vmem:[%s3838 + $0x14] sm:$0xf]
        %v3851 = vunpack.c.l.b16 %v3839
        %v3852 = vunpack.c.l.b16 %v3840
        %v3853 = vunpack.c.l.b16 %v3841
        %v3854 = vunpack.c.l.b16 %v3842
        %v3855 = vunpack.c.l.b16 %v3843
        %v3856 = vunpack.c.l.b16 %v3844
        %v3857 = vpack.c.b16 %v3852, %v3851
        %v3858 = vpack.c.b16 %v3854, %v3853
        %v3859 = vpack.c.b16 %v3856, %v3855
        %v3864 = vsel %vm1047, %v3834, 0
        %v3867 = vsel %vm1047, %v3835, 0
        %v3870 = vsel %vm1047, %v3836, 0
        %v3873 = vsel %vm1047, %v3837, 0
        %3875 = vmatprep.subr.bf16.mxu0 0
        %3876 = vmatpush1.bf16.msra.mxu0 0
        %3877 = vmatprep.subr.bf16.mxu0 0
        %3878 = vmatpush1.bf16.msra.mxu0 0
        %3879 = vmatprep.subr.bf16.mxu0 0
        %3880 = vmatpush1.bf16.msra.mxu0 0
        %3881 = vmatprep.subr.bf16.mxu0 0
        %3882 = vmatpush1.bf16.msra.mxu0 0
        %3883 = vmatprep.subr.bf16.mxu0 0
        %3884 = vmatpush1.bf16.msra.mxu0 0
        %3885 = vmatprep.subr.bf16.mxu0 0
        %3886 = vmatpush1.bf16.msra.mxu0 %v3859
        %3887 = vmatprep.subr.bf16.mxu0 0
        %3888 = vmatpush1.bf16.msra.mxu0 %v3858
        %3889 = vmatprep.subr.bf16.mxu0 0
        %3890 = vmatpush1.bf16.msra.mxu0 %v3857
        %3891 = vmatprep.subr.bf16.mxu0 0
        %3892 = vmatpush2.bf16.msra.mxu0 0
        %3893 = vmatprep.subr.bf16.mxu0 0
        %3894 = vmatpush2.bf16.msra.mxu0 0
        %3895 = vmatprep.subr.bf16.mxu0 0
        %3896 = vmatpush2.bf16.msra.mxu0 0
        %3897 = vmatprep.subr.bf16.mxu0 0
        %3898 = vmatpush2.bf16.msra.mxu0 0
        %3899 = vmatprep.subr.bf16.mxu0 0
        %3900 = vmatpush2.bf16.msra.mxu0 0
        %3901 = vmatprep.subr.bf16.mxu0 0
        %3902 = vmatpush2.bf16.msra.mxu0 0
        %3903 = vmatprep.subr.bf16.mxu0 0
        %3904 = vmatpush2.bf16.msra.mxu0 0
        %3905 = vmatprep.subr.bf16.mxu0 0
        %3906 = vmatpush2.bf16.msra.mxu0 0
        %3907 = vmatprep.mubr.bf16.mxu0 0
        %3908 = vmatmul.mubr.bf16.gmra.mxu0 %v3864
        %v3909 = vpop.f32.mrf.mxu0
        %v3910 = vadd.f32 0.0, %v3909
        %v3911 = vpop.f32.mrf.mxu0
        %v3912 = vpop.f32.mrf.mxu0
        %v3913 = vadd.f32 0.0, %v3912
        %v3914 = vpop.f32.mrf.mxu0
        %3915 = vmatprep.mubr.bf16.mxu0 0
        %3916 = vmatmul.mubr.bf16.gmra.mxu0 %v3867
        %v3917 = vpop.f32.mrf.mxu0
        %v3918 = vadd.f32 0.0, %v3917
        %v3919 = vpop.f32.mrf.mxu0
        %v3920 = vpop.f32.mrf.mxu0
        %v3921 = vadd.f32 0.0, %v3920
        %v3922 = vpop.f32.mrf.mxu0
        %3923 = vmatprep.mubr.bf16.mxu0 0
        %3924 = vmatmul.mubr.bf16.gmra.mxu0 %v3870
        %v3925 = vpop.f32.mrf.mxu0
        %v3926 = vadd.f32 0.0, %v3925
        %v3927 = vpop.f32.mrf.mxu0
        %v3928 = vpop.f32.mrf.mxu0
        %v3929 = vadd.f32 0.0, %v3928
        %v3930 = vpop.f32.mrf.mxu0
        %3931 = vmatprep.mubr.bf16.mxu0 0
        %3932 = vmatmul.mubr.bf16.gmra.mxu0 %v3873
        %v3933 = vpop.f32.mrf.mxu0
        %v3934 = vadd.f32 0.0, %v3933
        %v3935 = vpop.f32.mrf.mxu0
        %v3936 = vpop.f32.mrf.mxu0
        %v3937 = vadd.f32 0.0, %v3936
        %v3938 = vpop.f32.mrf.mxu0
        %3939 = vdwg.mxu0
        %v3940 = vadd.f32 %v3796, %v3910
        %v3941 = vadd.f32 %v3799, %v3913
        %v3942 = vadd.f32 %v3804, %v3918
        %v3943 = vadd.f32 %v3807, %v3921
        %v3944 = vadd.f32 %v3812, %v3926
        %v3945 = vadd.f32 %v3815, %v3929
        %v3946 = vadd.f32 %v3820, %v3934
        %v3947 = vadd.f32 %v3823, %v3937
        %3956 = vrot.lane.b32.xlu0 %v3940, 40
        %v3957 = vpop.permute.xlu0 %3956
        %3958 = vrot.lane.b32.xlu0 %v3941, 40
        %v3959 = vpop.permute.xlu0 %3958
        %3960 = vrot.lane.b32.xlu0 %v3942, 40
        %v3961 = vpop.permute.xlu0 %3960
        %3962 = vrot.lane.b32.xlu0 %v3943, 40
        %v3963 = vpop.permute.xlu0 %3962
        %3964 = vrot.lane.b32.xlu0 %v3944, 40
        %v3965 = vpop.permute.xlu0 %3964
        %3966 = vrot.lane.b32.xlu0 %v3945, 40
        %v3967 = vpop.permute.xlu0 %3966
        %3968 = vrot.lane.b32.xlu0 %v3946, 40
        %v3969 = vpop.permute.xlu0 %3968
        %3970 = vrot.lane.b32.xlu0 %v3947, 40
        %v3971 = vpop.permute.xlu0 %3970
        %vm3980 = vcmask 392512
        %3981 = vst.msk [vmem:[#allocation2] sm:$0xff] %vm3980, %v3957
        %3982 = vst.msk [vmem:[#allocation2 + $0x8] sm:$0xff] %vm3980, %v3959
        %3983 = vst.msk [vmem:[#allocation2 + $0x10] sm:$0xff] %vm3980, %v3961
        %3984 = vst.msk [vmem:[#allocation2 + $0x18] sm:$0xff] %vm3980, %v3963
        %3985 = vst.msk [vmem:[#allocation2 + $0x20] sm:$0xff] %vm3980, %v3965
        %3986 = vst.msk [vmem:[#allocation2 + $0x28] sm:$0xff] %vm3980, %v3967
        %3987 = vst.msk [vmem:[#allocation2 + $0x30] sm:$0xff] %vm3980, %v3969
        %3988 = vst.msk [vmem:[#allocation2 + $0x38] sm:$0xff] %vm3980, %v3971
        %v3989 = vld [vmem:[#allocation2] sm:$0xff]
        %v3990 = vld [vmem:[#allocation2 + $0x8] sm:$0xff]
        %v3991 = vld [vmem:[#allocation2 + $0x10] sm:$0xff]
        %v3992 = vld [vmem:[#allocation2 + $0x18] sm:$0xff]
        %v3993 = vld [vmem:[#allocation2 + $0x20] sm:$0xff]
        %v3994 = vld [vmem:[#allocation2 + $0x28] sm:$0xff]
        %v3995 = vld [vmem:[#allocation2 + $0x30] sm:$0xff]
        %v3996 = vld [vmem:[#allocation2 + $0x38] sm:$0xff]
        %v3997 = vld [vmem:[%s9] sm:$0x1]
        %v3999 = vlaneseq
        %v4000 = vshrl.u32 %v3999, 7
        %v4001 = vsub.s32 0, %v4000
        %v4002 = vrot.slane %v3997, %v4001
        %v4004 = vmul.f32 %v3989, %v4002
        %v4005 = vmul.f32 %v3990, %v4002
        %v4006 = vmul.f32 %v3991, %v4002
        %v4007 = vmul.f32 %v3992, %v4002
        %v4008 = vmul.f32 %v3993, %v4002
        %v4009 = vmul.f32 %v3994, %v4002
        %v4010 = vmul.f32 %v3995, %v4002
        %v4011 = vmul.f32 %v3996, %v4002
        %v4012 = vld [vmem:[%s10] sm:$0x1]
        %v4014 = vlaneseq
        %v4015 = vshrl.u32 %v4014, 7
        %v4016 = vsub.s32 0, %v4015
        %v4017 = vrot.slane %v4012, %v4016
        %v4019 = vadd.f32 %v4004, %v4017
        %v4020 = vadd.f32 %v4005, %v4017
        %v4021 = vadd.f32 %v4006, %v4017
        %v4022 = vadd.f32 %v4007, %v4017
        %v4023 = vadd.f32 %v4008, %v4017
        %v4024 = vadd.f32 %v4009, %v4017
        %v4025 = vadd.f32 %v4010, %v4017
        %v4026 = vadd.f32 %v4011, %v4017
        %v4027 = vmax.f32 %v4019, 0.0
        %v4028 = vmax.f32 %v4020, 0.0
        %v4029 = vmax.f32 %v4021, 0.0
        %v4030 = vmax.f32 %v4022, 0.0
        %v4031 = vmax.f32 %v4023, 0.0
        %v4032 = vmax.f32 %v4024, 0.0
        %v4033 = vmax.f32 %v4025, 0.0
        %v4034 = vmax.f32 %v4026, 0.0
        %v4035 = vpack.c.bf16 %v4028, %v4027
        %v4036 = vpack.c.bf16 %v4030, %v4029
        %v4037 = vpack.c.bf16 %v4032, %v4031
        %v4038 = vpack.c.bf16 %v4034, %v4033
        %v4039 = vld [vmem:[%s11] sm:$0xf]
        %v4040 = vld [vmem:[%s11 + $0x4] sm:$0xf]
        %v4041 = vld [vmem:[%s11 + $0x8] sm:$0xf]
        %v4042 = vld [vmem:[%s11 + $0xc] sm:$0xf]
        %v4043 = vld [vmem:[%s11 + $0x10] sm:$0xf]
        %v4044 = vld [vmem:[%s11 + $0x14] sm:$0xf]
        %v4045 = vld [vmem:[%s11 + $0x18] sm:$0xf]
        %v4046 = vld [vmem:[%s11 + $0x1c] sm:$0xf]
        %v4047 = vld [vmem:[%s11 + $0x20] sm:$0xf]
        %v4048 = vld [vmem:[%s11 + $0x24] sm:$0xf]
        %v4049 = vld [vmem:[%s11 + $0x28] sm:$0xf]
        %v4050 = vld [vmem:[%s11 + $0x2c] sm:$0xf]
        %v4051 = vld [vmem:[%s11 + $0x30] sm:$0xf]
        %v4052 = vld [vmem:[%s11 + $0x34] sm:$0xf]
        %v4053 = vld [vmem:[%s11 + $0x38] sm:$0xf]
        %v4054 = vld [vmem:[%s11 + $0x3c] sm:$0xf]
        %v4071 = vunpack.c.l.b16 %v4039
        %v4072 = vunpack.c.l.b16 %v4040
        %v4073 = vunpack.c.l.b16 %v4041
        %v4074 = vunpack.c.l.b16 %v4042
        %v4075 = vunpack.c.l.b16 %v4043
        %v4076 = vunpack.c.l.b16 %v4044
        %v4077 = vunpack.c.l.b16 %v4045
        %v4078 = vunpack.c.l.b16 %v4046
        %v4079 = vunpack.c.l.b16 %v4047
        %v4080 = vunpack.c.l.b16 %v4048
        %v4081 = vunpack.c.l.b16 %v4049
        %v4082 = vunpack.c.l.b16 %v4050
        %v4083 = vunpack.c.l.b16 %v4051
        %v4084 = vunpack.c.l.b16 %v4052
        %v4085 = vunpack.c.l.b16 %v4053
        %v4086 = vunpack.c.l.b16 %v4054
        %v4087 = vpack.c.b16 %v4072, %v4071
        %v4088 = vpack.c.b16 %v4074, %v4073
        %v4089 = vpack.c.b16 %v4076, %v4075
        %v4090 = vpack.c.b16 %v4078, %v4077
        %v4091 = vpack.c.b16 %v4080, %v4079
        %v4092 = vpack.c.b16 %v4082, %v4081
        %v4093 = vpack.c.b16 %v4084, %v4083
        %v4094 = vpack.c.b16 %v4086, %v4085
        %4103 = vmatprep.subr.bf16.mxu0 0
        %4104 = vmatpush1.bf16.msra.mxu0 %v4094
        %4105 = vmatprep.subr.bf16.mxu0 0
        %4106 = vmatpush1.bf16.msra.mxu0 %v4093
        %4107 = vmatprep.subr.bf16.mxu0 0
        %4108 = vmatpush1.bf16.msra.mxu0 %v4092
        %4109 = vmatprep.subr.bf16.mxu0 0
        %4110 = vmatpush1.bf16.msra.mxu0 %v4091
        %4111 = vmatprep.subr.bf16.mxu0 0
        %4112 = vmatpush1.bf16.msra.mxu0 %v4090
        %4113 = vmatprep.subr.bf16.mxu0 0
        %4114 = vmatpush1.bf16.msra.mxu0 %v4089
        %4115 = vmatprep.subr.bf16.mxu0 0
        %4116 = vmatpush1.bf16.msra.mxu0 %v4088
        %4117 = vmatprep.subr.bf16.mxu0 0
        %4118 = vmatpush1.bf16.msra.mxu0 %v4087
        %4119 = vmatprep.subr.bf16.mxu0 0
        %4120 = vmatpush2.bf16.msra.mxu0 0
        %4121 = vmatprep.subr.bf16.mxu0 0
        %4122 = vmatpush2.bf16.msra.mxu0 0
        %4123 = vmatprep.subr.bf16.mxu0 0
        %4124 = vmatpush2.bf16.msra.mxu0 0
        %4125 = vmatprep.subr.bf16.mxu0 0
        %4126 = vmatpush2.bf16.msra.mxu0 0
        %4127 = vmatprep.subr.bf16.mxu0 0
        %4128 = vmatpush2.bf16.msra.mxu0 0
        %4129 = vmatprep.subr.bf16.mxu0 0
        %4130 = vmatpush2.bf16.msra.mxu0 0
        %4131 = vmatprep.subr.bf16.mxu0 0
        %4132 = vmatpush2.bf16.msra.mxu0 0
        %4133 = vmatprep.subr.bf16.mxu0 0
        %4134 = vmatpush2.bf16.msra.mxu0 0
        %4135 = vmatprep.mubr.bf16.mxu0 0
        %4136 = vmatmul.mubr.bf16.gmra.mxu0 %v4035
        %v4137 = vpop.f32.mrf.mxu0
        %v4138 = vadd.f32 0.0, %v4137
        %v4139 = vpop.f32.mrf.mxu0
        %v4140 = vpop.f32.mrf.mxu0
        %v4141 = vadd.f32 0.0, %v4140
        %v4142 = vpop.f32.mrf.mxu0
        %4143 = vmatprep.mubr.bf16.mxu0 0
        %4144 = vmatmul.mubr.bf16.gmra.mxu0 %v4036
        %v4145 = vpop.f32.mrf.mxu0
        %v4146 = vadd.f32 0.0, %v4145
        %v4147 = vpop.f32.mrf.mxu0
        %v4148 = vpop.f32.mrf.mxu0
        %v4149 = vadd.f32 0.0, %v4148
        %v4150 = vpop.f32.mrf.mxu0
        %4151 = vmatprep.mubr.bf16.mxu0 0
        %4152 = vmatmul.mubr.bf16.gmra.mxu0 %v4037
        %v4153 = vpop.f32.mrf.mxu0
        %v4154 = vadd.f32 0.0, %v4153
        %v4155 = vpop.f32.mrf.mxu0
        %v4156 = vpop.f32.mrf.mxu0
        %v4157 = vadd.f32 0.0, %v4156
        %v4158 = vpop.f32.mrf.mxu0
        %4159 = vmatprep.mubr.bf16.mxu0 0
        %4160 = vmatmul.mubr.bf16.gmra.mxu0 %v4038
        %v4161 = vpop.f32.mrf.mxu0
        %v4162 = vadd.f32 0.0, %v4161
        %v4163 = vpop.f32.mrf.mxu0
        %v4164 = vpop.f32.mrf.mxu0
        %v4165 = vadd.f32 0.0, %v4164
        %v4166 = vpop.f32.mrf.mxu0
        %4167 = vdwg.mxu0
        %vm4168 = vcmask 80896
        %v4169 = vsel %vm4168, %v4138, 0.0
        %v4170 = vsel %vm4168, %v4141, 0.0
        %v4171 = vadd.f32 %v4169, %v4170
        %v4172 = vsel %vm4168, %v4146, 0.0
        %v4173 = vadd.f32 %v4171, %v4172
        %v4174 = vsel %vm4168, %v4149, 0.0
        %v4175 = vadd.f32 %v4173, %v4174
        %v4176 = vsel %vm4168, %v4154, 0.0
        %v4177 = vadd.f32 %v4175, %v4176
        %v4178 = vsel %vm4168, %v4157, 0.0
        %v4179 = vadd.f32 %v4177, %v4178
        %v4180 = vsel %vm4168, %v4162, 0.0
        %v4181 = vadd.f32 %v4179, %v4180
        %v4182 = vsel %vm4168, %v4165, 0.0
        %v4183 = vadd.f32 %v4181, %v4182
        %v4184 = vrot.slane %v4183, 4
        %v4185 = vadd.f32 %v4183, %v4184
        %v4186 = vrot.slane %v4185, 2
        %v4187 = vadd.f32 %v4185, %v4186
        %v4188 = vrot.slane %v4187, 1
        %v4189 = vadd.f32 %v4187, %v4188
        %v4190 = vrcp.pop 64.0
        %v4191 = vmul.f32 %v4189, %v4190
        %v4192 = vld [vmem:[%s12] sm:$0x1]
        %v4193 = vadd.f32 %v4191, %v4192
        %vm4194 = vcmask 73728
        %4195 = vst.msk [vmem:[%s432] sm:$0x1] %vm4194, %v4193
        %s4196 = sand.u32 %s313, 1
        %s4197 = scalar_lea.sflag [#allocation5], %s4196
        %s4198 = sand.u32 %s313, 1
        %s4199 = scalar_lea.vmem [#allocation4], %s4198
        // Predicated region
        $region73: #{densenet_forward.1} parent=71 // pred_check
          %p4200 = pneg %p323
        $region74: #{densenet_forward.1} parent=71 // pred_check_branch
          %4202 = sbr.rel (%p4200) target = $region76
        $region75: #{densenet_forward.1} parent=71 // pred_region
          %s4204 = ssub.s32 16, 16
          %4205 = vsyncadd %s4197, %s4204
          %s4206 = smul.addr %s27, 16
          %s4207 = scalar_lea.hbm %s13, %s4206
          %s4209 = sshll.u32 %s4199, 4
          %s4210 = int_to_ptr.vmem [resolvable:$true] %s4209
          %4212 = dma.vmem_to_hbm [thread:$0]  %s4210, 16, %s4207, %s4197
        $region76: #{densenet_forward.1} parent=71 // pred_fallthru
          _
      $region72: #{densenet_forward.1} parent=5 // pred_fallthru
        _
      %p4213 = scmp.le.s32.totalorder 2, %s22
      // Predicated region
      $region77: #{densenet_forward.1} parent=5 // pred_check
        %p4214 = pneg %p4213
      $region78: #{densenet_forward.1} parent=5 // pred_check_branch
        %4216 = sbr.rel (%p4214) target = $region80
      $region79: #{densenet_forward.1} parent=5 // pred_region
        %s4217 = ssub.s32 %s22, 2
        // Predicated region
        $region81: #{densenet_forward.1} parent=79 // pred_check
          %p4218 = pneg %p329
        $region82: #{densenet_forward.1} parent=79 // pred_check_branch
          %4220 = sbr.rel (%p4218) target = $region84
        $region83: #{densenet_forward.1} parent=79 // pred_region
          %s4221 = sand.u32 %s314, 1
          %s4222 = scalar_lea.sflag [#allocation5], %s4221
          %s4223 = sand.u32 %s314, 1
          %s4224 = scalar_lea.vmem [#allocation4], %s4223
          %4225 = dma.done %s4222, 16
        $region84: #{densenet_forward.1} parent=79 // pred_fallthru
          _
      $region80: #{densenet_forward.1} parent=5 // pred_fallthru
        _
    $region6: #{densenet_forward.1} parent=1 // loop_footer
      %s26 = sadd.s32 1, %s22
    $region7: #{densenet_forward.1} parent=1 // loop_footer_branch
      %21 = sbr.rel target = $region3
    $region8: #{densenet_forward.1} parent=1 // loop_exit
      _
    %4226 = vsyncpa [#allocation5], 1
    %s4227 = scalar_lea.sflag [#allocation5], 1
    %4228 = vsyncpa %s4227, 1

</llo_original>
